<compile_context>
chip_gen: v5e
topology: v5e:2x2
jax: 0.10.0
libtpu: 0.0.40
codegen_flags: <defaults>
</compile_context>

<pallas_src>
import functools

import jax
import jax.numpy as jnp
from jax import lax
from jax.experimental import pallas as pl
from jax.experimental.pallas import tpu as pltpu


# ----------------------------- fused Pallas kernel ---------------------------

def _conv_pool_bn_relu_kernel(xs_ref, w_ref, b_ref, g_ref, bt_ref, o_ref,
                              *, K, eps):
    """Fused Conv2d(K,'same') -> MaxPool2d(2) -> BatchNorm2d(train) -> ReLU.

    xs_ref : (K+1, K+1, Mp, Cin) bf16 sub-shift views of the padded input:
             xs[dr, dc, m, ci] == x_pad[n, 2*h2 + dr, 2*w2 + dc, ci]
             with m = flat (n, h2, w2), Mp = N*(H//2)*(W//2).
    w_ref  : (K, K, Cin, Cp) bf16 HWIO weights (Cout zero-padded to Cp)
    b_ref, g_ref, bt_ref : (1, Cp) f32 conv bias / BN gamma / BN beta
    o_ref  : (Mp, Cp) f32 output slab, rows ordered (n, h2, w2)
    """
    Mp, Cp = o_ref.shape

    def conv_phase(ph, pw):
        # Conv output restricted to pixels (2*h2+ph, 2*w2+pw): K*K shifted
        # matmuls on statically indexed full slabs, f32 accumulation.
        acc = jnp.zeros((Mp, Cp), jnp.float32)
        for kh in range(K):
            for kw in range(K):
                acc = acc + jnp.dot(xs_ref[ph + kh, pw + kw], w_ref[kh, kw],
                                    preferred_element_type=jnp.float32)
        return acc

    # MaxPool2d(2) == elementwise max over the 4 parity phases (rows already
    # carry the pooled (n, h2, w2) ordering -> lane-dense, no relayout).
    pooled = conv_phase(0, 0)
    pooled = jnp.maximum(pooled, conv_phase(0, 1))
    pooled = jnp.maximum(pooled, conv_phase(1, 0))
    pooled = jnp.maximum(pooled, conv_phase(1, 1))

    # Conv bias: max(x + c) == max(x) + c, so it commutes with the pool.
    pooled = pooled + b_ref[...]

    # BatchNorm2d (training-mode batch statistics, biased variance) + ReLU.
    # Two-pass centered variance avoids E[x^2]-E[x]^2 cancellation; rsqrt->EUP.
    inv_mp = 1.0 / float(Mp)
    mean = jnp.sum(pooled, axis=0, keepdims=True) * inv_mp
    cent = pooled - mean
    var = jnp.sum(cent * cent, axis=0, keepdims=True) * inv_mp
    scale = g_ref[...] * lax.rsqrt(var + eps)
    o_ref[...] = jnp.maximum(cent * scale + bt_ref[...], 0.0)


# --------------------------------- wrapper -----------------------------------

def conv2d_block_forward(params, x_nchw, eps=1e-5):
    """Conv2dBlock forward. x_nchw: (N, Cin, H, W) f32 -> (N, Cout, H/2, W/2)."""
    w, b = params["w"], params["b"]
    gamma, beta = params["gamma"], params["beta"]

    K = w.shape[0]
    Cout = w.shape[-1]
    N, Cin, H, W = x_nchw.shape
    assert K % 2 == 1, "padding='same' lowering here assumes an odd kernel size"
    assert H % 2 == 0 and W % 2 == 0, "MaxPool2d(2) path assumes even H, W"
    assert w.shape[2] == Cin

    pad = K // 2
    H2, W2 = H // 2, W // 2
    Mp = N * H2 * W2
    assert Mp % 8 == 0, "pooled row count must be sublane-aligned"
    Cp = max(128, ((Cout + 127) // 128) * 128)  # lane-dense channel width

    # NCHW -> NHWC, zero 'same' padding, bf16 MXU operands.
    x = jnp.transpose(x_nchw, (0, 2, 3, 1)).astype(jnp.bfloat16)
    xp = jnp.pad(x, ((0, 0), (pad, pad), (pad, pad), (0, 0)))

    # Sub-shift views: xs[dr, dc, (n,h2,w2), ci] = xp[n, 2*h2+dr, 2*w2+dc, ci].
    # (K+1)^2 strided slices of a tiny array; every in-kernel load is a full
    # statically-indexed (Mp, Cin) slab -> no window slicing/relayout in VMEM.
    xs = jnp.stack(
        [jnp.stack(
            [xp[:, dr:dr + 2 * H2:2, dc:dc + 2 * W2:2, :].reshape(Mp, Cin)
             for dc in range(K + 1)], axis=0)
         for dr in range(K + 1)], axis=0)          # (K+1, K+1, Mp, Cin)

    wq = jnp.pad(w.astype(jnp.bfloat16), ((0, 0), (0, 0), (0, 0), (0, Cp - Cout)))
    bq = jnp.pad(b.astype(jnp.float32), (0, Cp - Cout)).reshape(1, Cp)
    gq = jnp.pad(gamma.astype(jnp.float32), (0, Cp - Cout),
                 constant_values=1.0).reshape(1, Cp)
    btq = jnp.pad(beta.astype(jnp.float32), (0, Cp - Cout)).reshape(1, Cp)

    # Single fused pallas_call: everything stays VMEM-resident for this size.
    # Tiling-aware (over)estimate: bf16 slabs pad lanes to 128, f32 temporaries.
    vmem_estimate = (2 * (K + 1) * (K + 1) * Mp * 128 * 2      # input slabs x2
                     + 2 * K * K * 16 * Cp * 2                 # weights x2
                     + 10 * Mp * Cp * 4)                       # out + temporaries
    assert vmem_estimate < 12 * 1024 * 1024, "activation too large for fused path"
    # TODO(synk): add a tiled two-kernel path (conv+pool+partial stats over a
    # grid, then BN-apply) for activations that do not fit in VMEM.

    kern = functools.partial(_conv_pool_bn_relu_kernel, K=K, eps=float(eps))
    y = pl.pallas_call(
        kern,
        out_shape=jax.ShapeDtypeStruct((Mp, Cp), jnp.float32),
        grid=(1,),
        in_specs=[
            pl.BlockSpec(xs.shape, lambda i: (0, 0, 0, 0)),
            pl.BlockSpec(wq.shape, lambda i: (0, 0, 0, 0)),
            pl.BlockSpec((1, Cp), lambda i: (0, 0)),
            pl.BlockSpec((1, Cp), lambda i: (0, 0)),
            pl.BlockSpec((1, Cp), lambda i: (0, 0)),
        ],
        out_specs=pl.BlockSpec((Mp, Cp), lambda i: (0, 0)),
        compiler_params=pltpu.CompilerParams(
            dimension_semantics=("arbitrary",)),
    )(xs, wq, bq, gq, btq)

    y = y[:, :Cout].reshape(N, H2, W2, Cout)
    return jnp.transpose(y, (0, 3, 1, 2))    # NHWC -> NCHW


# ------------------------------ params & reference ---------------------------

def init_params(key, in_features, out_features, kernel_size):
    kw, kb = jax.random.split(key)
    fan_in = in_features * kernel_size * kernel_size
    bound = 1.0 / (fan_in ** 0.5)
    w = jax.random.uniform(kw, (kernel_size, kernel_size, in_features, out_features),
                           jnp.float32, -bound, bound)
    b = jax.random.uniform(kb, (out_features,), jnp.float32, -bound, bound)
    return dict(w=w, b=b,
                gamma=jnp.ones((out_features,), jnp.float32),
                beta=jnp.zeros((out_features,), jnp.float32))


def _reference_forward(params, x_nchw, eps=1e-5):
    """Pure-JAX (XLA, f32) reference of the same forward pass."""
    x = jnp.transpose(x_nchw, (0, 2, 3, 1))
    conv = lax.conv_general_dilated(
        x, params["w"], window_strides=(1, 1), padding="SAME",
        dimension_numbers=("NHWC", "HWIO", "NHWC")) + params["b"]
    N, H, W, C = conv.shape
    pooled = jnp.max(conv.reshape(N, H // 2, 2, W // 2, 2, C), axis=(2, 4))
    mean = jnp.mean(pooled, axis=(0, 1, 2))
    var = jnp.var(pooled, axis=(0, 1, 2))  # biased, as training-mode BN uses
    y = (pooled - mean) * lax.rsqrt(var + eps) * params["gamma"] + params["beta"]
    y = jnp.maximum(y, 0.0)
    return jnp.transpose(y, (0, 3, 1, 2))


# ----------------------------------- main ------------------------------------

if __name__ == "__main__":
    key = jax.random.PRNGKey(0)
    pkey, xkey = jax.random.split(key)

    in_features, out_features, kernel_size = 4, 32, 3
    params = init_params(pkey, in_features, out_features, kernel_size)
    x = jax.random.normal(xkey, (2, in_features, 16, 16), jnp.float32)  # NCHW

    out = jax.jit(conv2d_block_forward)(params, x)
    out = jax.block_until_ready(out)

    assert out.shape == (2, out_features, 8, 8), out.shape
    assert bool(jnp.isfinite(out).all())
    assert bool((out >= 0.0).all())  # ReLU range

    ref = _reference_forward(params, x)
    max_err = float(jnp.max(jnp.abs(out - ref)))
    assert bool(jnp.allclose(out, ref, atol=1e-1, rtol=1e-1)), max_err

    print("KERNEL_OK")
</pallas_src>

<mosaic_0001>
module attributes {stable_mosaic.version = 11 : i64} {
  func.func @_conv_pool_bn_relu_kernel(%arg0: i32, %arg1: memref<4x4x128x4xbf16, #tpu.memory_space<vmem>>, %arg2: memref<3x3x4x128xbf16, #tpu.memory_space<vmem>>, %arg3: memref<1x128xf32, #tpu.memory_space<vmem>>, %arg4: memref<1x128xf32, #tpu.memory_space<vmem>>, %arg5: memref<1x128xf32, #tpu.memory_space<vmem>>, %arg6: memref<128x128xf32, #tpu.memory_space<vmem>>) attributes {dimension_semantics = [#tpu.dimension_semantics<arbitrary>], iteration_bounds = array<i64: 1>, scalar_prefetch = 0 : i64, scratch_operands = 0 : i64, tpu.core_type = #tpu.core_type<tc>, window_params = [{pipeline_mode = #tpu.pipeline_mode<synchronous>, transform_indices = @transform_0, window_bounds = array<i64: 4, 4, 128, 4>}, {pipeline_mode = #tpu.pipeline_mode<synchronous>, transform_indices = @transform_1, window_bounds = array<i64: 3, 3, 4, 128>}, {pipeline_mode = #tpu.pipeline_mode<synchronous>, transform_indices = @transform_2, window_bounds = array<i64: 1, 128>}, {pipeline_mode = #tpu.pipeline_mode<synchronous>, transform_indices = @transform_3, window_bounds = array<i64: 1, 128>}, {pipeline_mode = #tpu.pipeline_mode<synchronous>, transform_indices = @transform_4, window_bounds = array<i64: 1, 128>}, {pipeline_mode = #tpu.pipeline_mode<synchronous>, transform_indices = @transform_5, window_bounds = array<i64: 128, 128>}]} {
    %cst = arith.constant 0.000000e+00 : f32
    %0 = vector.broadcast %cst : f32 to vector<128x128xf32>
    %c0 = arith.constant 0 : index
    %c0_0 = arith.constant 0 : index
    %c0_1 = arith.constant 0 : index
    %c0_2 = arith.constant 0 : index
    %1 = vector.load %arg1[%c0, %c0_0, %c0_1, %c0_2] : memref<4x4x128x4xbf16, #tpu.memory_space<vmem>>, vector<1x1x128x4xbf16>
    %2 = vector.shape_cast %1 : vector<1x1x128x4xbf16> to vector<128x4xbf16>
    %c0_3 = arith.constant 0 : index
    %c0_4 = arith.constant 0 : index
    %c0_5 = arith.constant 0 : index
    %c0_6 = arith.constant 0 : index
    %3 = vector.load %arg2[%c0_3, %c0_4, %c0_5, %c0_6] : memref<3x3x4x128xbf16, #tpu.memory_space<vmem>>, vector<1x1x4x128xbf16>
    %4 = vector.shape_cast %3 : vector<1x1x4x128xbf16> to vector<4x128xbf16>
    %cst_7 = arith.constant dense<0.000000e+00> : vector<128x128xf32>
    %5 = tpu.matmul %2, %4, %cst_7 {dimension_numbers = #tpu.dot_dimension_numbers<[1], [0], [0], [1], [0, 0, 1, 1], [], []>} : vector<128x4xbf16>, vector<4x128xbf16>, vector<128x128xf32> -> vector<128x128xf32>
    %6 = arith.addf %0, %5 : vector<128x128xf32>
    %c0_8 = arith.constant 0 : index
    %c1 = arith.constant 1 : index
    %c0_9 = arith.constant 0 : index
    %c0_10 = arith.constant 0 : index
    %7 = vector.load %arg1[%c0_8, %c1, %c0_9, %c0_10] : memref<4x4x128x4xbf16, #tpu.memory_space<vmem>>, vector<1x1x128x4xbf16>
    %8 = vector.shape_cast %7 : vector<1x1x128x4xbf16> to vector<128x4xbf16>
    %c0_11 = arith.constant 0 : index
    %c1_12 = arith.constant 1 : index
    %c0_13 = arith.constant 0 : index
    %c0_14 = arith.constant 0 : index
    %9 = vector.load %arg2[%c0_11, %c1_12, %c0_13, %c0_14] : memref<3x3x4x128xbf16, #tpu.memory_space<vmem>>, vector<1x1x4x128xbf16>
    %10 = vector.shape_cast %9 : vector<1x1x4x128xbf16> to vector<4x128xbf16>
    %cst_15 = arith.constant dense<0.000000e+00> : vector<128x128xf32>
    %11 = tpu.matmul %8, %10, %cst_15 {dimension_numbers = #tpu.dot_dimension_numbers<[1], [0], [0], [1], [0, 0, 1, 1], [], []>} : vector<128x4xbf16>, vector<4x128xbf16>, vector<128x128xf32> -> vector<128x128xf32>
    %12 = arith.addf %6, %11 : vector<128x128xf32>
    %c0_16 = arith.constant 0 : index
    %c2 = arith.constant 2 : index
    %c0_17 = arith.constant 0 : index
    %c0_18 = arith.constant 0 : index
    %13 = vector.load %arg1[%c0_16, %c2, %c0_17, %c0_18] : memref<4x4x128x4xbf16, #tpu.memory_space<vmem>>, vector<1x1x128x4xbf16>
    %14 = vector.shape_cast %13 : vector<1x1x128x4xbf16> to vector<128x4xbf16>
    %c0_19 = arith.constant 0 : index
    %c2_20 = arith.constant 2 : index
    %c0_21 = arith.constant 0 : index
    %c0_22 = arith.constant 0 : index
    %15 = vector.load %arg2[%c0_19, %c2_20, %c0_21, %c0_22] : memref<3x3x4x128xbf16, #tpu.memory_space<vmem>>, vector<1x1x4x128xbf16>
    %16 = vector.shape_cast %15 : vector<1x1x4x128xbf16> to vector<4x128xbf16>
    %cst_23 = arith.constant dense<0.000000e+00> : vector<128x128xf32>
    %17 = tpu.matmul %14, %16, %cst_23 {dimension_numbers = #tpu.dot_dimension_numbers<[1], [0], [0], [1], [0, 0, 1, 1], [], []>} : vector<128x4xbf16>, vector<4x128xbf16>, vector<128x128xf32> -> vector<128x128xf32>
    %18 = arith.addf %12, %17 : vector<128x128xf32>
    %c1_24 = arith.constant 1 : index
    %c0_25 = arith.constant 0 : index
    %c0_26 = arith.constant 0 : index
    %c0_27 = arith.constant 0 : index
    %19 = vector.load %arg1[%c1_24, %c0_25, %c0_26, %c0_27] : memref<4x4x128x4xbf16, #tpu.memory_space<vmem>>, vector<1x1x128x4xbf16>
    %20 = vector.shape_cast %19 : vector<1x1x128x4xbf16> to vector<128x4xbf16>
    %c1_28 = arith.constant 1 : index
    %c0_29 = arith.constant 0 : index
    %c0_30 = arith.constant 0 : index
    %c0_31 = arith.constant 0 : index
    %21 = vector.load %arg2[%c1_28, %c0_29, %c0_30, %c0_31] : memref<3x3x4x128xbf16, #tpu.memory_space<vmem>>, vector<1x1x4x128xbf16>
    %22 = vector.shape_cast %21 : vector<1x1x4x128xbf16> to vector<4x128xbf16>
    %cst_32 = arith.constant dense<0.000000e+00> : vector<128x128xf32>
    %23 = tpu.matmul %20, %22, %cst_32 {dimension_numbers = #tpu.dot_dimension_numbers<[1], [0], [0], [1], [0, 0, 1, 1], [], []>} : vector<128x4xbf16>, vector<4x128xbf16>, vector<128x128xf32> -> vector<128x128xf32>
    %24 = arith.addf %18, %23 : vector<128x128xf32>
    %c1_33 = arith.constant 1 : index
    %c1_34 = arith.constant 1 : index
    %c0_35 = arith.constant 0 : index
    %c0_36 = arith.constant 0 : index
    %25 = vector.load %arg1[%c1_33, %c1_34, %c0_35, %c0_36] : memref<4x4x128x4xbf16, #tpu.memory_space<vmem>>, vector<1x1x128x4xbf16>
    %26 = vector.shape_cast %25 : vector<1x1x128x4xbf16> to vector<128x4xbf16>
    %c1_37 = arith.constant 1 : index
    %c1_38 = arith.constant 1 : index
    %c0_39 = arith.constant 0 : index
    %c0_40 = arith.constant 0 : index
    %27 = vector.load %arg2[%c1_37, %c1_38, %c0_39, %c0_40] : memref<3x3x4x128xbf16, #tpu.memory_space<vmem>>, vector<1x1x4x128xbf16>
    %28 = vector.shape_cast %27 : vector<1x1x4x128xbf16> to vector<4x128xbf16>
    %cst_41 = arith.constant dense<0.000000e+00> : vector<128x128xf32>
    %29 = tpu.matmul %26, %28, %cst_41 {dimension_numbers = #tpu.dot_dimension_numbers<[1], [0], [0], [1], [0, 0, 1, 1], [], []>} : vector<128x4xbf16>, vector<4x128xbf16>, vector<128x128xf32> -> vector<128x128xf32>
    %30 = arith.addf %24, %29 : vector<128x128xf32>
    %c1_42 = arith.constant 1 : index
    %c2_43 = arith.constant 2 : index
    %c0_44 = arith.constant 0 : index
    %c0_45 = arith.constant 0 : index
    %31 = vector.load %arg1[%c1_42, %c2_43, %c0_44, %c0_45] : memref<4x4x128x4xbf16, #tpu.memory_space<vmem>>, vector<1x1x128x4xbf16>
    %32 = vector.shape_cast %31 : vector<1x1x128x4xbf16> to vector<128x4xbf16>
    %c1_46 = arith.constant 1 : index
    %c2_47 = arith.constant 2 : index
    %c0_48 = arith.constant 0 : index
    %c0_49 = arith.constant 0 : index
    %33 = vector.load %arg2[%c1_46, %c2_47, %c0_48, %c0_49] : memref<3x3x4x128xbf16, #tpu.memory_space<vmem>>, vector<1x1x4x128xbf16>
    %34 = vector.shape_cast %33 : vector<1x1x4x128xbf16> to vector<4x128xbf16>
    %cst_50 = arith.constant dense<0.000000e+00> : vector<128x128xf32>
    %35 = tpu.matmul %32, %34, %cst_50 {dimension_numbers = #tpu.dot_dimension_numbers<[1], [0], [0], [1], [0, 0, 1, 1], [], []>} : vector<128x4xbf16>, vector<4x128xbf16>, vector<128x128xf32> -> vector<128x128xf32>
    %36 = arith.addf %30, %35 : vector<128x128xf32>
    %c2_51 = arith.constant 2 : index
    %c0_52 = arith.constant 0 : index
    %c0_53 = arith.constant 0 : index
    %c0_54 = arith.constant 0 : index
    %37 = vector.load %arg1[%c2_51, %c0_52, %c0_53, %c0_54] : memref<4x4x128x4xbf16, #tpu.memory_space<vmem>>, vector<1x1x128x4xbf16>
    %38 = vector.shape_cast %37 : vector<1x1x128x4xbf16> to vector<128x4xbf16>
    %c2_55 = arith.constant 2 : index
    %c0_56 = arith.constant 0 : index
    %c0_57 = arith.constant 0 : index
    %c0_58 = arith.constant 0 : index
    %39 = vector.load %arg2[%c2_55, %c0_56, %c0_57, %c0_58] : memref<3x3x4x128xbf16, #tpu.memory_space<vmem>>, vector<1x1x4x128xbf16>
    %40 = vector.shape_cast %39 : vector<1x1x4x128xbf16> to vector<4x128xbf16>
    %cst_59 = arith.constant dense<0.000000e+00> : vector<128x128xf32>
    %41 = tpu.matmul %38, %40, %cst_59 {dimension_numbers = #tpu.dot_dimension_numbers<[1], [0], [0], [1], [0, 0, 1, 1], [], []>} : vector<128x4xbf16>, vector<4x128xbf16>, vector<128x128xf32> -> vector<128x128xf32>
    %42 = arith.addf %36, %41 : vector<128x128xf32>
    %c2_60 = arith.constant 2 : index
    %c1_61 = arith.constant 1 : index
    %c0_62 = arith.constant 0 : index
    %c0_63 = arith.constant 0 : index
    %43 = vector.load %arg1[%c2_60, %c1_61, %c0_62, %c0_63] : memref<4x4x128x4xbf16, #tpu.memory_space<vmem>>, vector<1x1x128x4xbf16>
    %44 = vector.shape_cast %43 : vector<1x1x128x4xbf16> to vector<128x4xbf16>
    %c2_64 = arith.constant 2 : index
    %c1_65 = arith.constant 1 : index
    %c0_66 = arith.constant 0 : index
    %c0_67 = arith.constant 0 : index
    %45 = vector.load %arg2[%c2_64, %c1_65, %c0_66, %c0_67] : memref<3x3x4x128xbf16, #tpu.memory_space<vmem>>, vector<1x1x4x128xbf16>
    %46 = vector.shape_cast %45 : vector<1x1x4x128xbf16> to vector<4x128xbf16>
    %cst_68 = arith.constant dense<0.000000e+00> : vector<128x128xf32>
    %47 = tpu.matmul %44, %46, %cst_68 {dimension_numbers = #tpu.dot_dimension_numbers<[1], [0], [0], [1], [0, 0, 1, 1], [], []>} : vector<128x4xbf16>, vector<4x128xbf16>, vector<128x128xf32> -> vector<128x128xf32>
    %48 = arith.addf %42, %47 : vector<128x128xf32>
    %c2_69 = arith.constant 2 : index
    %c2_70 = arith.constant 2 : index
    %c0_71 = arith.constant 0 : index
    %c0_72 = arith.constant 0 : index
    %49 = vector.load %arg1[%c2_69, %c2_70, %c0_71, %c0_72] : memref<4x4x128x4xbf16, #tpu.memory_space<vmem>>, vector<1x1x128x4xbf16>
    %50 = vector.shape_cast %49 : vector<1x1x128x4xbf16> to vector<128x4xbf16>
    %c2_73 = arith.constant 2 : index
    %c2_74 = arith.constant 2 : index
    %c0_75 = arith.constant 0 : index
    %c0_76 = arith.constant 0 : index
    %51 = vector.load %arg2[%c2_73, %c2_74, %c0_75, %c0_76] : memref<3x3x4x128xbf16, #tpu.memory_space<vmem>>, vector<1x1x4x128xbf16>
    %52 = vector.shape_cast %51 : vector<1x1x4x128xbf16> to vector<4x128xbf16>
    %cst_77 = arith.constant dense<0.000000e+00> : vector<128x128xf32>
    %53 = tpu.matmul %50, %52, %cst_77 {dimension_numbers = #tpu.dot_dimension_numbers<[1], [0], [0], [1], [0, 0, 1, 1], [], []>} : vector<128x4xbf16>, vector<4x128xbf16>, vector<128x128xf32> -> vector<128x128xf32>
    %54 = arith.addf %48, %53 : vector<128x128xf32>
    %cst_78 = arith.constant 0.000000e+00 : f32
    %55 = vector.broadcast %cst_78 : f32 to vector<128x128xf32>
    %c0_79 = arith.constant 0 : index
    %c1_80 = arith.constant 1 : index
    %c0_81 = arith.constant 0 : index
    %c0_82 = arith.constant 0 : index
    %56 = vector.load %arg1[%c0_79, %c1_80, %c0_81, %c0_82] : memref<4x4x128x4xbf16, #tpu.memory_space<vmem>>, vector<1x1x128x4xbf16>
    %57 = vector.shape_cast %56 : vector<1x1x128x4xbf16> to vector<128x4xbf16>
    %c0_83 = arith.constant 0 : index
    %c0_84 = arith.constant 0 : index
    %c0_85 = arith.constant 0 : index
    %c0_86 = arith.constant 0 : index
    %58 = vector.load %arg2[%c0_83, %c0_84, %c0_85, %c0_86] : memref<3x3x4x128xbf16, #tpu.memory_space<vmem>>, vector<1x1x4x128xbf16>
    %59 = vector.shape_cast %58 : vector<1x1x4x128xbf16> to vector<4x128xbf16>
    %cst_87 = arith.constant dense<0.000000e+00> : vector<128x128xf32>
    %60 = tpu.matmul %57, %59, %cst_87 {dimension_numbers = #tpu.dot_dimension_numbers<[1], [0], [0], [1], [0, 0, 1, 1], [], []>} : vector<128x4xbf16>, vector<4x128xbf16>, vector<128x128xf32> -> vector<128x128xf32>
    %61 = arith.addf %55, %60 : vector<128x128xf32>
    %c0_88 = arith.constant 0 : index
    %c2_89 = arith.constant 2 : index
    %c0_90 = arith.constant 0 : index
    %c0_91 = arith.constant 0 : index
    %62 = vector.load %arg1[%c0_88, %c2_89, %c0_90, %c0_91] : memref<4x4x128x4xbf16, #tpu.memory_space<vmem>>, vector<1x1x128x4xbf16>
    %63 = vector.shape_cast %62 : vector<1x1x128x4xbf16> to vector<128x4xbf16>
    %c0_92 = arith.constant 0 : index
    %c1_93 = arith.constant 1 : index
    %c0_94 = arith.constant 0 : index
    %c0_95 = arith.constant 0 : index
    %64 = vector.load %arg2[%c0_92, %c1_93, %c0_94, %c0_95] : memref<3x3x4x128xbf16, #tpu.memory_space<vmem>>, vector<1x1x4x128xbf16>
    %65 = vector.shape_cast %64 : vector<1x1x4x128xbf16> to vector<4x128xbf16>
    %cst_96 = arith.constant dense<0.000000e+00> : vector<128x128xf32>
    %66 = tpu.matmul %63, %65, %cst_96 {dimension_numbers = #tpu.dot_dimension_numbers<[1], [0], [0], [1], [0, 0, 1, 1], [], []>} : vector<128x4xbf16>, vector<4x128xbf16>, vector<128x128xf32> -> vector<128x128xf32>
    %67 = arith.addf %61, %66 : vector<128x128xf32>
    %c0_97 = arith.constant 0 : index
    %c3 = arith.constant 3 : index
    %c0_98 = arith.constant 0 : index
    %c0_99 = arith.constant 0 : index
    %68 = vector.load %arg1[%c0_97, %c3, %c0_98, %c0_99] : memref<4x4x128x4xbf16, #tpu.memory_space<vmem>>, vector<1x1x128x4xbf16>
    %69 = vector.shape_cast %68 : vector<1x1x128x4xbf16> to vector<128x4xbf16>
    %c0_100 = arith.constant 0 : index
    %c2_101 = arith.constant 2 : index
    %c0_102 = arith.constant 0 : index
    %c0_103 = arith.constant 0 : index
    %70 = vector.load %arg2[%c0_100, %c2_101, %c0_102, %c0_103] : memref<3x3x4x128xbf16, #tpu.memory_space<vmem>>, vector<1x1x4x128xbf16>
    %71 = vector.shape_cast %70 : vector<1x1x4x128xbf16> to vector<4x128xbf16>
    %cst_104 = arith.constant dense<0.000000e+00> : vector<128x128xf32>
    %72 = tpu.matmul %69, %71, %cst_104 {dimension_numbers = #tpu.dot_dimension_numbers<[1], [0], [0], [1], [0, 0, 1, 1], [], []>} : vector<128x4xbf16>, vector<4x128xbf16>, vector<128x128xf32> -> vector<128x128xf32>
    %73 = arith.addf %67, %72 : vector<128x128xf32>
    %c1_105 = arith.constant 1 : index
    %c1_106 = arith.constant 1 : index
    %c0_107 = arith.constant 0 : index
    %c0_108 = arith.constant 0 : index
    %74 = vector.load %arg1[%c1_105, %c1_106, %c0_107, %c0_108] : memref<4x4x128x4xbf16, #tpu.memory_space<vmem>>, vector<1x1x128x4xbf16>
    %75 = vector.shape_cast %74 : vector<1x1x128x4xbf16> to vector<128x4xbf16>
    %c1_109 = arith.constant 1 : index
    %c0_110 = arith.constant 0 : index
    %c0_111 = arith.constant 0 : index
    %c0_112 = arith.constant 0 : index
    %76 = vector.load %arg2[%c1_109, %c0_110, %c0_111, %c0_112] : memref<3x3x4x128xbf16, #tpu.memory_space<vmem>>, vector<1x1x4x128xbf16>
    %77 = vector.shape_cast %76 : vector<1x1x4x128xbf16> to vector<4x128xbf16>
    %cst_113 = arith.constant dense<0.000000e+00> : vector<128x128xf32>
    %78 = tpu.matmul %75, %77, %cst_113 {dimension_numbers = #tpu.dot_dimension_numbers<[1], [0], [0], [1], [0, 0, 1, 1], [], []>} : vector<128x4xbf16>, vector<4x128xbf16>, vector<128x128xf32> -> vector<128x128xf32>
    %79 = arith.addf %73, %78 : vector<128x128xf32>
    %c1_114 = arith.constant 1 : index
    %c2_115 = arith.constant 2 : index
    %c0_116 = arith.constant 0 : index
    %c0_117 = arith.constant 0 : index
    %80 = vector.load %arg1[%c1_114, %c2_115, %c0_116, %c0_117] : memref<4x4x128x4xbf16, #tpu.memory_space<vmem>>, vector<1x1x128x4xbf16>
    %81 = vector.shape_cast %80 : vector<1x1x128x4xbf16> to vector<128x4xbf16>
    %c1_118 = arith.constant 1 : index
    %c1_119 = arith.constant 1 : index
    %c0_120 = arith.constant 0 : index
    %c0_121 = arith.constant 0 : index
    %82 = vector.load %arg2[%c1_118, %c1_119, %c0_120, %c0_121] : memref<3x3x4x128xbf16, #tpu.memory_space<vmem>>, vector<1x1x4x128xbf16>
    %83 = vector.shape_cast %82 : vector<1x1x4x128xbf16> to vector<4x128xbf16>
    %cst_122 = arith.constant dense<0.000000e+00> : vector<128x128xf32>
    %84 = tpu.matmul %81, %83, %cst_122 {dimension_numbers = #tpu.dot_dimension_numbers<[1], [0], [0], [1], [0, 0, 1, 1], [], []>} : vector<128x4xbf16>, vector<4x128xbf16>, vector<128x128xf32> -> vector<128x128xf32>
    %85 = arith.addf %79, %84 : vector<128x128xf32>
    %c1_123 = arith.constant 1 : index
    %c3_124 = arith.constant 3 : index
    %c0_125 = arith.constant 0 : index
    %c0_126 = arith.constant 0 : index
    %86 = vector.load %arg1[%c1_123, %c3_124, %c0_125, %c0_126] : memref<4x4x128x4xbf16, #tpu.memory_space<vmem>>, vector<1x1x128x4xbf16>
    %87 = vector.shape_cast %86 : vector<1x1x128x4xbf16> to vector<128x4xbf16>
    %c1_127 = arith.constant 1 : index
    %c2_128 = arith.constant 2 : index
    %c0_129 = arith.constant 0 : index
    %c0_130 = arith.constant 0 : index
    %88 = vector.load %arg2[%c1_127, %c2_128, %c0_129, %c0_130] : memref<3x3x4x128xbf16, #tpu.memory_space<vmem>>, vector<1x1x4x128xbf16>
    %89 = vector.shape_cast %88 : vector<1x1x4x128xbf16> to vector<4x128xbf16>
    %cst_131 = arith.constant dense<0.000000e+00> : vector<128x128xf32>
    %90 = tpu.matmul %87, %89, %cst_131 {dimension_numbers = #tpu.dot_dimension_numbers<[1], [0], [0], [1], [0, 0, 1, 1], [], []>} : vector<128x4xbf16>, vector<4x128xbf16>, vector<128x128xf32> -> vector<128x128xf32>
    %91 = arith.addf %85, %90 : vector<128x128xf32>
    %c2_132 = arith.constant 2 : index
    %c1_133 = arith.constant 1 : index
    %c0_134 = arith.constant 0 : index
    %c0_135 = arith.constant 0 : index
    %92 = vector.load %arg1[%c2_132, %c1_133, %c0_134, %c0_135] : memref<4x4x128x4xbf16, #tpu.memory_space<vmem>>, vector<1x1x128x4xbf16>
    %93 = vector.shape_cast %92 : vector<1x1x128x4xbf16> to vector<128x4xbf16>
    %c2_136 = arith.constant 2 : index
    %c0_137 = arith.constant 0 : index
    %c0_138 = arith.constant 0 : index
    %c0_139 = arith.constant 0 : index
    %94 = vector.load %arg2[%c2_136, %c0_137, %c0_138, %c0_139] : memref<3x3x4x128xbf16, #tpu.memory_space<vmem>>, vector<1x1x4x128xbf16>
    %95 = vector.shape_cast %94 : vector<1x1x4x128xbf16> to vector<4x128xbf16>
    %cst_140 = arith.constant dense<0.000000e+00> : vector<128x128xf32>
    %96 = tpu.matmul %93, %95, %cst_140 {dimension_numbers = #tpu.dot_dimension_numbers<[1], [0], [0], [1], [0, 0, 1, 1], [], []>} : vector<128x4xbf16>, vector<4x128xbf16>, vector<128x128xf32> -> vector<128x128xf32>
    %97 = arith.addf %91, %96 : vector<128x128xf32>
    %c2_141 = arith.constant 2 : index
    %c2_142 = arith.constant 2 : index
    %c0_143 = arith.constant 0 : index
    %c0_144 = arith.constant 0 : index
    %98 = vector.load %arg1[%c2_141, %c2_142, %c0_143, %c0_144] : memref<4x4x128x4xbf16, #tpu.memory_space<vmem>>, vector<1x1x128x4xbf16>
    %99 = vector.shape_cast %98 : vector<1x1x128x4xbf16> to vector<128x4xbf16>
    %c2_145 = arith.constant 2 : index
    %c1_146 = arith.constant 1 : index
    %c0_147 = arith.constant 0 : index
    %c0_148 = arith.constant 0 : index
    %100 = vector.load %arg2[%c2_145, %c1_146, %c0_147, %c0_148] : memref<3x3x4x128xbf16, #tpu.memory_space<vmem>>, vector<1x1x4x128xbf16>
    %101 = vector.shape_cast %100 : vector<1x1x4x128xbf16> to vector<4x128xbf16>
    %cst_149 = arith.constant dense<0.000000e+00> : vector<128x128xf32>
    %102 = tpu.matmul %99, %101, %cst_149 {dimension_numbers = #tpu.dot_dimension_numbers<[1], [0], [0], [1], [0, 0, 1, 1], [], []>} : vector<128x4xbf16>, vector<4x128xbf16>, vector<128x128xf32> -> vector<128x128xf32>
    %103 = arith.addf %97, %102 : vector<128x128xf32>
    %c2_150 = arith.constant 2 : index
    %c3_151 = arith.constant 3 : index
    %c0_152 = arith.constant 0 : index
    %c0_153 = arith.constant 0 : index
    %104 = vector.load %arg1[%c2_150, %c3_151, %c0_152, %c0_153] : memref<4x4x128x4xbf16, #tpu.memory_space<vmem>>, vector<1x1x128x4xbf16>
    %105 = vector.shape_cast %104 : vector<1x1x128x4xbf16> to vector<128x4xbf16>
    %c2_154 = arith.constant 2 : index
    %c2_155 = arith.constant 2 : index
    %c0_156 = arith.constant 0 : index
    %c0_157 = arith.constant 0 : index
    %106 = vector.load %arg2[%c2_154, %c2_155, %c0_156, %c0_157] : memref<3x3x4x128xbf16, #tpu.memory_space<vmem>>, vector<1x1x4x128xbf16>
    %107 = vector.shape_cast %106 : vector<1x1x4x128xbf16> to vector<4x128xbf16>
    %cst_158 = arith.constant dense<0.000000e+00> : vector<128x128xf32>
    %108 = tpu.matmul %105, %107, %cst_158 {dimension_numbers = #tpu.dot_dimension_numbers<[1], [0], [0], [1], [0, 0, 1, 1], [], []>} : vector<128x4xbf16>, vector<4x128xbf16>, vector<128x128xf32> -> vector<128x128xf32>
    %109 = arith.addf %103, %108 : vector<128x128xf32>
    %110 = arith.maximumf %54, %109 : vector<128x128xf32>
    %cst_159 = arith.constant 0.000000e+00 : f32
    %111 = vector.broadcast %cst_159 : f32 to vector<128x128xf32>
    %c1_160 = arith.constant 1 : index
    %c0_161 = arith.constant 0 : index
    %c0_162 = arith.constant 0 : index
    %c0_163 = arith.constant 0 : index
    %112 = vector.load %arg1[%c1_160, %c0_161, %c0_162, %c0_163] : memref<4x4x128x4xbf16, #tpu.memory_space<vmem>>, vector<1x1x128x4xbf16>
    %113 = vector.shape_cast %112 : vector<1x1x128x4xbf16> to vector<128x4xbf16>
    %c0_164 = arith.constant 0 : index
    %c0_165 = arith.constant 0 : index
    %c0_166 = arith.constant 0 : index
    %c0_167 = arith.constant 0 : index
    %114 = vector.load %arg2[%c0_164, %c0_165, %c0_166, %c0_167] : memref<3x3x4x128xbf16, #tpu.memory_space<vmem>>, vector<1x1x4x128xbf16>
    %115 = vector.shape_cast %114 : vector<1x1x4x128xbf16> to vector<4x128xbf16>
    %cst_168 = arith.constant dense<0.000000e+00> : vector<128x128xf32>
    %116 = tpu.matmul %113, %115, %cst_168 {dimension_numbers = #tpu.dot_dimension_numbers<[1], [0], [0], [1], [0, 0, 1, 1], [], []>} : vector<128x4xbf16>, vector<4x128xbf16>, vector<128x128xf32> -> vector<128x128xf32>
    %117 = arith.addf %111, %116 : vector<128x128xf32>
    %c1_169 = arith.constant 1 : index
    %c1_170 = arith.constant 1 : index
    %c0_171 = arith.constant 0 : index
    %c0_172 = arith.constant 0 : index
    %118 = vector.load %arg1[%c1_169, %c1_170, %c0_171, %c0_172] : memref<4x4x128x4xbf16, #tpu.memory_space<vmem>>, vector<1x1x128x4xbf16>
    %119 = vector.shape_cast %118 : vector<1x1x128x4xbf16> to vector<128x4xbf16>
    %c0_173 = arith.constant 0 : index
    %c1_174 = arith.constant 1 : index
    %c0_175 = arith.constant 0 : index
    %c0_176 = arith.constant 0 : index
    %120 = vector.load %arg2[%c0_173, %c1_174, %c0_175, %c0_176] : memref<3x3x4x128xbf16, #tpu.memory_space<vmem>>, vector<1x1x4x128xbf16>
    %121 = vector.shape_cast %120 : vector<1x1x4x128xbf16> to vector<4x128xbf16>
    %cst_177 = arith.constant dense<0.000000e+00> : vector<128x128xf32>
    %122 = tpu.matmul %119, %121, %cst_177 {dimension_numbers = #tpu.dot_dimension_numbers<[1], [0], [0], [1], [0, 0, 1, 1], [], []>} : vector<128x4xbf16>, vector<4x128xbf16>, vector<128x128xf32> -> vector<128x128xf32>
    %123 = arith.addf %117, %122 : vector<128x128xf32>
    %c1_178 = arith.constant 1 : index
    %c2_179 = arith.constant 2 : index
    %c0_180 = arith.constant 0 : index
    %c0_181 = arith.constant 0 : index
    %124 = vector.load %arg1[%c1_178, %c2_179, %c0_180, %c0_181] : memref<4x4x128x4xbf16, #tpu.memory_space<vmem>>, vector<1x1x128x4xbf16>
    %125 = vector.shape_cast %124 : vector<1x1x128x4xbf16> to vector<128x4xbf16>
    %c0_182 = arith.constant 0 : index
    %c2_183 = arith.constant 2 : index
    %c0_184 = arith.constant 0 : index
    %c0_185 = arith.constant 0 : index
    %126 = vector.load %arg2[%c0_182, %c2_183, %c0_184, %c0_185] : memref<3x3x4x128xbf16, #tpu.memory_space<vmem>>, vector<1x1x4x128xbf16>
    %127 = vector.shape_cast %126 : vector<1x1x4x128xbf16> to vector<4x128xbf16>
    %cst_186 = arith.constant dense<0.000000e+00> : vector<128x128xf32>
    %128 = tpu.matmul %125, %127, %cst_186 {dimension_numbers = #tpu.dot_dimension_numbers<[1], [0], [0], [1], [0, 0, 1, 1], [], []>} : vector<128x4xbf16>, vector<4x128xbf16>, vector<128x128xf32> -> vector<128x128xf32>
    %129 = arith.addf %123, %128 : vector<128x128xf32>
    %c2_187 = arith.constant 2 : index
    %c0_188 = arith.constant 0 : index
    %c0_189 = arith.constant 0 : index
    %c0_190 = arith.constant 0 : index
    %130 = vector.load %arg1[%c2_187, %c0_188, %c0_189, %c0_190] : memref<4x4x128x4xbf16, #tpu.memory_space<vmem>>, vector<1x1x128x4xbf16>
    %131 = vector.shape_cast %130 : vector<1x1x128x4xbf16> to vector<128x4xbf16>
    %c1_191 = arith.constant 1 : index
    %c0_192 = arith.constant 0 : index
    %c0_193 = arith.constant 0 : index
    %c0_194 = arith.constant 0 : index
    %132 = vector.load %arg2[%c1_191, %c0_192, %c0_193, %c0_194] : memref<3x3x4x128xbf16, #tpu.memory_space<vmem>>, vector<1x1x4x128xbf16>
    %133 = vector.shape_cast %132 : vector<1x1x4x128xbf16> to vector<4x128xbf16>
    %cst_195 = arith.constant dense<0.000000e+00> : vector<128x128xf32>
    %134 = tpu.matmul %131, %133, %cst_195 {dimension_numbers = #tpu.dot_dimension_numbers<[1], [0], [0], [1], [0, 0, 1, 1], [], []>} : vector<128x4xbf16>, vector<4x128xbf16>, vector<128x128xf32> -> vector<128x128xf32>
    %135 = arith.addf %129, %134 : vector<128x128xf32>
    %c2_196 = arith.constant 2 : index
    %c1_197 = arith.constant 1 : index
    %c0_198 = arith.constant 0 : index
    %c0_199 = arith.constant 0 : index
    %136 = vector.load %arg1[%c2_196, %c1_197, %c0_198, %c0_199] : memref<4x4x128x4xbf16, #tpu.memory_space<vmem>>, vector<1x1x128x4xbf16>
    %137 = vector.shape_cast %136 : vector<1x1x128x4xbf16> to vector<128x4xbf16>
    %c1_200 = arith.constant 1 : index
    %c1_201 = arith.constant 1 : index
    %c0_202 = arith.constant 0 : index
    %c0_203 = arith.constant 0 : index
    %138 = vector.load %arg2[%c1_200, %c1_201, %c0_202, %c0_203] : memref<3x3x4x128xbf16, #tpu.memory_space<vmem>>, vector<1x1x4x128xbf16>
    %139 = vector.shape_cast %138 : vector<1x1x4x128xbf16> to vector<4x128xbf16>
    %cst_204 = arith.constant dense<0.000000e+00> : vector<128x128xf32>
    %140 = tpu.matmul %137, %139, %cst_204 {dimension_numbers = #tpu.dot_dimension_numbers<[1], [0], [0], [1], [0, 0, 1, 1], [], []>} : vector<128x4xbf16>, vector<4x128xbf16>, vector<128x128xf32> -> vector<128x128xf32>
    %141 = arith.addf %135, %140 : vector<128x128xf32>
    %c2_205 = arith.constant 2 : index
    %c2_206 = arith.constant 2 : index
    %c0_207 = arith.constant 0 : index
    %c0_208 = arith.constant 0 : index
    %142 = vector.load %arg1[%c2_205, %c2_206, %c0_207, %c0_208] : memref<4x4x128x4xbf16, #tpu.memory_space<vmem>>, vector<1x1x128x4xbf16>
    %143 = vector.shape_cast %142 : vector<1x1x128x4xbf16> to vector<128x4xbf16>
    %c1_209 = arith.constant 1 : index
    %c2_210 = arith.constant 2 : index
    %c0_211 = arith.constant 0 : index
    %c0_212 = arith.constant 0 : index
    %144 = vector.load %arg2[%c1_209, %c2_210, %c0_211, %c0_212] : memref<3x3x4x128xbf16, #tpu.memory_space<vmem>>, vector<1x1x4x128xbf16>
    %145 = vector.shape_cast %144 : vector<1x1x4x128xbf16> to vector<4x128xbf16>
    %cst_213 = arith.constant dense<0.000000e+00> : vector<128x128xf32>
    %146 = tpu.matmul %143, %145, %cst_213 {dimension_numbers = #tpu.dot_dimension_numbers<[1], [0], [0], [1], [0, 0, 1, 1], [], []>} : vector<128x4xbf16>, vector<4x128xbf16>, vector<128x128xf32> -> vector<128x128xf32>
    %147 = arith.addf %141, %146 : vector<128x128xf32>
    %c3_214 = arith.constant 3 : index
    %c0_215 = arith.constant 0 : index
    %c0_216 = arith.constant 0 : index
    %c0_217 = arith.constant 0 : index
    %148 = vector.load %arg1[%c3_214, %c0_215, %c0_216, %c0_217] : memref<4x4x128x4xbf16, #tpu.memory_space<vmem>>, vector<1x1x128x4xbf16>
    %149 = vector.shape_cast %148 : vector<1x1x128x4xbf16> to vector<128x4xbf16>
    %c2_218 = arith.constant 2 : index
    %c0_219 = arith.constant 0 : index
    %c0_220 = arith.constant 0 : index
    %c0_221 = arith.constant 0 : index
    %150 = vector.load %arg2[%c2_218, %c0_219, %c0_220, %c0_221] : memref<3x3x4x128xbf16, #tpu.memory_space<vmem>>, vector<1x1x4x128xbf16>
    %151 = vector.shape_cast %150 : vector<1x1x4x128xbf16> to vector<4x128xbf16>
    %cst_222 = arith.constant dense<0.000000e+00> : vector<128x128xf32>
    %152 = tpu.matmul %149, %151, %cst_222 {dimension_numbers = #tpu.dot_dimension_numbers<[1], [0], [0], [1], [0, 0, 1, 1], [], []>} : vector<128x4xbf16>, vector<4x128xbf16>, vector<128x128xf32> -> vector<128x128xf32>
    %153 = arith.addf %147, %152 : vector<128x128xf32>
    %c3_223 = arith.constant 3 : index
    %c1_224 = arith.constant 1 : index
    %c0_225 = arith.constant 0 : index
    %c0_226 = arith.constant 0 : index
    %154 = vector.load %arg1[%c3_223, %c1_224, %c0_225, %c0_226] : memref<4x4x128x4xbf16, #tpu.memory_space<vmem>>, vector<1x1x128x4xbf16>
    %155 = vector.shape_cast %154 : vector<1x1x128x4xbf16> to vector<128x4xbf16>
    %c2_227 = arith.constant 2 : index
    %c1_228 = arith.constant 1 : index
    %c0_229 = arith.constant 0 : index
    %c0_230 = arith.constant 0 : index
    %156 = vector.load %arg2[%c2_227, %c1_228, %c0_229, %c0_230] : memref<3x3x4x128xbf16, #tpu.memory_space<vmem>>, vector<1x1x4x128xbf16>
    %157 = vector.shape_cast %156 : vector<1x1x4x128xbf16> to vector<4x128xbf16>
    %cst_231 = arith.constant dense<0.000000e+00> : vector<128x128xf32>
    %158 = tpu.matmul %155, %157, %cst_231 {dimension_numbers = #tpu.dot_dimension_numbers<[1], [0], [0], [1], [0, 0, 1, 1], [], []>} : vector<128x4xbf16>, vector<4x128xbf16>, vector<128x128xf32> -> vector<128x128xf32>
    %159 = arith.addf %153, %158 : vector<128x128xf32>
    %c3_232 = arith.constant 3 : index
    %c2_233 = arith.constant 2 : index
    %c0_234 = arith.constant 0 : index
    %c0_235 = arith.constant 0 : index
    %160 = vector.load %arg1[%c3_232, %c2_233, %c0_234, %c0_235] : memref<4x4x128x4xbf16, #tpu.memory_space<vmem>>, vector<1x1x128x4xbf16>
    %161 = vector.shape_cast %160 : vector<1x1x128x4xbf16> to vector<128x4xbf16>
    %c2_236 = arith.constant 2 : index
    %c2_237 = arith.constant 2 : index
    %c0_238 = arith.constant 0 : index
    %c0_239 = arith.constant 0 : index
    %162 = vector.load %arg2[%c2_236, %c2_237, %c0_238, %c0_239] : memref<3x3x4x128xbf16, #tpu.memory_space<vmem>>, vector<1x1x4x128xbf16>
    %163 = vector.shape_cast %162 : vector<1x1x4x128xbf16> to vector<4x128xbf16>
    %cst_240 = arith.constant dense<0.000000e+00> : vector<128x128xf32>
    %164 = tpu.matmul %161, %163, %cst_240 {dimension_numbers = #tpu.dot_dimension_numbers<[1], [0], [0], [1], [0, 0, 1, 1], [], []>} : vector<128x4xbf16>, vector<4x128xbf16>, vector<128x128xf32> -> vector<128x128xf32>
    %165 = arith.addf %159, %164 : vector<128x128xf32>
    %166 = arith.maximumf %110, %165 : vector<128x128xf32>
    %cst_241 = arith.constant 0.000000e+00 : f32
    %167 = vector.broadcast %cst_241 : f32 to vector<128x128xf32>
    %c1_242 = arith.constant 1 : index
    %c1_243 = arith.constant 1 : index
    %c0_244 = arith.constant 0 : index
    %c0_245 = arith.constant 0 : index
    %168 = vector.load %arg1[%c1_242, %c1_243, %c0_244, %c0_245] : memref<4x4x128x4xbf16, #tpu.memory_space<vmem>>, vector<1x1x128x4xbf16>
    %169 = vector.shape_cast %168 : vector<1x1x128x4xbf16> to vector<128x4xbf16>
    %c0_246 = arith.constant 0 : index
    %c0_247 = arith.constant 0 : index
    %c0_248 = arith.constant 0 : index
    %c0_249 = arith.constant 0 : index
    %170 = vector.load %arg2[%c0_246, %c0_247, %c0_248, %c0_249] : memref<3x3x4x128xbf16, #tpu.memory_space<vmem>>, vector<1x1x4x128xbf16>
    %171 = vector.shape_cast %170 : vector<1x1x4x128xbf16> to vector<4x128xbf16>
    %cst_250 = arith.constant dense<0.000000e+00> : vector<128x128xf32>
    %172 = tpu.matmul %169, %171, %cst_250 {dimension_numbers = #tpu.dot_dimension_numbers<[1], [0], [0], [1], [0, 0, 1, 1], [], []>} : vector<128x4xbf16>, vector<4x128xbf16>, vector<128x128xf32> -> vector<128x128xf32>
    %173 = arith.addf %167, %172 : vector<128x128xf32>
    %c1_251 = arith.constant 1 : index
    %c2_252 = arith.constant 2 : index
    %c0_253 = arith.constant 0 : index
    %c0_254 = arith.constant 0 : index
    %174 = vector.load %arg1[%c1_251, %c2_252, %c0_253, %c0_254] : memref<4x4x128x4xbf16, #tpu.memory_space<vmem>>, vector<1x1x128x4xbf16>
    %175 = vector.shape_cast %174 : vector<1x1x128x4xbf16> to vector<128x4xbf16>
    %c0_255 = arith.constant 0 : index
    %c1_256 = arith.constant 1 : index
    %c0_257 = arith.constant 0 : index
    %c0_258 = arith.constant 0 : index
    %176 = vector.load %arg2[%c0_255, %c1_256, %c0_257, %c0_258] : memref<3x3x4x128xbf16, #tpu.memory_space<vmem>>, vector<1x1x4x128xbf16>
    %177 = vector.shape_cast %176 : vector<1x1x4x128xbf16> to vector<4x128xbf16>
    %cst_259 = arith.constant dense<0.000000e+00> : vector<128x128xf32>
    %178 = tpu.matmul %175, %177, %cst_259 {dimension_numbers = #tpu.dot_dimension_numbers<[1], [0], [0], [1], [0, 0, 1, 1], [], []>} : vector<128x4xbf16>, vector<4x128xbf16>, vector<128x128xf32> -> vector<128x128xf32>
    %179 = arith.addf %173, %178 : vector<128x128xf32>
    %c1_260 = arith.constant 1 : index
    %c3_261 = arith.constant 3 : index
    %c0_262 = arith.constant 0 : index
    %c0_263 = arith.constant 0 : index
    %180 = vector.load %arg1[%c1_260, %c3_261, %c0_262, %c0_263] : memref<4x4x128x4xbf16, #tpu.memory_space<vmem>>, vector<1x1x128x4xbf16>
    %181 = vector.shape_cast %180 : vector<1x1x128x4xbf16> to vector<128x4xbf16>
    %c0_264 = arith.constant 0 : index
    %c2_265 = arith.constant 2 : index
    %c0_266 = arith.constant 0 : index
    %c0_267 = arith.constant 0 : index
    %182 = vector.load %arg2[%c0_264, %c2_265, %c0_266, %c0_267] : memref<3x3x4x128xbf16, #tpu.memory_space<vmem>>, vector<1x1x4x128xbf16>
    %183 = vector.shape_cast %182 : vector<1x1x4x128xbf16> to vector<4x128xbf16>
    %cst_268 = arith.constant dense<0.000000e+00> : vector<128x128xf32>
    %184 = tpu.matmul %181, %183, %cst_268 {dimension_numbers = #tpu.dot_dimension_numbers<[1], [0], [0], [1], [0, 0, 1, 1], [], []>} : vector<128x4xbf16>, vector<4x128xbf16>, vector<128x128xf32> -> vector<128x128xf32>
    %185 = arith.addf %179, %184 : vector<128x128xf32>
    %c2_269 = arith.constant 2 : index
    %c1_270 = arith.constant 1 : index
    %c0_271 = arith.constant 0 : index
    %c0_272 = arith.constant 0 : index
    %186 = vector.load %arg1[%c2_269, %c1_270, %c0_271, %c0_272] : memref<4x4x128x4xbf16, #tpu.memory_space<vmem>>, vector<1x1x128x4xbf16>
    %187 = vector.shape_cast %186 : vector<1x1x128x4xbf16> to vector<128x4xbf16>
    %c1_273 = arith.constant 1 : index
    %c0_274 = arith.constant 0 : index
    %c0_275 = arith.constant 0 : index
    %c0_276 = arith.constant 0 : index
    %188 = vector.load %arg2[%c1_273, %c0_274, %c0_275, %c0_276] : memref<3x3x4x128xbf16, #tpu.memory_space<vmem>>, vector<1x1x4x128xbf16>
    %189 = vector.shape_cast %188 : vector<1x1x4x128xbf16> to vector<4x128xbf16>
    %cst_277 = arith.constant dense<0.000000e+00> : vector<128x128xf32>
    %190 = tpu.matmul %187, %189, %cst_277 {dimension_numbers = #tpu.dot_dimension_numbers<[1], [0], [0], [1], [0, 0, 1, 1], [], []>} : vector<128x4xbf16>, vector<4x128xbf16>, vector<128x128xf32> -> vector<128x128xf32>
    %191 = arith.addf %185, %190 : vector<128x128xf32>
    %c2_278 = arith.constant 2 : index
    %c2_279 = arith.constant 2 : index
    %c0_280 = arith.constant 0 : index
    %c0_281 = arith.constant 0 : index
    %192 = vector.load %arg1[%c2_278, %c2_279, %c0_280, %c0_281] : memref<4x4x128x4xbf16, #tpu.memory_space<vmem>>, vector<1x1x128x4xbf16>
    %193 = vector.shape_cast %192 : vector<1x1x128x4xbf16> to vector<128x4xbf16>
    %c1_282 = arith.constant 1 : index
    %c1_283 = arith.constant 1 : index
    %c0_284 = arith.constant 0 : index
    %c0_285 = arith.constant 0 : index
    %194 = vector.load %arg2[%c1_282, %c1_283, %c0_284, %c0_285] : memref<3x3x4x128xbf16, #tpu.memory_space<vmem>>, vector<1x1x4x128xbf16>
    %195 = vector.shape_cast %194 : vector<1x1x4x128xbf16> to vector<4x128xbf16>
    %cst_286 = arith.constant dense<0.000000e+00> : vector<128x128xf32>
    %196 = tpu.matmul %193, %195, %cst_286 {dimension_numbers = #tpu.dot_dimension_numbers<[1], [0], [0], [1], [0, 0, 1, 1], [], []>} : vector<128x4xbf16>, vector<4x128xbf16>, vector<128x128xf32> -> vector<128x128xf32>
    %197 = arith.addf %191, %196 : vector<128x128xf32>
    %c2_287 = arith.constant 2 : index
    %c3_288 = arith.constant 3 : index
    %c0_289 = arith.constant 0 : index
    %c0_290 = arith.constant 0 : index
    %198 = vector.load %arg1[%c2_287, %c3_288, %c0_289, %c0_290] : memref<4x4x128x4xbf16, #tpu.memory_space<vmem>>, vector<1x1x128x4xbf16>
    %199 = vector.shape_cast %198 : vector<1x1x128x4xbf16> to vector<128x4xbf16>
    %c1_291 = arith.constant 1 : index
    %c2_292 = arith.constant 2 : index
    %c0_293 = arith.constant 0 : index
    %c0_294 = arith.constant 0 : index
    %200 = vector.load %arg2[%c1_291, %c2_292, %c0_293, %c0_294] : memref<3x3x4x128xbf16, #tpu.memory_space<vmem>>, vector<1x1x4x128xbf16>
    %201 = vector.shape_cast %200 : vector<1x1x4x128xbf16> to vector<4x128xbf16>
    %cst_295 = arith.constant dense<0.000000e+00> : vector<128x128xf32>
    %202 = tpu.matmul %199, %201, %cst_295 {dimension_numbers = #tpu.dot_dimension_numbers<[1], [0], [0], [1], [0, 0, 1, 1], [], []>} : vector<128x4xbf16>, vector<4x128xbf16>, vector<128x128xf32> -> vector<128x128xf32>
    %203 = arith.addf %197, %202 : vector<128x128xf32>
    %c3_296 = arith.constant 3 : index
    %c1_297 = arith.constant 1 : index
    %c0_298 = arith.constant 0 : index
    %c0_299 = arith.constant 0 : index
    %204 = vector.load %arg1[%c3_296, %c1_297, %c0_298, %c0_299] : memref<4x4x128x4xbf16, #tpu.memory_space<vmem>>, vector<1x1x128x4xbf16>
    %205 = vector.shape_cast %204 : vector<1x1x128x4xbf16> to vector<128x4xbf16>
    %c2_300 = arith.constant 2 : index
    %c0_301 = arith.constant 0 : index
    %c0_302 = arith.constant 0 : index
    %c0_303 = arith.constant 0 : index
    %206 = vector.load %arg2[%c2_300, %c0_301, %c0_302, %c0_303] : memref<3x3x4x128xbf16, #tpu.memory_space<vmem>>, vector<1x1x4x128xbf16>
    %207 = vector.shape_cast %206 : vector<1x1x4x128xbf16> to vector<4x128xbf16>
    %cst_304 = arith.constant dense<0.000000e+00> : vector<128x128xf32>
    %208 = tpu.matmul %205, %207, %cst_304 {dimension_numbers = #tpu.dot_dimension_numbers<[1], [0], [0], [1], [0, 0, 1, 1], [], []>} : vector<128x4xbf16>, vector<4x128xbf16>, vector<128x128xf32> -> vector<128x128xf32>
    %209 = arith.addf %203, %208 : vector<128x128xf32>
    %c3_305 = arith.constant 3 : index
    %c2_306 = arith.constant 2 : index
    %c0_307 = arith.constant 0 : index
    %c0_308 = arith.constant 0 : index
    %210 = vector.load %arg1[%c3_305, %c2_306, %c0_307, %c0_308] : memref<4x4x128x4xbf16, #tpu.memory_space<vmem>>, vector<1x1x128x4xbf16>
    %211 = vector.shape_cast %210 : vector<1x1x128x4xbf16> to vector<128x4xbf16>
    %c2_309 = arith.constant 2 : index
    %c1_310 = arith.constant 1 : index
    %c0_311 = arith.constant 0 : index
    %c0_312 = arith.constant 0 : index
    %212 = vector.load %arg2[%c2_309, %c1_310, %c0_311, %c0_312] : memref<3x3x4x128xbf16, #tpu.memory_space<vmem>>, vector<1x1x4x128xbf16>
    %213 = vector.shape_cast %212 : vector<1x1x4x128xbf16> to vector<4x128xbf16>
    %cst_313 = arith.constant dense<0.000000e+00> : vector<128x128xf32>
    %214 = tpu.matmul %211, %213, %cst_313 {dimension_numbers = #tpu.dot_dimension_numbers<[1], [0], [0], [1], [0, 0, 1, 1], [], []>} : vector<128x4xbf16>, vector<4x128xbf16>, vector<128x128xf32> -> vector<128x128xf32>
    %215 = arith.addf %209, %214 : vector<128x128xf32>
    %c3_314 = arith.constant 3 : index
    %c3_315 = arith.constant 3 : index
    %c0_316 = arith.constant 0 : index
    %c0_317 = arith.constant 0 : index
    %216 = vector.load %arg1[%c3_314, %c3_315, %c0_316, %c0_317] : memref<4x4x128x4xbf16, #tpu.memory_space<vmem>>, vector<1x1x128x4xbf16>
    %217 = vector.shape_cast %216 : vector<1x1x128x4xbf16> to vector<128x4xbf16>
    %c2_318 = arith.constant 2 : index
    %c2_319 = arith.constant 2 : index
    %c0_320 = arith.constant 0 : index
    %c0_321 = arith.constant 0 : index
    %218 = vector.load %arg2[%c2_318, %c2_319, %c0_320, %c0_321] : memref<3x3x4x128xbf16, #tpu.memory_space<vmem>>, vector<1x1x4x128xbf16>
    %219 = vector.shape_cast %218 : vector<1x1x4x128xbf16> to vector<4x128xbf16>
    %cst_322 = arith.constant dense<0.000000e+00> : vector<128x128xf32>
    %220 = tpu.matmul %217, %219, %cst_322 {dimension_numbers = #tpu.dot_dimension_numbers<[1], [0], [0], [1], [0, 0, 1, 1], [], []>} : vector<128x4xbf16>, vector<4x128xbf16>, vector<128x128xf32> -> vector<128x128xf32>
    %221 = arith.addf %215, %220 : vector<128x128xf32>
    %222 = arith.maximumf %166, %221 : vector<128x128xf32>
    %c0_323 = arith.constant 0 : index
    %c0_324 = arith.constant 0 : index
    %223 = vector.load %arg3[%c0_323, %c0_324] : memref<1x128xf32, #tpu.memory_space<vmem>>, vector<1x128xf32>
    %224 = vector.broadcast %223 : vector<1x128xf32> to vector<128x128xf32>
    %225 = arith.addf %222, %224 : vector<128x128xf32>
    %cst_325 = arith.constant dense<0.000000e+00> : vector<128xf32>
    %226 = vector.multi_reduction <add>, %225, %cst_325 [0] : vector<128x128xf32> to vector<128xf32>
    %227 = vector.shape_cast %226 : vector<128xf32> to vector<1x128xf32>
    %cst_326 = arith.constant 7.812500e-03 : f32
    %228 = vector.broadcast %cst_326 : f32 to vector<1x128xf32>
    %229 = arith.mulf %227, %228 : vector<1x128xf32>
    %230 = vector.broadcast %229 : vector<1x128xf32> to vector<128x128xf32>
    %231 = arith.subf %225, %230 : vector<128x128xf32>
    %232 = arith.mulf %231, %231 : vector<128x128xf32>
    %cst_327 = arith.constant dense<0.000000e+00> : vector<128xf32>
    %233 = vector.multi_reduction <add>, %232, %cst_327 [0] : vector<128x128xf32> to vector<128xf32>
    %234 = vector.shape_cast %233 : vector<128xf32> to vector<1x128xf32>
    %cst_328 = arith.constant 7.812500e-03 : f32
    %235 = vector.broadcast %cst_328 : f32 to vector<1x128xf32>
    %236 = arith.mulf %234, %235 : vector<1x128xf32>
    %c0_329 = arith.constant 0 : index
    %c0_330 = arith.constant 0 : index
    %237 = vector.load %arg4[%c0_329, %c0_330] : memref<1x128xf32, #tpu.memory_space<vmem>>, vector<1x128xf32>
    %cst_331 = arith.constant 9.99999974E-6 : f32
    %238 = vector.broadcast %cst_331 : f32 to vector<1x128xf32>
    %239 = arith.addf %236, %238 : vector<1x128xf32>
    %240 = math.rsqrt %239 : vector<1x128xf32>
    %241 = arith.mulf %237, %240 : vector<1x128xf32>
    %242 = vector.broadcast %241 : vector<1x128xf32> to vector<128x128xf32>
    %243 = arith.mulf %231, %242 : vector<128x128xf32>
    %c0_332 = arith.constant 0 : index
    %c0_333 = arith.constant 0 : index
    %244 = vector.load %arg5[%c0_332, %c0_333] : memref<1x128xf32, #tpu.memory_space<vmem>>, vector<1x128xf32>
    %245 = vector.broadcast %244 : vector<1x128xf32> to vector<128x128xf32>
    %246 = arith.addf %243, %245 : vector<128x128xf32>
    %cst_334 = arith.constant 0.000000e+00 : f32
    %247 = vector.broadcast %cst_334 : f32 to vector<128x128xf32>
    %248 = arith.maximumf %246, %247 : vector<128x128xf32>
    %c0_335 = arith.constant 0 : index
    %c0_336 = arith.constant 0 : index
    %249 = vector.load %arg6[%c0_335, %c0_336] : memref<128x128xf32, #tpu.memory_space<vmem>>, vector<128x128xf32>
    tpu.vector_store %arg6[%c0_335, %c0_336], %248 {strides = array<i32>} : memref<128x128xf32, #tpu.memory_space<vmem>>, vector<128x128xf32>,
    return
  }
  func.func @transform_0(%arg0: i32) -> (i32, i32, i32, i32) {
    %c0_i32 = arith.constant 0 : i32
    %c0_i32_0 = arith.constant 0 : i32
    %c0_i32_1 = arith.constant 0 : i32
    %c0_i32_2 = arith.constant 0 : i32
    %c0_i32_3 = arith.constant 0 : i32
    return %c0_i32, %c0_i32_0, %c0_i32_1, %c0_i32_2 : i32, i32, i32, i32
  }
  func.func @transform_1(%arg0: i32) -> (i32, i32, i32, i32) {
    %c0_i32 = arith.constant 0 : i32
    %c0_i32_0 = arith.constant 0 : i32
    %c0_i32_1 = arith.constant 0 : i32
    %c0_i32_2 = arith.constant 0 : i32
    %c0_i32_3 = arith.constant 0 : i32
    return %c0_i32, %c0_i32_0, %c0_i32_1, %c0_i32_2 : i32, i32, i32, i32
  }
  func.func @transform_2(%arg0: i32) -> (i32, i32) {
    %c0_i32 = arith.constant 0 : i32
    %c0_i32_0 = arith.constant 0 : i32
    %c0_i32_1 = arith.constant 0 : i32
    return %c0_i32, %c0_i32_0 : i32, i32
  }
  func.func @transform_3(%arg0: i32) -> (i32, i32) {
    %c0_i32 = arith.constant 0 : i32
    %c0_i32_0 = arith.constant 0 : i32
    %c0_i32_1 = arith.constant 0 : i32
    return %c0_i32, %c0_i32_0 : i32, i32
  }
  func.func @transform_4(%arg0: i32) -> (i32, i32) {
    %c0_i32 = arith.constant 0 : i32
    %c0_i32_0 = arith.constant 0 : i32
    %c0_i32_1 = arith.constant 0 : i32
    return %c0_i32, %c0_i32_0 : i32, i32
  }
  func.func @transform_5(%arg0: i32) -> (i32, i32) {
    %c0_i32 = arith.constant 0 : i32
    %c0_i32_0 = arith.constant 0 : i32
    %c0_i32_1 = arith.constant 0 : i32
    return %c0_i32, %c0_i32_0 : i32, i32
  }
}

</mosaic_0001>

<llo_original>
// kernel: conv2d_block_forward.1
$region0: #{conv2d_block_forward.1}
  #allocation0 [shape = 'u32[]', space=smem, size = 0x4, offset = 0x4, fixed_abs, tag = 'smem constant byte address 0x4 - core index']
  #allocation1 [shape = 'u32[72,128]{1,0:T(1,128)}', space=vmem, size = 0x9000, scoped, tag = 'internal scratch']
  %s0 = inlined_call_operand.vmem [shape: bf16[4,4,128,4], index: 0, kind: input, shape index: {}]
  %s1 = inlined_call_operand.vmem [shape: bf16[3,3,4,128], index: 1, kind: input, shape index: {}]
  %s2 = inlined_call_operand.vmem [shape: f32[1,128], index: 2, kind: input, shape index: {}]
  %s3 = inlined_call_operand.vmem [shape: f32[1,128], index: 3, kind: input, shape index: {}]
  %s4 = inlined_call_operand.vmem [shape: f32[1,128], index: 4, kind: input, shape index: {}]
  %s5 = inlined_call_operand.hbm [shape: f32[128,128], index: 5, kind: output, shape index: {}]
  %s6 = sld [smem:[#allocation0]]
  $region30: #{conv2d_block_forward.1} parent=0
    _
  %s8 = ssub.s32 1, %s6
  %s9 = scalar_select 0, %s8, %s6
  $region1: #{conv2d_block_forward.1} parent=0
    #allocation2 [shape = 'u8[65536]{0}', space=vmem, size = 0x10000, scoped, tag = 'output window, operand 0, single buffered']
    #allocation3 [shape = 's32[1]{0}', space=sflag, size = 0x4, scoped, tag = 'scoped memory for conv2d_block_forward.1']
    %10 = vsyncpa [#allocation3], 0
    // Predicated region
    $region2: #{conv2d_block_forward.1} parent=1 // pred_check
      _
    $region3: #{conv2d_block_forward.1} parent=1 // pred_check_branch
      %12 = sbr.rel (0) target = $region5
    $region4: #{conv2d_block_forward.1} parent=1 // pred_region
      _
    $region5: #{conv2d_block_forward.1} parent=1 // pred_fallthru
      _
    // Predicated region
    $region6: #{conv2d_block_forward.1} parent=1 // pred_check
      _
    $region7: #{conv2d_block_forward.1} parent=1 // pred_check_branch
      %14 = sbr.rel (0) target = $region9
    $region8: #{conv2d_block_forward.1} parent=1 // pred_region
      _
    $region9: #{conv2d_block_forward.1} parent=1 // pred_fallthru
      _
    // Predicated region
    $region10: #{conv2d_block_forward.1} parent=1 // pred_check
      _
    $region11: #{conv2d_block_forward.1} parent=1 // pred_check_branch
      %16 = sbr.rel (0) target = $region13
    $region12: #{conv2d_block_forward.1} parent=1 // pred_region
      _
    $region13: #{conv2d_block_forward.1} parent=1 // pred_fallthru
      _
    // Predicated region
    $region14: #{conv2d_block_forward.1} parent=1 // pred_check
      _
    $region15: #{conv2d_block_forward.1} parent=1 // pred_check_branch
      %18 = sbr.rel (0) target = $region17
    $region16: #{conv2d_block_forward.1} parent=1 // pred_region
      _
    $region17: #{conv2d_block_forward.1} parent=1 // pred_fallthru
      _
    // Predicated region
    $region18: #{conv2d_block_forward.1} parent=1 // pred_check
      _
    $region19: #{conv2d_block_forward.1} parent=1 // pred_check_branch
      %20 = sbr.rel (0) target = $region21
    $region20: #{conv2d_block_forward.1} parent=1 // pred_region
      _
    $region21: #{conv2d_block_forward.1} parent=1 // pred_fallthru
      _
    %v22 = vld [vmem:[%s0] sm:$0xf]
    %v23 = vld [vmem:[%s0 + $0x4] sm:$0xf]
    %v24 = vld [vmem:[%s0 + $0x8] sm:$0xf]
    %v25 = vld [vmem:[%s0 + $0xc] sm:$0xf]
    %v26 = vld [vmem:[%s0 + $0x10] sm:$0xf]
    %v27 = vld [vmem:[%s0 + $0x14] sm:$0xf]
    %v28 = vld [vmem:[%s0 + $0x18] sm:$0xf]
    %v29 = vld [vmem:[%s0 + $0x1c] sm:$0xf]
    %v30 = vld [vmem:[%s0 + $0x20] sm:$0xf]
    %v31 = vld [vmem:[%s0 + $0x24] sm:$0xf]
    %v32 = vld [vmem:[%s0 + $0x28] sm:$0xf]
    %v33 = vld [vmem:[%s0 + $0x2c] sm:$0xf]
    %v34 = vld [vmem:[%s0 + $0x30] sm:$0xf]
    %v35 = vld [vmem:[%s0 + $0x34] sm:$0xf]
    %v36 = vld [vmem:[%s0 + $0x38] sm:$0xf]
    %v37 = vld [vmem:[%s0 + $0x3c] sm:$0xf]
    %v38 = vld [vmem:[%s1] sm:$0x3]
    %s39 = scalar_lea.vmem %s0, 64
    %v40 = vld [vmem:[%s39] sm:$0xf]
    %v41 = vld [vmem:[%s39 + $0x4] sm:$0xf]
    %v42 = vld [vmem:[%s39 + $0x8] sm:$0xf]
    %v43 = vld [vmem:[%s39 + $0xc] sm:$0xf]
    %v44 = vld [vmem:[%s39 + $0x10] sm:$0xf]
    %v45 = vld [vmem:[%s39 + $0x14] sm:$0xf]
    %v46 = vld [vmem:[%s39 + $0x18] sm:$0xf]
    %v47 = vld [vmem:[%s39 + $0x1c] sm:$0xf]
    %v48 = vld [vmem:[%s39 + $0x20] sm:$0xf]
    %v49 = vld [vmem:[%s39 + $0x24] sm:$0xf]
    %v50 = vld [vmem:[%s39 + $0x28] sm:$0xf]
    %v51 = vld [vmem:[%s39 + $0x2c] sm:$0xf]
    %v52 = vld [vmem:[%s39 + $0x30] sm:$0xf]
    %v53 = vld [vmem:[%s39 + $0x34] sm:$0xf]
    %v54 = vld [vmem:[%s39 + $0x38] sm:$0xf]
    %v55 = vld [vmem:[%s39 + $0x3c] sm:$0xf]
    %s56 = scalar_lea.vmem %s1, 2
    %v57 = vld [vmem:[%s56] sm:$0x3]
    %v74 = vunpack.c.l.b16 %v40
    %v75 = vunpack.c.l.b16 %v41
    %v76 = vunpack.c.l.b16 %v42
    %v77 = vunpack.c.l.b16 %v43
    %v78 = vunpack.c.l.b16 %v44
    %v79 = vunpack.c.l.b16 %v45
    %v80 = vunpack.c.l.b16 %v46
    %v81 = vunpack.c.l.b16 %v47
    %v82 = vunpack.c.l.b16 %v48
    %v83 = vunpack.c.l.b16 %v49
    %v84 = vunpack.c.l.b16 %v50
    %v85 = vunpack.c.l.b16 %v51
    %v86 = vunpack.c.l.b16 %v52
    %v87 = vunpack.c.l.b16 %v53
    %v88 = vunpack.c.l.b16 %v54
    %v89 = vunpack.c.l.b16 %v55
    %v90 = vpack.c.b16 %v75, %v74
    %v91 = vpack.c.b16 %v77, %v76
    %v92 = vpack.c.b16 %v79, %v78
    %v93 = vpack.c.b16 %v81, %v80
    %v94 = vpack.c.b16 %v83, %v82
    %v95 = vpack.c.b16 %v85, %v84
    %v96 = vpack.c.b16 %v87, %v86
    %v97 = vpack.c.b16 %v89, %v88
    %vm98 = vcmask 31744
    %v100 = vsel %vm98, %v90, 0
    %v103 = vsel %vm98, %v91, 0
    %v106 = vsel %vm98, %v92, 0
    %v109 = vsel %vm98, %v93, 0
    %v112 = vsel %vm98, %v94, 0
    %v115 = vsel %vm98, %v95, 0
    %v118 = vsel %vm98, %v96, 0
    %v121 = vsel %vm98, %v97, 0
    %vm123 = vcmask 1041408
    %v125 = vsel %vm123, %v57, 0
    %127 = vmatpush.bf16.msra.mxu0 0
    %128 = vmatpush.bf16.msra.mxu0 0
    %129 = vmatpush.bf16.msra.mxu0 0
    %130 = vmatpush.bf16.msra.mxu0 0
    %131 = vmatpush.bf16.msra.mxu0 0
    %132 = vmatpush.bf16.msra.mxu0 0
    %133 = vmatpush.bf16.msra.mxu0 0
    %134 = vmatpush.bf16.msra.mxu0 %v125
    %135 = vmatmul.bf16.gmra.mxu0 %v100
    %v136 = vpop.f32.mrf.mxu0
    %v137 = vadd.f32 0.0, %v136
    %v138 = vpop.f32.mrf.mxu0
    %v139 = vadd.f32 0.0, %v138
    %140 = vmatmul.bf16.gmra.mxu0 %v103
    %v141 = vpop.f32.mrf.mxu0
    %v142 = vadd.f32 0.0, %v141
    %v143 = vpop.f32.mrf.mxu0
    %v144 = vadd.f32 0.0, %v143
    %145 = vmatmul.bf16.gmra.mxu0 %v106
    %v146 = vpop.f32.mrf.mxu0
    %v147 = vadd.f32 0.0, %v146
    %v148 = vpop.f32.mrf.mxu0
    %v149 = vadd.f32 0.0, %v148
    %150 = vmatmul.bf16.gmra.mxu0 %v109
    %v151 = vpop.f32.mrf.mxu0
    %v152 = vadd.f32 0.0, %v151
    %v153 = vpop.f32.mrf.mxu0
    %v154 = vadd.f32 0.0, %v153
    %155 = vmatmul.bf16.gmra.mxu0 %v112
    %v156 = vpop.f32.mrf.mxu0
    %v157 = vadd.f32 0.0, %v156
    %v158 = vpop.f32.mrf.mxu0
    %v159 = vadd.f32 0.0, %v158
    %160 = vmatmul.bf16.gmra.mxu0 %v115
    %v161 = vpop.f32.mrf.mxu0
    %v162 = vadd.f32 0.0, %v161
    %v163 = vpop.f32.mrf.mxu0
    %v164 = vadd.f32 0.0, %v163
    %165 = vmatmul.bf16.gmra.mxu0 %v118
    %v166 = vpop.f32.mrf.mxu0
    %v167 = vadd.f32 0.0, %v166
    %v168 = vpop.f32.mrf.mxu0
    %v169 = vadd.f32 0.0, %v168
    %170 = vmatmul.bf16.gmra.mxu0 %v121
    %v171 = vpop.f32.mrf.mxu0
    %v172 = vadd.f32 0.0, %v171
    %v173 = vpop.f32.mrf.mxu0
    %v174 = vadd.f32 0.0, %v173
    %175 = vdwg.mxu0
    %v192 = vunpack.c.l.b16 %v22
    %v193 = vunpack.c.l.b16 %v23
    %v194 = vunpack.c.l.b16 %v24
    %v195 = vunpack.c.l.b16 %v25
    %v196 = vunpack.c.l.b16 %v26
    %v197 = vunpack.c.l.b16 %v27
    %v198 = vunpack.c.l.b16 %v28
    %v199 = vunpack.c.l.b16 %v29
    %v200 = vunpack.c.l.b16 %v30
    %v201 = vunpack.c.l.b16 %v31
    %v202 = vunpack.c.l.b16 %v32
    %v203 = vunpack.c.l.b16 %v33
    %v204 = vunpack.c.l.b16 %v34
    %v205 = vunpack.c.l.b16 %v35
    %v206 = vunpack.c.l.b16 %v36
    %v207 = vunpack.c.l.b16 %v37
    %v208 = vpack.c.b16 %v193, %v192
    %v209 = vpack.c.b16 %v195, %v194
    %v210 = vpack.c.b16 %v197, %v196
    %v211 = vpack.c.b16 %v199, %v198
    %v212 = vpack.c.b16 %v201, %v200
    %v213 = vpack.c.b16 %v203, %v202
    %v214 = vpack.c.b16 %v205, %v204
    %v215 = vpack.c.b16 %v207, %v206
    %v217 = vsel %vm98, %v208, 0
    %v220 = vsel %vm98, %v209, 0
    %v223 = vsel %vm98, %v210, 0
    %v226 = vsel %vm98, %v211, 0
    %v229 = vsel %vm98, %v212, 0
    %v232 = vsel %vm98, %v213, 0
    %v235 = vsel %vm98, %v214, 0
    %v238 = vsel %vm98, %v215, 0
    %v241 = vsel %vm123, %v38, 0
    %243 = vmatpush.bf16.msra.mxu0 0
    %244 = vmatpush.bf16.msra.mxu0 0
    %245 = vmatpush.bf16.msra.mxu0 0
    %246 = vmatpush.bf16.msra.mxu0 0
    %247 = vmatpush.bf16.msra.mxu0 0
    %248 = vmatpush.bf16.msra.mxu0 0
    %249 = vmatpush.bf16.msra.mxu0 0
    %250 = vmatpush.bf16.msra.mxu0 %v241
    %251 = vmatmul.bf16.gmra.mxu0 %v217
    %v252 = vpop.f32.mrf.mxu0
    %v253 = vadd.f32 %v137, %v252
    %v254 = vpop.f32.mrf.mxu0
    %v255 = vadd.f32 %v139, %v254
    %256 = vmatmul.bf16.gmra.mxu0 %v220
    %v257 = vpop.f32.mrf.mxu0
    %v258 = vadd.f32 %v142, %v257
    %v259 = vpop.f32.mrf.mxu0
    %v260 = vadd.f32 %v144, %v259
    %261 = vmatmul.bf16.gmra.mxu0 %v223
    %v262 = vpop.f32.mrf.mxu0
    %v263 = vadd.f32 %v147, %v262
    %v264 = vpop.f32.mrf.mxu0
    %v265 = vadd.f32 %v149, %v264
    %266 = vmatmul.bf16.gmra.mxu0 %v226
    %v267 = vpop.f32.mrf.mxu0
    %v268 = vadd.f32 %v152, %v267
    %v269 = vpop.f32.mrf.mxu0
    %v270 = vadd.f32 %v154, %v269
    %271 = vmatmul.bf16.gmra.mxu0 %v229
    %v272 = vpop.f32.mrf.mxu0
    %v273 = vadd.f32 %v157, %v272
    %v274 = vpop.f32.mrf.mxu0
    %v275 = vadd.f32 %v159, %v274
    %276 = vmatmul.bf16.gmra.mxu0 %v232
    %v277 = vpop.f32.mrf.mxu0
    %v278 = vadd.f32 %v162, %v277
    %v279 = vpop.f32.mrf.mxu0
    %v280 = vadd.f32 %v164, %v279
    %281 = vmatmul.bf16.gmra.mxu0 %v235
    %v282 = vpop.f32.mrf.mxu0
    %v283 = vadd.f32 %v167, %v282
    %v284 = vpop.f32.mrf.mxu0
    %v285 = vadd.f32 %v169, %v284
    %286 = vmatmul.bf16.gmra.mxu0 %v238
    %v287 = vpop.f32.mrf.mxu0
    %v288 = vadd.f32 %v172, %v287
    %v289 = vpop.f32.mrf.mxu0
    %v290 = vadd.f32 %v174, %v289
    %291 = vdwg.mxu0
    %s292 = scalar_lea.vmem %s0, 128
    %v293 = vld [vmem:[%s292] sm:$0xf]
    %v294 = vld [vmem:[%s292 + $0x4] sm:$0xf]
    %v295 = vld [vmem:[%s292 + $0x8] sm:$0xf]
    %v296 = vld [vmem:[%s292 + $0xc] sm:$0xf]
    %v297 = vld [vmem:[%s292 + $0x10] sm:$0xf]
    %v298 = vld [vmem:[%s292 + $0x14] sm:$0xf]
    %v299 = vld [vmem:[%s292 + $0x18] sm:$0xf]
    %v300 = vld [vmem:[%s292 + $0x1c] sm:$0xf]
    %v301 = vld [vmem:[%s292 + $0x20] sm:$0xf]
    %v302 = vld [vmem:[%s292 + $0x24] sm:$0xf]
    %v303 = vld [vmem:[%s292 + $0x28] sm:$0xf]
    %v304 = vld [vmem:[%s292 + $0x2c] sm:$0xf]
    %v305 = vld [vmem:[%s292 + $0x30] sm:$0xf]
    %v306 = vld [vmem:[%s292 + $0x34] sm:$0xf]
    %v307 = vld [vmem:[%s292 + $0x38] sm:$0xf]
    %v308 = vld [vmem:[%s292 + $0x3c] sm:$0xf]
    %s309 = scalar_lea.vmem %s1, 4
    %v310 = vld [vmem:[%s309] sm:$0x3]
    %v327 = vunpack.c.l.b16 %v293
    %v328 = vunpack.c.l.b16 %v294
    %v329 = vunpack.c.l.b16 %v295
    %v330 = vunpack.c.l.b16 %v296
    %v331 = vunpack.c.l.b16 %v297
    %v332 = vunpack.c.l.b16 %v298
    %v333 = vunpack.c.l.b16 %v299
    %v334 = vunpack.c.l.b16 %v300
    %v335 = vunpack.c.l.b16 %v301
    %v336 = vunpack.c.l.b16 %v302
    %v337 = vunpack.c.l.b16 %v303
    %v338 = vunpack.c.l.b16 %v304
    %v339 = vunpack.c.l.b16 %v305
    %v340 = vunpack.c.l.b16 %v306
    %v341 = vunpack.c.l.b16 %v307
    %v342 = vunpack.c.l.b16 %v308
    %v343 = vpack.c.b16 %v328, %v327
    %v344 = vpack.c.b16 %v330, %v329
    %v345 = vpack.c.b16 %v332, %v331
    %v346 = vpack.c.b16 %v334, %v333
    %v347 = vpack.c.b16 %v336, %v335
    %v348 = vpack.c.b16 %v338, %v337
    %v349 = vpack.c.b16 %v340, %v339
    %v350 = vpack.c.b16 %v342, %v341
    %v352 = vsel %vm98, %v343, 0
    %v355 = vsel %vm98, %v344, 0
    %v358 = vsel %vm98, %v345, 0
    %v361 = vsel %vm98, %v346, 0
    %v364 = vsel %vm98, %v347, 0
    %v367 = vsel %vm98, %v348, 0
    %v370 = vsel %vm98, %v349, 0
    %v373 = vsel %vm98, %v350, 0
    %v376 = vsel %vm123, %v310, 0
    %378 = vmatpush.bf16.msra.mxu0 0
    %379 = vmatpush.bf16.msra.mxu0 0
    %380 = vmatpush.bf16.msra.mxu0 0
    %381 = vmatpush.bf16.msra.mxu0 0
    %382 = vmatpush.bf16.msra.mxu0 0
    %383 = vmatpush.bf16.msra.mxu0 0
    %384 = vmatpush.bf16.msra.mxu0 0
    %385 = vmatpush.bf16.msra.mxu0 %v376
    %386 = vmatmul.bf16.gmra.mxu0 %v352
    %v387 = vpop.f32.mrf.mxu0
    %v388 = vadd.f32 0.0, %v387
    %v389 = vpop.f32.mrf.mxu0
    %v390 = vadd.f32 0.0, %v389
    %391 = vmatmul.bf16.gmra.mxu0 %v355
    %v392 = vpop.f32.mrf.mxu0
    %v393 = vadd.f32 0.0, %v392
    %v394 = vpop.f32.mrf.mxu0
    %v395 = vadd.f32 0.0, %v394
    %396 = vmatmul.bf16.gmra.mxu0 %v358
    %v397 = vpop.f32.mrf.mxu0
    %v398 = vadd.f32 0.0, %v397
    %v399 = vpop.f32.mrf.mxu0
    %v400 = vadd.f32 0.0, %v399
    %401 = vmatmul.bf16.gmra.mxu0 %v361
    %v402 = vpop.f32.mrf.mxu0
    %v403 = vadd.f32 0.0, %v402
    %v404 = vpop.f32.mrf.mxu0
    %v405 = vadd.f32 0.0, %v404
    %406 = vmatmul.bf16.gmra.mxu0 %v364
    %v407 = vpop.f32.mrf.mxu0
    %v408 = vadd.f32 0.0, %v407
    %v409 = vpop.f32.mrf.mxu0
    %v410 = vadd.f32 0.0, %v409
    %411 = vmatmul.bf16.gmra.mxu0 %v367
    %v412 = vpop.f32.mrf.mxu0
    %v413 = vadd.f32 0.0, %v412
    %v414 = vpop.f32.mrf.mxu0
    %v415 = vadd.f32 0.0, %v414
    %416 = vmatmul.bf16.gmra.mxu0 %v370
    %v417 = vpop.f32.mrf.mxu0
    %v418 = vadd.f32 0.0, %v417
    %v419 = vpop.f32.mrf.mxu0
    %v420 = vadd.f32 0.0, %v419
    %421 = vmatmul.bf16.gmra.mxu0 %v373
    %v422 = vpop.f32.mrf.mxu0
    %v423 = vadd.f32 0.0, %v422
    %v424 = vpop.f32.mrf.mxu0
    %v425 = vadd.f32 0.0, %v424
    %426 = vdwg.mxu0
    %v427 = vadd.f32 %v253, %v388
    %v428 = vadd.f32 %v255, %v390
    %v429 = vadd.f32 %v258, %v393
    %v430 = vadd.f32 %v260, %v395
    %v431 = vadd.f32 %v263, %v398
    %v432 = vadd.f32 %v265, %v400
    %v433 = vadd.f32 %v268, %v403
    %v434 = vadd.f32 %v270, %v405
    %v435 = vadd.f32 %v273, %v408
    %v436 = vadd.f32 %v275, %v410
    %v437 = vadd.f32 %v278, %v413
    %v438 = vadd.f32 %v280, %v415
    %v439 = vadd.f32 %v283, %v418
    %v440 = vadd.f32 %v285, %v420
    %v441 = vadd.f32 %v288, %v423
    %v442 = vadd.f32 %v290, %v425
    %s443 = scalar_lea.vmem %s0, 256
    %v444 = vld [vmem:[%s443] sm:$0xf]
    %v445 = vld [vmem:[%s443 + $0x4] sm:$0xf]
    %v446 = vld [vmem:[%s443 + $0x8] sm:$0xf]
    %v447 = vld [vmem:[%s443 + $0xc] sm:$0xf]
    %v448 = vld [vmem:[%s443 + $0x10] sm:$0xf]
    %v449 = vld [vmem:[%s443 + $0x14] sm:$0xf]
    %v450 = vld [vmem:[%s443 + $0x18] sm:$0xf]
    %v451 = vld [vmem:[%s443 + $0x1c] sm:$0xf]
    %v452 = vld [vmem:[%s443 + $0x20] sm:$0xf]
    %v453 = vld [vmem:[%s443 + $0x24] sm:$0xf]
    %v454 = vld [vmem:[%s443 + $0x28] sm:$0xf]
    %v455 = vld [vmem:[%s443 + $0x2c] sm:$0xf]
    %v456 = vld [vmem:[%s443 + $0x30] sm:$0xf]
    %v457 = vld [vmem:[%s443 + $0x34] sm:$0xf]
    %v458 = vld [vmem:[%s443 + $0x38] sm:$0xf]
    %v459 = vld [vmem:[%s443 + $0x3c] sm:$0xf]
    %s460 = scalar_lea.vmem %s1, 6
    %v461 = vld [vmem:[%s460] sm:$0x3]
    %v478 = vunpack.c.l.b16 %v444
    %v479 = vunpack.c.l.b16 %v445
    %v480 = vunpack.c.l.b16 %v446
    %v481 = vunpack.c.l.b16 %v447
    %v482 = vunpack.c.l.b16 %v448
    %v483 = vunpack.c.l.b16 %v449
    %v484 = vunpack.c.l.b16 %v450
    %v485 = vunpack.c.l.b16 %v451
    %v486 = vunpack.c.l.b16 %v452
    %v487 = vunpack.c.l.b16 %v453
    %v488 = vunpack.c.l.b16 %v454
    %v489 = vunpack.c.l.b16 %v455
    %v490 = vunpack.c.l.b16 %v456
    %v491 = vunpack.c.l.b16 %v457
    %v492 = vunpack.c.l.b16 %v458
    %v493 = vunpack.c.l.b16 %v459
    %v494 = vpack.c.b16 %v479, %v478
    %v495 = vpack.c.b16 %v481, %v480
    %v496 = vpack.c.b16 %v483, %v482
    %v497 = vpack.c.b16 %v485, %v484
    %v498 = vpack.c.b16 %v487, %v486
    %v499 = vpack.c.b16 %v489, %v488
    %v500 = vpack.c.b16 %v491, %v490
    %v501 = vpack.c.b16 %v493, %v492
    %v503 = vsel %vm98, %v494, 0
    %v506 = vsel %vm98, %v495, 0
    %v509 = vsel %vm98, %v496, 0
    %v512 = vsel %vm98, %v497, 0
    %v515 = vsel %vm98, %v498, 0
    %v518 = vsel %vm98, %v499, 0
    %v521 = vsel %vm98, %v500, 0
    %v524 = vsel %vm98, %v501, 0
    %v527 = vsel %vm123, %v461, 0
    %529 = vmatpush.bf16.msra.mxu0 0
    %530 = vmatpush.bf16.msra.mxu0 0
    %531 = vmatpush.bf16.msra.mxu0 0
    %532 = vmatpush.bf16.msra.mxu0 0
    %533 = vmatpush.bf16.msra.mxu0 0
    %534 = vmatpush.bf16.msra.mxu0 0
    %535 = vmatpush.bf16.msra.mxu0 0
    %536 = vmatpush.bf16.msra.mxu0 %v527
    %537 = vmatmul.bf16.gmra.mxu0 %v503
    %v538 = vpop.f32.mrf.mxu0
    %v539 = vadd.f32 0.0, %v538
    %v540 = vpop.f32.mrf.mxu0
    %v541 = vadd.f32 0.0, %v540
    %542 = vmatmul.bf16.gmra.mxu0 %v506
    %v543 = vpop.f32.mrf.mxu0
    %v544 = vadd.f32 0.0, %v543
    %v545 = vpop.f32.mrf.mxu0
    %v546 = vadd.f32 0.0, %v545
    %547 = vmatmul.bf16.gmra.mxu0 %v509
    %v548 = vpop.f32.mrf.mxu0
    %v549 = vadd.f32 0.0, %v548
    %v550 = vpop.f32.mrf.mxu0
    %v551 = vadd.f32 0.0, %v550
    %552 = vmatmul.bf16.gmra.mxu0 %v512
    %v553 = vpop.f32.mrf.mxu0
    %v554 = vadd.f32 0.0, %v553
    %v555 = vpop.f32.mrf.mxu0
    %v556 = vadd.f32 0.0, %v555
    %557 = vmatmul.bf16.gmra.mxu0 %v515
    %v558 = vpop.f32.mrf.mxu0
    %v559 = vadd.f32 0.0, %v558
    %v560 = vpop.f32.mrf.mxu0
    %v561 = vadd.f32 0.0, %v560
    %562 = vmatmul.bf16.gmra.mxu0 %v518
    %v563 = vpop.f32.mrf.mxu0
    %v564 = vadd.f32 0.0, %v563
    %v565 = vpop.f32.mrf.mxu0
    %v566 = vadd.f32 0.0, %v565
    %567 = vmatmul.bf16.gmra.mxu0 %v521
    %v568 = vpop.f32.mrf.mxu0
    %v569 = vadd.f32 0.0, %v568
    %v570 = vpop.f32.mrf.mxu0
    %v571 = vadd.f32 0.0, %v570
    %572 = vmatmul.bf16.gmra.mxu0 %v524
    %v573 = vpop.f32.mrf.mxu0
    %v574 = vadd.f32 0.0, %v573
    %v575 = vpop.f32.mrf.mxu0
    %v576 = vadd.f32 0.0, %v575
    %577 = vdwg.mxu0
    %v578 = vadd.f32 %v427, %v539
    %v579 = vadd.f32 %v428, %v541
    %v580 = vadd.f32 %v429, %v544
    %v581 = vadd.f32 %v430, %v546
    %v582 = vadd.f32 %v431, %v549
    %v583 = vadd.f32 %v432, %v551
    %v584 = vadd.f32 %v433, %v554
    %v585 = vadd.f32 %v434, %v556
    %v586 = vadd.f32 %v435, %v559
    %v587 = vadd.f32 %v436, %v561
    %v588 = vadd.f32 %v437, %v564
    %v589 = vadd.f32 %v438, %v566
    %v590 = vadd.f32 %v439, %v569
    %v591 = vadd.f32 %v440, %v571
    %v592 = vadd.f32 %v441, %v574
    %v593 = vadd.f32 %v442, %v576
    %s594 = scalar_lea.vmem %s0, 320
    %v595 = vld [vmem:[%s594] sm:$0xf]
    %v596 = vld [vmem:[%s594 + $0x4] sm:$0xf]
    %v597 = vld [vmem:[%s594 + $0x8] sm:$0xf]
    %v598 = vld [vmem:[%s594 + $0xc] sm:$0xf]
    %v599 = vld [vmem:[%s594 + $0x10] sm:$0xf]
    %v600 = vld [vmem:[%s594 + $0x14] sm:$0xf]
    %v601 = vld [vmem:[%s594 + $0x18] sm:$0xf]
    %v602 = vld [vmem:[%s594 + $0x1c] sm:$0xf]
    %v603 = vld [vmem:[%s594 + $0x20] sm:$0xf]
    %v604 = vld [vmem:[%s594 + $0x24] sm:$0xf]
    %v605 = vld [vmem:[%s594 + $0x28] sm:$0xf]
    %v606 = vld [vmem:[%s594 + $0x2c] sm:$0xf]
    %v607 = vld [vmem:[%s594 + $0x30] sm:$0xf]
    %v608 = vld [vmem:[%s594 + $0x34] sm:$0xf]
    %v609 = vld [vmem:[%s594 + $0x38] sm:$0xf]
    %v610 = vld [vmem:[%s594 + $0x3c] sm:$0xf]
    %s611 = scalar_lea.vmem %s1, 8
    %v612 = vld [vmem:[%s611] sm:$0x3]
    %v629 = vunpack.c.l.b16 %v595
    %v630 = vunpack.c.l.b16 %v596
    %v631 = vunpack.c.l.b16 %v597
    %v632 = vunpack.c.l.b16 %v598
    %v633 = vunpack.c.l.b16 %v599
    %v634 = vunpack.c.l.b16 %v600
    %v635 = vunpack.c.l.b16 %v601
    %v636 = vunpack.c.l.b16 %v602
    %v637 = vunpack.c.l.b16 %v603
    %v638 = vunpack.c.l.b16 %v604
    %v639 = vunpack.c.l.b16 %v605
    %v640 = vunpack.c.l.b16 %v606
    %v641 = vunpack.c.l.b16 %v607
    %v642 = vunpack.c.l.b16 %v608
    %v643 = vunpack.c.l.b16 %v609
    %v644 = vunpack.c.l.b16 %v610
    %v645 = vpack.c.b16 %v630, %v629
    %v646 = vpack.c.b16 %v632, %v631
    %v647 = vpack.c.b16 %v634, %v633
    %v648 = vpack.c.b16 %v636, %v635
    %v649 = vpack.c.b16 %v638, %v637
    %v650 = vpack.c.b16 %v640, %v639
    %v651 = vpack.c.b16 %v642, %v641
    %v652 = vpack.c.b16 %v644, %v643
    %v654 = vsel %vm98, %v645, 0
    %v657 = vsel %vm98, %v646, 0
    %v660 = vsel %vm98, %v647, 0
    %v663 = vsel %vm98, %v648, 0
    %v666 = vsel %vm98, %v649, 0
    %v669 = vsel %vm98, %v650, 0
    %v672 = vsel %vm98, %v651, 0
    %v675 = vsel %vm98, %v652, 0
    %v678 = vsel %vm123, %v612, 0
    %680 = vmatpush.bf16.msra.mxu0 0
    %681 = vmatpush.bf16.msra.mxu0 0
    %682 = vmatpush.bf16.msra.mxu0 0
    %683 = vmatpush.bf16.msra.mxu0 0
    %684 = vmatpush.bf16.msra.mxu0 0
    %685 = vmatpush.bf16.msra.mxu0 0
    %686 = vmatpush.bf16.msra.mxu0 0
    %687 = vmatpush.bf16.msra.mxu0 %v678
    %688 = vmatmul.bf16.gmra.mxu0 %v654
    %v689 = vpop.f32.mrf.mxu0
    %v690 = vadd.f32 0.0, %v689
    %v691 = vpop.f32.mrf.mxu0
    %v692 = vadd.f32 0.0, %v691
    %693 = vmatmul.bf16.gmra.mxu0 %v657
    %v694 = vpop.f32.mrf.mxu0
    %v695 = vadd.f32 0.0, %v694
    %v696 = vpop.f32.mrf.mxu0
    %v697 = vadd.f32 0.0, %v696
    %698 = vmatmul.bf16.gmra.mxu0 %v660
    %v699 = vpop.f32.mrf.mxu0
    %v700 = vadd.f32 0.0, %v699
    %v701 = vpop.f32.mrf.mxu0
    %v702 = vadd.f32 0.0, %v701
    %703 = vmatmul.bf16.gmra.mxu0 %v663
    %v704 = vpop.f32.mrf.mxu0
    %v705 = vadd.f32 0.0, %v704
    %v706 = vpop.f32.mrf.mxu0
    %v707 = vadd.f32 0.0, %v706
    %708 = vmatmul.bf16.gmra.mxu0 %v666
    %v709 = vpop.f32.mrf.mxu0
    %v710 = vadd.f32 0.0, %v709
    %v711 = vpop.f32.mrf.mxu0
    %v712 = vadd.f32 0.0, %v711
    %713 = vmatmul.bf16.gmra.mxu0 %v669
    %v714 = vpop.f32.mrf.mxu0
    %v715 = vadd.f32 0.0, %v714
    %v716 = vpop.f32.mrf.mxu0
    %v717 = vadd.f32 0.0, %v716
    %718 = vmatmul.bf16.gmra.mxu0 %v672
    %v719 = vpop.f32.mrf.mxu0
    %v720 = vadd.f32 0.0, %v719
    %v721 = vpop.f32.mrf.mxu0
    %v722 = vadd.f32 0.0, %v721
    %723 = vmatmul.bf16.gmra.mxu0 %v675
    %v724 = vpop.f32.mrf.mxu0
    %v725 = vadd.f32 0.0, %v724
    %v726 = vpop.f32.mrf.mxu0
    %v727 = vadd.f32 0.0, %v726
    %728 = vdwg.mxu0
    %v729 = vadd.f32 %v578, %v690
    %v730 = vadd.f32 %v579, %v692
    %v731 = vadd.f32 %v580, %v695
    %v732 = vadd.f32 %v581, %v697
    %v733 = vadd.f32 %v582, %v700
    %v734 = vadd.f32 %v583, %v702
    %v735 = vadd.f32 %v584, %v705
    %v736 = vadd.f32 %v585, %v707
    %v737 = vadd.f32 %v586, %v710
    %v738 = vadd.f32 %v587, %v712
    %v739 = vadd.f32 %v588, %v715
    %v740 = vadd.f32 %v589, %v717
    %v741 = vadd.f32 %v590, %v720
    %v742 = vadd.f32 %v591, %v722
    %v743 = vadd.f32 %v592, %v725
    %v744 = vadd.f32 %v593, %v727
    %s745 = scalar_lea.vmem %s0, 384
    %v746 = vld [vmem:[%s745] sm:$0xf]
    %v747 = vld [vmem:[%s745 + $0x4] sm:$0xf]
    %v748 = vld [vmem:[%s745 + $0x8] sm:$0xf]
    %v749 = vld [vmem:[%s745 + $0xc] sm:$0xf]
    %v750 = vld [vmem:[%s745 + $0x10] sm:$0xf]
    %v751 = vld [vmem:[%s745 + $0x14] sm:$0xf]
    %v752 = vld [vmem:[%s745 + $0x18] sm:$0xf]
    %v753 = vld [vmem:[%s745 + $0x1c] sm:$0xf]
    %v754 = vld [vmem:[%s745 + $0x20] sm:$0xf]
    %v755 = vld [vmem:[%s745 + $0x24] sm:$0xf]
    %v756 = vld [vmem:[%s745 + $0x28] sm:$0xf]
    %v757 = vld [vmem:[%s745 + $0x2c] sm:$0xf]
    %v758 = vld [vmem:[%s745 + $0x30] sm:$0xf]
    %v759 = vld [vmem:[%s745 + $0x34] sm:$0xf]
    %v760 = vld [vmem:[%s745 + $0x38] sm:$0xf]
    %v761 = vld [vmem:[%s745 + $0x3c] sm:$0xf]
    %s762 = scalar_lea.vmem %s1, 10
    %v763 = vld [vmem:[%s762] sm:$0x3]
    %v780 = vunpack.c.l.b16 %v746
    %v781 = vunpack.c.l.b16 %v747
    %v782 = vunpack.c.l.b16 %v748
    %v783 = vunpack.c.l.b16 %v749
    %v784 = vunpack.c.l.b16 %v750
    %v785 = vunpack.c.l.b16 %v751
    %v786 = vunpack.c.l.b16 %v752
    %v787 = vunpack.c.l.b16 %v753
    %v788 = vunpack.c.l.b16 %v754
    %v789 = vunpack.c.l.b16 %v755
    %v790 = vunpack.c.l.b16 %v756
    %v791 = vunpack.c.l.b16 %v757
    %v792 = vunpack.c.l.b16 %v758
    %v793 = vunpack.c.l.b16 %v759
    %v794 = vunpack.c.l.b16 %v760
    %v795 = vunpack.c.l.b16 %v761
    %v796 = vpack.c.b16 %v781, %v780
    %v797 = vpack.c.b16 %v783, %v782
    %v798 = vpack.c.b16 %v785, %v784
    %v799 = vpack.c.b16 %v787, %v786
    %v800 = vpack.c.b16 %v789, %v788
    %v801 = vpack.c.b16 %v791, %v790
    %v802 = vpack.c.b16 %v793, %v792
    %v803 = vpack.c.b16 %v795, %v794
    %v805 = vsel %vm98, %v796, 0
    %v808 = vsel %vm98, %v797, 0
    %v811 = vsel %vm98, %v798, 0
    %v814 = vsel %vm98, %v799, 0
    %v817 = vsel %vm98, %v800, 0
    %v820 = vsel %vm98, %v801, 0
    %v823 = vsel %vm98, %v802, 0
    %v826 = vsel %vm98, %v803, 0
    %v829 = vsel %vm123, %v763, 0
    %831 = vmatpush.bf16.msra.mxu0 0
    %832 = vmatpush.bf16.msra.mxu0 0
    %833 = vmatpush.bf16.msra.mxu0 0
    %834 = vmatpush.bf16.msra.mxu0 0
    %835 = vmatpush.bf16.msra.mxu0 0
    %836 = vmatpush.bf16.msra.mxu0 0
    %837 = vmatpush.bf16.msra.mxu0 0
    %838 = vmatpush.bf16.msra.mxu0 %v829
    %839 = vmatmul.bf16.gmra.mxu0 %v805
    %v840 = vpop.f32.mrf.mxu0
    %v841 = vadd.f32 0.0, %v840
    %v842 = vpop.f32.mrf.mxu0
    %v843 = vadd.f32 0.0, %v842
    %844 = vmatmul.bf16.gmra.mxu0 %v808
    %v845 = vpop.f32.mrf.mxu0
    %v846 = vadd.f32 0.0, %v845
    %v847 = vpop.f32.mrf.mxu0
    %v848 = vadd.f32 0.0, %v847
    %849 = vmatmul.bf16.gmra.mxu0 %v811
    %v850 = vpop.f32.mrf.mxu0
    %v851 = vadd.f32 0.0, %v850
    %v852 = vpop.f32.mrf.mxu0
    %v853 = vadd.f32 0.0, %v852
    %854 = vmatmul.bf16.gmra.mxu0 %v814
    %v855 = vpop.f32.mrf.mxu0
    %v856 = vadd.f32 0.0, %v855
    %v857 = vpop.f32.mrf.mxu0
    %v858 = vadd.f32 0.0, %v857
    %859 = vmatmul.bf16.gmra.mxu0 %v817
    %v860 = vpop.f32.mrf.mxu0
    %v861 = vadd.f32 0.0, %v860
    %v862 = vpop.f32.mrf.mxu0
    %v863 = vadd.f32 0.0, %v862
    %864 = vmatmul.bf16.gmra.mxu0 %v820
    %v865 = vpop.f32.mrf.mxu0
    %v866 = vadd.f32 0.0, %v865
    %v867 = vpop.f32.mrf.mxu0
    %v868 = vadd.f32 0.0, %v867
    %869 = vmatmul.bf16.gmra.mxu0 %v823
    %v870 = vpop.f32.mrf.mxu0
    %v871 = vadd.f32 0.0, %v870
    %v872 = vpop.f32.mrf.mxu0
    %v873 = vadd.f32 0.0, %v872
    %874 = vmatmul.bf16.gmra.mxu0 %v826
    %v875 = vpop.f32.mrf.mxu0
    %v876 = vadd.f32 0.0, %v875
    %v877 = vpop.f32.mrf.mxu0
    %v878 = vadd.f32 0.0, %v877
    %879 = vdwg.mxu0
    %v880 = vadd.f32 %v729, %v841
    %v881 = vadd.f32 %v730, %v843
    %v882 = vadd.f32 %v731, %v846
    %v883 = vadd.f32 %v732, %v848
    %v884 = vadd.f32 %v733, %v851
    %v885 = vadd.f32 %v734, %v853
    %v886 = vadd.f32 %v735, %v856
    %v887 = vadd.f32 %v736, %v858
    %v888 = vadd.f32 %v737, %v861
    %v889 = vadd.f32 %v738, %v863
    %v890 = vadd.f32 %v739, %v866
    %v891 = vadd.f32 %v740, %v868
    %v892 = vadd.f32 %v741, %v871
    %v893 = vadd.f32 %v742, %v873
    %v894 = vadd.f32 %v743, %v876
    %v895 = vadd.f32 %v744, %v878
    %s896 = scalar_lea.vmem %s0, 512
    %v897 = vld [vmem:[%s896] sm:$0xf]
    %v898 = vld [vmem:[%s896 + $0x4] sm:$0xf]
    %v899 = vld [vmem:[%s896 + $0x8] sm:$0xf]
    %v900 = vld [vmem:[%s896 + $0xc] sm:$0xf]
    %v901 = vld [vmem:[%s896 + $0x10] sm:$0xf]
    %v902 = vld [vmem:[%s896 + $0x14] sm:$0xf]
    %v903 = vld [vmem:[%s896 + $0x18] sm:$0xf]
    %v904 = vld [vmem:[%s896 + $0x1c] sm:$0xf]
    %v905 = vld [vmem:[%s896 + $0x20] sm:$0xf]
    %v906 = vld [vmem:[%s896 + $0x24] sm:$0xf]
    %v907 = vld [vmem:[%s896 + $0x28] sm:$0xf]
    %v908 = vld [vmem:[%s896 + $0x2c] sm:$0xf]
    %v909 = vld [vmem:[%s896 + $0x30] sm:$0xf]
    %v910 = vld [vmem:[%s896 + $0x34] sm:$0xf]
    %v911 = vld [vmem:[%s896 + $0x38] sm:$0xf]
    %v912 = vld [vmem:[%s896 + $0x3c] sm:$0xf]
    %s913 = scalar_lea.vmem %s1, 12
    %v914 = vld [vmem:[%s913] sm:$0x3]
    %v931 = vunpack.c.l.b16 %v897
    %v932 = vunpack.c.l.b16 %v898
    %v933 = vunpack.c.l.b16 %v899
    %v934 = vunpack.c.l.b16 %v900
    %v935 = vunpack.c.l.b16 %v901
    %v936 = vunpack.c.l.b16 %v902
    %v937 = vunpack.c.l.b16 %v903
    %v938 = vunpack.c.l.b16 %v904
    %v939 = vunpack.c.l.b16 %v905
    %v940 = vunpack.c.l.b16 %v906
    %v941 = vunpack.c.l.b16 %v907
    %v942 = vunpack.c.l.b16 %v908
    %v943 = vunpack.c.l.b16 %v909
    %v944 = vunpack.c.l.b16 %v910
    %v945 = vunpack.c.l.b16 %v911
    %v946 = vunpack.c.l.b16 %v912
    %v947 = vpack.c.b16 %v932, %v931
    %v948 = vpack.c.b16 %v934, %v933
    %v949 = vpack.c.b16 %v936, %v935
    %v950 = vpack.c.b16 %v938, %v937
    %v951 = vpack.c.b16 %v940, %v939
    %v952 = vpack.c.b16 %v942, %v941
    %v953 = vpack.c.b16 %v944, %v943
    %v954 = vpack.c.b16 %v946, %v945
    %v956 = vsel %vm98, %v947, 0
    %v959 = vsel %vm98, %v948, 0
    %v962 = vsel %vm98, %v949, 0
    %v965 = vsel %vm98, %v950, 0
    %v968 = vsel %vm98, %v951, 0
    %v971 = vsel %vm98, %v952, 0
    %v974 = vsel %vm98, %v953, 0
    %v977 = vsel %vm98, %v954, 0
    %v980 = vsel %vm123, %v914, 0
    %982 = vmatpush.bf16.msra.mxu0 0
    %983 = vmatpush.bf16.msra.mxu0 0
    %984 = vmatpush.bf16.msra.mxu0 0
    %985 = vmatpush.bf16.msra.mxu0 0
    %986 = vmatpush.bf16.msra.mxu0 0
    %987 = vmatpush.bf16.msra.mxu0 0
    %988 = vmatpush.bf16.msra.mxu0 0
    %989 = vmatpush.bf16.msra.mxu0 %v980
    %990 = vmatmul.bf16.gmra.mxu0 %v956
    %v991 = vpop.f32.mrf.mxu0
    %v992 = vadd.f32 0.0, %v991
    %v993 = vpop.f32.mrf.mxu0
    %v994 = vadd.f32 0.0, %v993
    %995 = vmatmul.bf16.gmra.mxu0 %v959
    %v996 = vpop.f32.mrf.mxu0
    %v997 = vadd.f32 0.0, %v996
    %v998 = vpop.f32.mrf.mxu0
    %v999 = vadd.f32 0.0, %v998
    %1000 = vmatmul.bf16.gmra.mxu0 %v962
    %v1001 = vpop.f32.mrf.mxu0
    %v1002 = vadd.f32 0.0, %v1001
    %v1003 = vpop.f32.mrf.mxu0
    %v1004 = vadd.f32 0.0, %v1003
    %1005 = vmatmul.bf16.gmra.mxu0 %v965
    %v1006 = vpop.f32.mrf.mxu0
    %v1007 = vadd.f32 0.0, %v1006
    %v1008 = vpop.f32.mrf.mxu0
    %v1009 = vadd.f32 0.0, %v1008
    %1010 = vmatmul.bf16.gmra.mxu0 %v968
    %v1011 = vpop.f32.mrf.mxu0
    %v1012 = vadd.f32 0.0, %v1011
    %v1013 = vpop.f32.mrf.mxu0
    %v1014 = vadd.f32 0.0, %v1013
    %1015 = vmatmul.bf16.gmra.mxu0 %v971
    %v1016 = vpop.f32.mrf.mxu0
    %v1017 = vadd.f32 0.0, %v1016
    %v1018 = vpop.f32.mrf.mxu0
    %v1019 = vadd.f32 0.0, %v1018
    %1020 = vmatmul.bf16.gmra.mxu0 %v974
    %v1021 = vpop.f32.mrf.mxu0
    %v1022 = vadd.f32 0.0, %v1021
    %v1023 = vpop.f32.mrf.mxu0
    %v1024 = vadd.f32 0.0, %v1023
    %1025 = vmatmul.bf16.gmra.mxu0 %v977
    %v1026 = vpop.f32.mrf.mxu0
    %v1027 = vadd.f32 0.0, %v1026
    %v1028 = vpop.f32.mrf.mxu0
    %v1029 = vadd.f32 0.0, %v1028
    %1030 = vdwg.mxu0
    %v1031 = vadd.f32 %v880, %v992
    %v1032 = vadd.f32 %v881, %v994
    %v1033 = vadd.f32 %v882, %v997
    %v1034 = vadd.f32 %v883, %v999
    %v1035 = vadd.f32 %v884, %v1002
    %v1036 = vadd.f32 %v885, %v1004
    %v1037 = vadd.f32 %v886, %v1007
    %v1038 = vadd.f32 %v887, %v1009
    %v1039 = vadd.f32 %v888, %v1012
    %v1040 = vadd.f32 %v889, %v1014
    %v1041 = vadd.f32 %v890, %v1017
    %v1042 = vadd.f32 %v891, %v1019
    %v1043 = vadd.f32 %v892, %v1022
    %v1044 = vadd.f32 %v893, %v1024
    %v1045 = vadd.f32 %v894, %v1027
    %v1046 = vadd.f32 %v895, %v1029
    %s1047 = scalar_lea.vmem %s0, 576
    %v1048 = vld [vmem:[%s1047] sm:$0xf]
    %v1049 = vld [vmem:[%s1047 + $0x4] sm:$0xf]
    %v1050 = vld [vmem:[%s1047 + $0x8] sm:$0xf]
    %v1051 = vld [vmem:[%s1047 + $0xc] sm:$0xf]
    %v1052 = vld [vmem:[%s1047 + $0x10] sm:$0xf]
    %v1053 = vld [vmem:[%s1047 + $0x14] sm:$0xf]
    %v1054 = vld [vmem:[%s1047 + $0x18] sm:$0xf]
    %v1055 = vld [vmem:[%s1047 + $0x1c] sm:$0xf]
    %v1056 = vld [vmem:[%s1047 + $0x20] sm:$0xf]
    %v1057 = vld [vmem:[%s1047 + $0x24] sm:$0xf]
    %v1058 = vld [vmem:[%s1047 + $0x28] sm:$0xf]
    %v1059 = vld [vmem:[%s1047 + $0x2c] sm:$0xf]
    %v1060 = vld [vmem:[%s1047 + $0x30] sm:$0xf]
    %v1061 = vld [vmem:[%s1047 + $0x34] sm:$0xf]
    %v1062 = vld [vmem:[%s1047 + $0x38] sm:$0xf]
    %v1063 = vld [vmem:[%s1047 + $0x3c] sm:$0xf]
    %s1064 = scalar_lea.vmem %s1, 14
    %v1065 = vld [vmem:[%s1064] sm:$0x3]
    %v1082 = vunpack.c.l.b16 %v1048
    %v1083 = vunpack.c.l.b16 %v1049
    %v1084 = vunpack.c.l.b16 %v1050
    %v1085 = vunpack.c.l.b16 %v1051
    %v1086 = vunpack.c.l.b16 %v1052
    %v1087 = vunpack.c.l.b16 %v1053
    %v1088 = vunpack.c.l.b16 %v1054
    %v1089 = vunpack.c.l.b16 %v1055
    %v1090 = vunpack.c.l.b16 %v1056
    %v1091 = vunpack.c.l.b16 %v1057
    %v1092 = vunpack.c.l.b16 %v1058
    %v1093 = vunpack.c.l.b16 %v1059
    %v1094 = vunpack.c.l.b16 %v1060
    %v1095 = vunpack.c.l.b16 %v1061
    %v1096 = vunpack.c.l.b16 %v1062
    %v1097 = vunpack.c.l.b16 %v1063
    %v1098 = vpack.c.b16 %v1083, %v1082
    %v1099 = vpack.c.b16 %v1085, %v1084
    %v1100 = vpack.c.b16 %v1087, %v1086
    %v1101 = vpack.c.b16 %v1089, %v1088
    %v1102 = vpack.c.b16 %v1091, %v1090
    %v1103 = vpack.c.b16 %v1093, %v1092
    %v1104 = vpack.c.b16 %v1095, %v1094
    %v1105 = vpack.c.b16 %v1097, %v1096
    %v1107 = vsel %vm98, %v1098, 0
    %v1110 = vsel %vm98, %v1099, 0
    %v1113 = vsel %vm98, %v1100, 0
    %v1116 = vsel %vm98, %v1101, 0
    %v1119 = vsel %vm98, %v1102, 0
    %v1122 = vsel %vm98, %v1103, 0
    %v1125 = vsel %vm98, %v1104, 0
    %v1128 = vsel %vm98, %v1105, 0
    %v1131 = vsel %vm123, %v1065, 0
    %1133 = vmatpush.bf16.msra.mxu0 0
    %1134 = vmatpush.bf16.msra.mxu0 0
    %1135 = vmatpush.bf16.msra.mxu0 0
    %1136 = vmatpush.bf16.msra.mxu0 0
    %1137 = vmatpush.bf16.msra.mxu0 0
    %1138 = vmatpush.bf16.msra.mxu0 0
    %1139 = vmatpush.bf16.msra.mxu0 0
    %1140 = vmatpush.bf16.msra.mxu0 %v1131
    %1141 = vmatmul.bf16.gmra.mxu0 %v1107
    %v1142 = vpop.f32.mrf.mxu0
    %v1143 = vadd.f32 0.0, %v1142
    %v1144 = vpop.f32.mrf.mxu0
    %v1145 = vadd.f32 0.0, %v1144
    %1146 = vmatmul.bf16.gmra.mxu0 %v1110
    %v1147 = vpop.f32.mrf.mxu0
    %v1148 = vadd.f32 0.0, %v1147
    %v1149 = vpop.f32.mrf.mxu0
    %v1150 = vadd.f32 0.0, %v1149
    %1151 = vmatmul.bf16.gmra.mxu0 %v1113
    %v1152 = vpop.f32.mrf.mxu0
    %v1153 = vadd.f32 0.0, %v1152
    %v1154 = vpop.f32.mrf.mxu0
    %v1155 = vadd.f32 0.0, %v1154
    %1156 = vmatmul.bf16.gmra.mxu0 %v1116
    %v1157 = vpop.f32.mrf.mxu0
    %v1158 = vadd.f32 0.0, %v1157
    %v1159 = vpop.f32.mrf.mxu0
    %v1160 = vadd.f32 0.0, %v1159
    %1161 = vmatmul.bf16.gmra.mxu0 %v1119
    %v1162 = vpop.f32.mrf.mxu0
    %v1163 = vadd.f32 0.0, %v1162
    %v1164 = vpop.f32.mrf.mxu0
    %v1165 = vadd.f32 0.0, %v1164
    %1166 = vmatmul.bf16.gmra.mxu0 %v1122
    %v1167 = vpop.f32.mrf.mxu0
    %v1168 = vadd.f32 0.0, %v1167
    %v1169 = vpop.f32.mrf.mxu0
    %v1170 = vadd.f32 0.0, %v1169
    %1171 = vmatmul.bf16.gmra.mxu0 %v1125
    %v1172 = vpop.f32.mrf.mxu0
    %v1173 = vadd.f32 0.0, %v1172
    %v1174 = vpop.f32.mrf.mxu0
    %v1175 = vadd.f32 0.0, %v1174
    %1176 = vmatmul.bf16.gmra.mxu0 %v1128
    %v1177 = vpop.f32.mrf.mxu0
    %v1178 = vadd.f32 0.0, %v1177
    %v1179 = vpop.f32.mrf.mxu0
    %v1180 = vadd.f32 0.0, %v1179
    %1181 = vdwg.mxu0
    %v1182 = vadd.f32 %v1031, %v1143
    %v1183 = vadd.f32 %v1032, %v1145
    %v1184 = vadd.f32 %v1033, %v1148
    %v1185 = vadd.f32 %v1034, %v1150
    %v1186 = vadd.f32 %v1035, %v1153
    %v1187 = vadd.f32 %v1036, %v1155
    %v1188 = vadd.f32 %v1037, %v1158
    %v1189 = vadd.f32 %v1038, %v1160
    %v1190 = vadd.f32 %v1039, %v1163
    %v1191 = vadd.f32 %v1040, %v1165
    %v1192 = vadd.f32 %v1041, %v1168
    %v1193 = vadd.f32 %v1042, %v1170
    %v1194 = vadd.f32 %v1043, %v1173
    %v1195 = vadd.f32 %v1044, %v1175
    %v1196 = vadd.f32 %v1045, %v1178
    %v1197 = vadd.f32 %v1046, %v1180
    %s1198 = scalar_lea.vmem %s0, 640
    %v1199 = vld [vmem:[%s1198] sm:$0xf]
    %v1200 = vld [vmem:[%s1198 + $0x4] sm:$0xf]
    %v1201 = vld [vmem:[%s1198 + $0x8] sm:$0xf]
    %v1202 = vld [vmem:[%s1198 + $0xc] sm:$0xf]
    %v1203 = vld [vmem:[%s1198 + $0x10] sm:$0xf]
    %v1204 = vld [vmem:[%s1198 + $0x14] sm:$0xf]
    %v1205 = vld [vmem:[%s1198 + $0x18] sm:$0xf]
    %v1206 = vld [vmem:[%s1198 + $0x1c] sm:$0xf]
    %v1207 = vld [vmem:[%s1198 + $0x20] sm:$0xf]
    %v1208 = vld [vmem:[%s1198 + $0x24] sm:$0xf]
    %v1209 = vld [vmem:[%s1198 + $0x28] sm:$0xf]
    %v1210 = vld [vmem:[%s1198 + $0x2c] sm:$0xf]
    %v1211 = vld [vmem:[%s1198 + $0x30] sm:$0xf]
    %v1212 = vld [vmem:[%s1198 + $0x34] sm:$0xf]
    %v1213 = vld [vmem:[%s1198 + $0x38] sm:$0xf]
    %v1214 = vld [vmem:[%s1198 + $0x3c] sm:$0xf]
    %s1215 = scalar_lea.vmem %s1, 16
    %v1216 = vld [vmem:[%s1215] sm:$0x3]
    %v1233 = vunpack.c.l.b16 %v1199
    %v1234 = vunpack.c.l.b16 %v1200
    %v1235 = vunpack.c.l.b16 %v1201
    %v1236 = vunpack.c.l.b16 %v1202
    %v1237 = vunpack.c.l.b16 %v1203
    %v1238 = vunpack.c.l.b16 %v1204
    %v1239 = vunpack.c.l.b16 %v1205
    %v1240 = vunpack.c.l.b16 %v1206
    %v1241 = vunpack.c.l.b16 %v1207
    %v1242 = vunpack.c.l.b16 %v1208
    %v1243 = vunpack.c.l.b16 %v1209
    %v1244 = vunpack.c.l.b16 %v1210
    %v1245 = vunpack.c.l.b16 %v1211
    %v1246 = vunpack.c.l.b16 %v1212
    %v1247 = vunpack.c.l.b16 %v1213
    %v1248 = vunpack.c.l.b16 %v1214
    %v1249 = vpack.c.b16 %v1234, %v1233
    %v1250 = vpack.c.b16 %v1236, %v1235
    %v1251 = vpack.c.b16 %v1238, %v1237
    %v1252 = vpack.c.b16 %v1240, %v1239
    %v1253 = vpack.c.b16 %v1242, %v1241
    %v1254 = vpack.c.b16 %v1244, %v1243
    %v1255 = vpack.c.b16 %v1246, %v1245
    %v1256 = vpack.c.b16 %v1248, %v1247
    %v1258 = vsel %vm98, %v1249, 0
    %v1261 = vsel %vm98, %v1250, 0
    %v1264 = vsel %vm98, %v1251, 0
    %v1267 = vsel %vm98, %v1252, 0
    %v1270 = vsel %vm98, %v1253, 0
    %v1273 = vsel %vm98, %v1254, 0
    %v1276 = vsel %vm98, %v1255, 0
    %v1279 = vsel %vm98, %v1256, 0
    %v1282 = vsel %vm123, %v1216, 0
    %1284 = vmatpush.bf16.msra.mxu0 0
    %1285 = vmatpush.bf16.msra.mxu0 0
    %1286 = vmatpush.bf16.msra.mxu0 0
    %1287 = vmatpush.bf16.msra.mxu0 0
    %1288 = vmatpush.bf16.msra.mxu0 0
    %1289 = vmatpush.bf16.msra.mxu0 0
    %1290 = vmatpush.bf16.msra.mxu0 0
    %1291 = vmatpush.bf16.msra.mxu0 %v1282
    %1292 = vmatmul.bf16.gmra.mxu0 %v1258
    %v1293 = vpop.f32.mrf.mxu0
    %v1294 = vadd.f32 0.0, %v1293
    %v1295 = vpop.f32.mrf.mxu0
    %v1296 = vadd.f32 0.0, %v1295
    %1297 = vmatmul.bf16.gmra.mxu0 %v1261
    %v1298 = vpop.f32.mrf.mxu0
    %v1299 = vadd.f32 0.0, %v1298
    %v1300 = vpop.f32.mrf.mxu0
    %v1301 = vadd.f32 0.0, %v1300
    %1302 = vmatmul.bf16.gmra.mxu0 %v1264
    %v1303 = vpop.f32.mrf.mxu0
    %v1304 = vadd.f32 0.0, %v1303
    %v1305 = vpop.f32.mrf.mxu0
    %v1306 = vadd.f32 0.0, %v1305
    %1307 = vmatmul.bf16.gmra.mxu0 %v1267
    %v1308 = vpop.f32.mrf.mxu0
    %v1309 = vadd.f32 0.0, %v1308
    %v1310 = vpop.f32.mrf.mxu0
    %v1311 = vadd.f32 0.0, %v1310
    %1312 = vmatmul.bf16.gmra.mxu0 %v1270
    %v1313 = vpop.f32.mrf.mxu0
    %v1314 = vadd.f32 0.0, %v1313
    %v1315 = vpop.f32.mrf.mxu0
    %v1316 = vadd.f32 0.0, %v1315
    %1317 = vmatmul.bf16.gmra.mxu0 %v1273
    %v1318 = vpop.f32.mrf.mxu0
    %v1319 = vadd.f32 0.0, %v1318
    %v1320 = vpop.f32.mrf.mxu0
    %v1321 = vadd.f32 0.0, %v1320
    %1322 = vmatmul.bf16.gmra.mxu0 %v1276
    %v1323 = vpop.f32.mrf.mxu0
    %v1324 = vadd.f32 0.0, %v1323
    %v1325 = vpop.f32.mrf.mxu0
    %v1326 = vadd.f32 0.0, %v1325
    %1327 = vmatmul.bf16.gmra.mxu0 %v1279
    %v1328 = vpop.f32.mrf.mxu0
    %v1329 = vadd.f32 0.0, %v1328
    %v1330 = vpop.f32.mrf.mxu0
    %v1331 = vadd.f32 0.0, %v1330
    %1332 = vdwg.mxu0
    %v1333 = vadd.f32 %v1182, %v1294
    %v1334 = vadd.f32 %v1183, %v1296
    %v1335 = vadd.f32 %v1184, %v1299
    %v1336 = vadd.f32 %v1185, %v1301
    %v1337 = vadd.f32 %v1186, %v1304
    %v1338 = vadd.f32 %v1187, %v1306
    %v1339 = vadd.f32 %v1188, %v1309
    %v1340 = vadd.f32 %v1189, %v1311
    %v1341 = vadd.f32 %v1190, %v1314
    %v1342 = vadd.f32 %v1191, %v1316
    %v1343 = vadd.f32 %v1192, %v1319
    %v1344 = vadd.f32 %v1193, %v1321
    %v1345 = vadd.f32 %v1194, %v1324
    %v1346 = vadd.f32 %v1195, %v1326
    %v1347 = vadd.f32 %v1196, %v1329
    %v1348 = vadd.f32 %v1197, %v1331
    %1349 = vmatpush.bf16.msra.mxu0 0
    %1350 = vmatpush.bf16.msra.mxu0 0
    %1351 = vmatpush.bf16.msra.mxu0 0
    %1352 = vmatpush.bf16.msra.mxu0 0
    %1353 = vmatpush.bf16.msra.mxu0 0
    %1354 = vmatpush.bf16.msra.mxu0 0
    %1355 = vmatpush.bf16.msra.mxu0 0
    %1356 = vmatpush.bf16.msra.mxu0 %v125
    %1357 = vmatmul.bf16.gmra.mxu0 %v352
    %v1358 = vpop.f32.mrf.mxu0
    %v1359 = vadd.f32 0.0, %v1358
    %v1360 = vpop.f32.mrf.mxu0
    %v1361 = vadd.f32 0.0, %v1360
    %1362 = vmatmul.bf16.gmra.mxu0 %v355
    %v1363 = vpop.f32.mrf.mxu0
    %v1364 = vadd.f32 0.0, %v1363
    %v1365 = vpop.f32.mrf.mxu0
    %v1366 = vadd.f32 0.0, %v1365
    %1367 = vmatmul.bf16.gmra.mxu0 %v358
    %v1368 = vpop.f32.mrf.mxu0
    %v1369 = vadd.f32 0.0, %v1368
    %v1370 = vpop.f32.mrf.mxu0
    %v1371 = vadd.f32 0.0, %v1370
    %1372 = vmatmul.bf16.gmra.mxu0 %v361
    %v1373 = vpop.f32.mrf.mxu0
    %v1374 = vadd.f32 0.0, %v1373
    %v1375 = vpop.f32.mrf.mxu0
    %v1376 = vadd.f32 0.0, %v1375
    %1377 = vmatmul.bf16.gmra.mxu0 %v364
    %v1378 = vpop.f32.mrf.mxu0
    %v1379 = vadd.f32 0.0, %v1378
    %v1380 = vpop.f32.mrf.mxu0
    %v1381 = vadd.f32 0.0, %v1380
    %1382 = vmatmul.bf16.gmra.mxu0 %v367
    %v1383 = vpop.f32.mrf.mxu0
    %v1384 = vadd.f32 0.0, %v1383
    %v1385 = vpop.f32.mrf.mxu0
    %v1386 = vadd.f32 0.0, %v1385
    %1387 = vmatmul.bf16.gmra.mxu0 %v370
    %v1388 = vpop.f32.mrf.mxu0
    %v1389 = vadd.f32 0.0, %v1388
    %v1390 = vpop.f32.mrf.mxu0
    %v1391 = vadd.f32 0.0, %v1390
    %1392 = vmatmul.bf16.gmra.mxu0 %v373
    %v1393 = vpop.f32.mrf.mxu0
    %v1394 = vadd.f32 0.0, %v1393
    %v1395 = vpop.f32.mrf.mxu0
    %v1396 = vadd.f32 0.0, %v1395
    %1397 = vdwg.mxu0
    %1398 = vmatpush.bf16.msra.mxu0 0
    %1399 = vmatpush.bf16.msra.mxu0 0
    %1400 = vmatpush.bf16.msra.mxu0 0
    %1401 = vmatpush.bf16.msra.mxu0 0
    %1402 = vmatpush.bf16.msra.mxu0 0
    %1403 = vmatpush.bf16.msra.mxu0 0
    %1404 = vmatpush.bf16.msra.mxu0 0
    %1405 = vmatpush.bf16.msra.mxu0 %v241
    %1406 = vmatmul.bf16.gmra.mxu0 %v100
    %v1407 = vpop.f32.mrf.mxu0
    %v1408 = vadd.f32 %v1359, %v1407
    %v1409 = vpop.f32.mrf.mxu0
    %v1410 = vadd.f32 %v1361, %v1409
    %1411 = vmatmul.bf16.gmra.mxu0 %v103
    %v1412 = vpop.f32.mrf.mxu0
    %v1413 = vadd.f32 %v1364, %v1412
    %v1414 = vpop.f32.mrf.mxu0
    %v1415 = vadd.f32 %v1366, %v1414
    %1416 = vmatmul.bf16.gmra.mxu0 %v106
    %v1417 = vpop.f32.mrf.mxu0
    %v1418 = vadd.f32 %v1369, %v1417
    %v1419 = vpop.f32.mrf.mxu0
    %v1420 = vadd.f32 %v1371, %v1419
    %1421 = vmatmul.bf16.gmra.mxu0 %v109
    %v1422 = vpop.f32.mrf.mxu0
    %v1423 = vadd.f32 %v1374, %v1422
    %v1424 = vpop.f32.mrf.mxu0
    %v1425 = vadd.f32 %v1376, %v1424
    %1426 = vmatmul.bf16.gmra.mxu0 %v112
    %v1427 = vpop.f32.mrf.mxu0
    %v1428 = vadd.f32 %v1379, %v1427
    %v1429 = vpop.f32.mrf.mxu0
    %v1430 = vadd.f32 %v1381, %v1429
    %1431 = vmatmul.bf16.gmra.mxu0 %v115
    %v1432 = vpop.f32.mrf.mxu0
    %v1433 = vadd.f32 %v1384, %v1432
    %v1434 = vpop.f32.mrf.mxu0
    %v1435 = vadd.f32 %v1386, %v1434
    %1436 = vmatmul.bf16.gmra.mxu0 %v118
    %v1437 = vpop.f32.mrf.mxu0
    %v1438 = vadd.f32 %v1389, %v1437
    %v1439 = vpop.f32.mrf.mxu0
    %v1440 = vadd.f32 %v1391, %v1439
    %1441 = vmatmul.bf16.gmra.mxu0 %v121
    %v1442 = vpop.f32.mrf.mxu0
    %v1443 = vadd.f32 %v1394, %v1442
    %v1444 = vpop.f32.mrf.mxu0
    %v1445 = vadd.f32 %v1396, %v1444
    %1446 = vdwg.mxu0
    %s1447 = scalar_lea.vmem %s0, 192
    %v1448 = vld [vmem:[%s1447] sm:$0xf]
    %v1449 = vld [vmem:[%s1447 + $0x4] sm:$0xf]
    %v1450 = vld [vmem:[%s1447 + $0x8] sm:$0xf]
    %v1451 = vld [vmem:[%s1447 + $0xc] sm:$0xf]
    %v1452 = vld [vmem:[%s1447 + $0x10] sm:$0xf]
    %v1453 = vld [vmem:[%s1447 + $0x14] sm:$0xf]
    %v1454 = vld [vmem:[%s1447 + $0x18] sm:$0xf]
    %v1455 = vld [vmem:[%s1447 + $0x1c] sm:$0xf]
    %v1456 = vld [vmem:[%s1447 + $0x20] sm:$0xf]
    %v1457 = vld [vmem:[%s1447 + $0x24] sm:$0xf]
    %v1458 = vld [vmem:[%s1447 + $0x28] sm:$0xf]
    %v1459 = vld [vmem:[%s1447 + $0x2c] sm:$0xf]
    %v1460 = vld [vmem:[%s1447 + $0x30] sm:$0xf]
    %v1461 = vld [vmem:[%s1447 + $0x34] sm:$0xf]
    %v1462 = vld [vmem:[%s1447 + $0x38] sm:$0xf]
    %v1463 = vld [vmem:[%s1447 + $0x3c] sm:$0xf]
    %v1480 = vunpack.c.l.b16 %v1448
    %v1481 = vunpack.c.l.b16 %v1449
    %v1482 = vunpack.c.l.b16 %v1450
    %v1483 = vunpack.c.l.b16 %v1451
    %v1484 = vunpack.c.l.b16 %v1452
    %v1485 = vunpack.c.l.b16 %v1453
    %v1486 = vunpack.c.l.b16 %v1454
    %v1487 = vunpack.c.l.b16 %v1455
    %v1488 = vunpack.c.l.b16 %v1456
    %v1489 = vunpack.c.l.b16 %v1457
    %v1490 = vunpack.c.l.b16 %v1458
    %v1491 = vunpack.c.l.b16 %v1459
    %v1492 = vunpack.c.l.b16 %v1460
    %v1493 = vunpack.c.l.b16 %v1461
    %v1494 = vunpack.c.l.b16 %v1462
    %v1495 = vunpack.c.l.b16 %v1463
    %v1496 = vpack.c.b16 %v1481, %v1480
    %v1497 = vpack.c.b16 %v1483, %v1482
    %v1498 = vpack.c.b16 %v1485, %v1484
    %v1499 = vpack.c.b16 %v1487, %v1486
    %v1500 = vpack.c.b16 %v1489, %v1488
    %v1501 = vpack.c.b16 %v1491, %v1490
    %v1502 = vpack.c.b16 %v1493, %v1492
    %v1503 = vpack.c.b16 %v1495, %v1494
    %v1505 = vsel %vm98, %v1496, 0
    %v1508 = vsel %vm98, %v1497, 0
    %v1511 = vsel %vm98, %v1498, 0
    %v1514 = vsel %vm98, %v1499, 0
    %v1517 = vsel %vm98, %v1500, 0
    %v1520 = vsel %vm98, %v1501, 0
    %v1523 = vsel %vm98, %v1502, 0
    %v1526 = vsel %vm98, %v1503, 0
    %1528 = vmatpush.bf16.msra.mxu0 0
    %1529 = vmatpush.bf16.msra.mxu0 0
    %1530 = vmatpush.bf16.msra.mxu0 0
    %1531 = vmatpush.bf16.msra.mxu0 0
    %1532 = vmatpush.bf16.msra.mxu0 0
    %1533 = vmatpush.bf16.msra.mxu0 0
    %1534 = vmatpush.bf16.msra.mxu0 0
    %1535 = vmatpush.bf16.msra.mxu0 %v376
    %1536 = vmatmul.bf16.gmra.mxu0 %v1505
    %v1537 = vpop.f32.mrf.mxu0
    %v1538 = vadd.f32 0.0, %v1537
    %v1539 = vpop.f32.mrf.mxu0
    %v1540 = vadd.f32 0.0, %v1539
    %1541 = vmatmul.bf16.gmra.mxu0 %v1508
    %v1542 = vpop.f32.mrf.mxu0
    %v1543 = vadd.f32 0.0, %v1542
    %v1544 = vpop.f32.mrf.mxu0
    %v1545 = vadd.f32 0.0, %v1544
    %1546 = vmatmul.bf16.gmra.mxu0 %v1511
    %v1547 = vpop.f32.mrf.mxu0
    %v1548 = vadd.f32 0.0, %v1547
    %v1549 = vpop.f32.mrf.mxu0
    %v1550 = vadd.f32 0.0, %v1549
    %1551 = vmatmul.bf16.gmra.mxu0 %v1514
    %v1552 = vpop.f32.mrf.mxu0
    %v1553 = vadd.f32 0.0, %v1552
    %v1554 = vpop.f32.mrf.mxu0
    %v1555 = vadd.f32 0.0, %v1554
    %1556 = vmatmul.bf16.gmra.mxu0 %v1517
    %v1557 = vpop.f32.mrf.mxu0
    %v1558 = vadd.f32 0.0, %v1557
    %v1559 = vpop.f32.mrf.mxu0
    %v1560 = vadd.f32 0.0, %v1559
    %1561 = vmatmul.bf16.gmra.mxu0 %v1520
    %v1562 = vpop.f32.mrf.mxu0
    %v1563 = vadd.f32 0.0, %v1562
    %v1564 = vpop.f32.mrf.mxu0
    %v1565 = vadd.f32 0.0, %v1564
    %1566 = vmatmul.bf16.gmra.mxu0 %v1523
    %v1567 = vpop.f32.mrf.mxu0
    %v1568 = vadd.f32 0.0, %v1567
    %v1569 = vpop.f32.mrf.mxu0
    %v1570 = vadd.f32 0.0, %v1569
    %1571 = vmatmul.bf16.gmra.mxu0 %v1526
    %v1572 = vpop.f32.mrf.mxu0
    %v1573 = vadd.f32 0.0, %v1572
    %v1574 = vpop.f32.mrf.mxu0
    %v1575 = vadd.f32 0.0, %v1574
    %1576 = vdwg.mxu0
    %v1577 = vadd.f32 %v1408, %v1538
    %v1578 = vadd.f32 %v1410, %v1540
    %v1579 = vadd.f32 %v1413, %v1543
    %v1580 = vadd.f32 %v1415, %v1545
    %v1581 = vadd.f32 %v1418, %v1548
    %v1582 = vadd.f32 %v1420, %v1550
    %v1583 = vadd.f32 %v1423, %v1553
    %v1584 = vadd.f32 %v1425, %v1555
    %v1585 = vadd.f32 %v1428, %v1558
    %v1586 = vadd.f32 %v1430, %v1560
    %v1587 = vadd.f32 %v1433, %v1563
    %v1588 = vadd.f32 %v1435, %v1565
    %v1589 = vadd.f32 %v1438, %v1568
    %v1590 = vadd.f32 %v1440, %v1570
    %v1591 = vadd.f32 %v1443, %v1573
    %v1592 = vadd.f32 %v1445, %v1575
    %1593 = vmatpush.bf16.msra.mxu0 0
    %1594 = vmatpush.bf16.msra.mxu0 0
    %1595 = vmatpush.bf16.msra.mxu0 0
    %1596 = vmatpush.bf16.msra.mxu0 0
    %1597 = vmatpush.bf16.msra.mxu0 0
    %1598 = vmatpush.bf16.msra.mxu0 0
    %1599 = vmatpush.bf16.msra.mxu0 0
    %1600 = vmatpush.bf16.msra.mxu0 %v527
    %1601 = vmatmul.bf16.gmra.mxu0 %v654
    %v1602 = vpop.f32.mrf.mxu0
    %v1603 = vadd.f32 0.0, %v1602
    %v1604 = vpop.f32.mrf.mxu0
    %v1605 = vadd.f32 0.0, %v1604
    %1606 = vmatmul.bf16.gmra.mxu0 %v657
    %v1607 = vpop.f32.mrf.mxu0
    %v1608 = vadd.f32 0.0, %v1607
    %v1609 = vpop.f32.mrf.mxu0
    %v1610 = vadd.f32 0.0, %v1609
    %1611 = vmatmul.bf16.gmra.mxu0 %v660
    %v1612 = vpop.f32.mrf.mxu0
    %v1613 = vadd.f32 0.0, %v1612
    %v1614 = vpop.f32.mrf.mxu0
    %v1615 = vadd.f32 0.0, %v1614
    %1616 = vmatmul.bf16.gmra.mxu0 %v663
    %v1617 = vpop.f32.mrf.mxu0
    %v1618 = vadd.f32 0.0, %v1617
    %v1619 = vpop.f32.mrf.mxu0
    %v1620 = vadd.f32 0.0, %v1619
    %1621 = vmatmul.bf16.gmra.mxu0 %v666
    %v1622 = vpop.f32.mrf.mxu0
    %v1623 = vadd.f32 0.0, %v1622
    %v1624 = vpop.f32.mrf.mxu0
    %v1625 = vadd.f32 0.0, %v1624
    %1626 = vmatmul.bf16.gmra.mxu0 %v669
    %v1627 = vpop.f32.mrf.mxu0
    %v1628 = vadd.f32 0.0, %v1627
    %v1629 = vpop.f32.mrf.mxu0
    %v1630 = vadd.f32 0.0, %v1629
    %1631 = vmatmul.bf16.gmra.mxu0 %v672
    %v1632 = vpop.f32.mrf.mxu0
    %v1633 = vadd.f32 0.0, %v1632
    %v1634 = vpop.f32.mrf.mxu0
    %v1635 = vadd.f32 0.0, %v1634
    %1636 = vmatmul.bf16.gmra.mxu0 %v675
    %v1637 = vpop.f32.mrf.mxu0
    %v1638 = vadd.f32 0.0, %v1637
    %v1639 = vpop.f32.mrf.mxu0
    %v1640 = vadd.f32 0.0, %v1639
    %1641 = vdwg.mxu0
    %v1642 = vadd.f32 %v1577, %v1603
    %v1643 = vadd.f32 %v1578, %v1605
    %v1644 = vadd.f32 %v1579, %v1608
    %v1645 = vadd.f32 %v1580, %v1610
    %v1646 = vadd.f32 %v1581, %v1613
    %v1647 = vadd.f32 %v1582, %v1615
    %v1648 = vadd.f32 %v1583, %v1618
    %v1649 = vadd.f32 %v1584, %v1620
    %v1650 = vadd.f32 %v1585, %v1623
    %v1651 = vadd.f32 %v1586, %v1625
    %v1652 = vadd.f32 %v1587, %v1628
    %v1653 = vadd.f32 %v1588, %v1630
    %v1654 = vadd.f32 %v1589, %v1633
    %v1655 = vadd.f32 %v1590, %v1635
    %v1656 = vadd.f32 %v1591, %v1638
    %v1657 = vadd.f32 %v1592, %v1640
    %1658 = vmatpush.bf16.msra.mxu0 0
    %1659 = vmatpush.bf16.msra.mxu0 0
    %1660 = vmatpush.bf16.msra.mxu0 0
    %1661 = vmatpush.bf16.msra.mxu0 0
    %1662 = vmatpush.bf16.msra.mxu0 0
    %1663 = vmatpush.bf16.msra.mxu0 0
    %1664 = vmatpush.bf16.msra.mxu0 0
    %1665 = vmatpush.bf16.msra.mxu0 %v678
    %1666 = vmatmul.bf16.gmra.mxu0 %v805
    %v1667 = vpop.f32.mrf.mxu0
    %v1668 = vadd.f32 0.0, %v1667
    %v1669 = vpop.f32.mrf.mxu0
    %v1670 = vadd.f32 0.0, %v1669
    %1671 = vmatmul.bf16.gmra.mxu0 %v808
    %v1672 = vpop.f32.mrf.mxu0
    %v1673 = vadd.f32 0.0, %v1672
    %v1674 = vpop.f32.mrf.mxu0
    %v1675 = vadd.f32 0.0, %v1674
    %1676 = vmatmul.bf16.gmra.mxu0 %v811
    %v1677 = vpop.f32.mrf.mxu0
    %v1678 = vadd.f32 0.0, %v1677
    %v1679 = vpop.f32.mrf.mxu0
    %v1680 = vadd.f32 0.0, %v1679
    %1681 = vmatmul.bf16.gmra.mxu0 %v814
    %v1682 = vpop.f32.mrf.mxu0
    %v1683 = vadd.f32 0.0, %v1682
    %v1684 = vpop.f32.mrf.mxu0
    %v1685 = vadd.f32 0.0, %v1684
    %1686 = vmatmul.bf16.gmra.mxu0 %v817
    %v1687 = vpop.f32.mrf.mxu0
    %v1688 = vadd.f32 0.0, %v1687
    %v1689 = vpop.f32.mrf.mxu0
    %v1690 = vadd.f32 0.0, %v1689
    %1691 = vmatmul.bf16.gmra.mxu0 %v820
    %v1692 = vpop.f32.mrf.mxu0
    %v1693 = vadd.f32 0.0, %v1692
    %v1694 = vpop.f32.mrf.mxu0
    %v1695 = vadd.f32 0.0, %v1694
    %1696 = vmatmul.bf16.gmra.mxu0 %v823
    %v1697 = vpop.f32.mrf.mxu0
    %v1698 = vadd.f32 0.0, %v1697
    %v1699 = vpop.f32.mrf.mxu0
    %v1700 = vadd.f32 0.0, %v1699
    %1701 = vmatmul.bf16.gmra.mxu0 %v826
    %v1702 = vpop.f32.mrf.mxu0
    %v1703 = vadd.f32 0.0, %v1702
    %v1704 = vpop.f32.mrf.mxu0
    %v1705 = vadd.f32 0.0, %v1704
    %1706 = vdwg.mxu0
    %v1707 = vadd.f32 %v1642, %v1668
    %v1708 = vadd.f32 %v1643, %v1670
    %v1709 = vadd.f32 %v1644, %v1673
    %v1710 = vadd.f32 %v1645, %v1675
    %v1711 = vadd.f32 %v1646, %v1678
    %v1712 = vadd.f32 %v1647, %v1680
    %v1713 = vadd.f32 %v1648, %v1683
    %v1714 = vadd.f32 %v1649, %v1685
    %v1715 = vadd.f32 %v1650, %v1688
    %v1716 = vadd.f32 %v1651, %v1690
    %v1717 = vadd.f32 %v1652, %v1693
    %v1718 = vadd.f32 %v1653, %v1695
    %v1719 = vadd.f32 %v1654, %v1698
    %v1720 = vadd.f32 %v1655, %v1700
    %v1721 = vadd.f32 %v1656, %v1703
    %v1722 = vadd.f32 %v1657, %v1705
    %s1723 = scalar_lea.vmem %s0, 448
    %v1724 = vld [vmem:[%s1723] sm:$0xf]
    %v1725 = vld [vmem:[%s1723 + $0x4] sm:$0xf]
    %v1726 = vld [vmem:[%s1723 + $0x8] sm:$0xf]
    %v1727 = vld [vmem:[%s1723 + $0xc] sm:$0xf]
    %v1728 = vld [vmem:[%s1723 + $0x10] sm:$0xf]
    %v1729 = vld [vmem:[%s1723 + $0x14] sm:$0xf]
    %v1730 = vld [vmem:[%s1723 + $0x18] sm:$0xf]
    %v1731 = vld [vmem:[%s1723 + $0x1c] sm:$0xf]
    %v1732 = vld [vmem:[%s1723 + $0x20] sm:$0xf]
    %v1733 = vld [vmem:[%s1723 + $0x24] sm:$0xf]
    %v1734 = vld [vmem:[%s1723 + $0x28] sm:$0xf]
    %v1735 = vld [vmem:[%s1723 + $0x2c] sm:$0xf]
    %v1736 = vld [vmem:[%s1723 + $0x30] sm:$0xf]
    %v1737 = vld [vmem:[%s1723 + $0x34] sm:$0xf]
    %v1738 = vld [vmem:[%s1723 + $0x38] sm:$0xf]
    %v1739 = vld [vmem:[%s1723 + $0x3c] sm:$0xf]
    %v1756 = vunpack.c.l.b16 %v1724
    %v1757 = vunpack.c.l.b16 %v1725
    %v1758 = vunpack.c.l.b16 %v1726
    %v1759 = vunpack.c.l.b16 %v1727
    %v1760 = vunpack.c.l.b16 %v1728
    %v1761 = vunpack.c.l.b16 %v1729
    %v1762 = vunpack.c.l.b16 %v1730
    %v1763 = vunpack.c.l.b16 %v1731
    %v1764 = vunpack.c.l.b16 %v1732
    %v1765 = vunpack.c.l.b16 %v1733
    %v1766 = vunpack.c.l.b16 %v1734
    %v1767 = vunpack.c.l.b16 %v1735
    %v1768 = vunpack.c.l.b16 %v1736
    %v1769 = vunpack.c.l.b16 %v1737
    %v1770 = vunpack.c.l.b16 %v1738
    %v1771 = vunpack.c.l.b16 %v1739
    %v1772 = vpack.c.b16 %v1757, %v1756
    %v1773 = vpack.c.b16 %v1759, %v1758
    %v1774 = vpack.c.b16 %v1761, %v1760
    %v1775 = vpack.c.b16 %v1763, %v1762
    %v1776 = vpack.c.b16 %v1765, %v1764
    %v1777 = vpack.c.b16 %v1767, %v1766
    %v1778 = vpack.c.b16 %v1769, %v1768
    %v1779 = vpack.c.b16 %v1771, %v1770
    %v1781 = vsel %vm98, %v1772, 0
    %v1784 = vsel %vm98, %v1773, 0
    %v1787 = vsel %vm98, %v1774, 0
    %v1790 = vsel %vm98, %v1775, 0
    %v1793 = vsel %vm98, %v1776, 0
    %v1796 = vsel %vm98, %v1777, 0
    %v1799 = vsel %vm98, %v1778, 0
    %v1802 = vsel %vm98, %v1779, 0
    %1804 = vmatpush.bf16.msra.mxu0 0
    %1805 = vmatpush.bf16.msra.mxu0 0
    %1806 = vmatpush.bf16.msra.mxu0 0
    %1807 = vmatpush.bf16.msra.mxu0 0
    %1808 = vmatpush.bf16.msra.mxu0 0
    %1809 = vmatpush.bf16.msra.mxu0 0
    %1810 = vmatpush.bf16.msra.mxu0 0
    %1811 = vmatpush.bf16.msra.mxu0 %v829
    %1812 = vmatmul.bf16.gmra.mxu0 %v1781
    %v1813 = vpop.f32.mrf.mxu0
    %v1814 = vadd.f32 0.0, %v1813
    %v1815 = vpop.f32.mrf.mxu0
    %v1816 = vadd.f32 0.0, %v1815
    %1817 = vmatmul.bf16.gmra.mxu0 %v1784
    %v1818 = vpop.f32.mrf.mxu0
    %v1819 = vadd.f32 0.0, %v1818
    %v1820 = vpop.f32.mrf.mxu0
    %v1821 = vadd.f32 0.0, %v1820
    %1822 = vmatmul.bf16.gmra.mxu0 %v1787
    %v1823 = vpop.f32.mrf.mxu0
    %v1824 = vadd.f32 0.0, %v1823
    %v1825 = vpop.f32.mrf.mxu0
    %v1826 = vadd.f32 0.0, %v1825
    %1827 = vmatmul.bf16.gmra.mxu0 %v1790
    %v1828 = vpop.f32.mrf.mxu0
    %v1829 = vadd.f32 0.0, %v1828
    %v1830 = vpop.f32.mrf.mxu0
    %v1831 = vadd.f32 0.0, %v1830
    %1832 = vmatmul.bf16.gmra.mxu0 %v1793
    %v1833 = vpop.f32.mrf.mxu0
    %v1834 = vadd.f32 0.0, %v1833
    %v1835 = vpop.f32.mrf.mxu0
    %v1836 = vadd.f32 0.0, %v1835
    %1837 = vmatmul.bf16.gmra.mxu0 %v1796
    %v1838 = vpop.f32.mrf.mxu0
    %v1839 = vadd.f32 0.0, %v1838
    %v1840 = vpop.f32.mrf.mxu0
    %v1841 = vadd.f32 0.0, %v1840
    %1842 = vmatmul.bf16.gmra.mxu0 %v1799
    %v1843 = vpop.f32.mrf.mxu0
    %v1844 = vadd.f32 0.0, %v1843
    %v1845 = vpop.f32.mrf.mxu0
    %v1846 = vadd.f32 0.0, %v1845
    %1847 = vmatmul.bf16.gmra.mxu0 %v1802
    %v1848 = vpop.f32.mrf.mxu0
    %v1849 = vadd.f32 0.0, %v1848
    %v1850 = vpop.f32.mrf.mxu0
    %v1851 = vadd.f32 0.0, %v1850
    %1852 = vdwg.mxu0
    %v1853 = vadd.f32 %v1707, %v1814
    %v1854 = vadd.f32 %v1708, %v1816
    %v1855 = vadd.f32 %v1709, %v1819
    %v1856 = vadd.f32 %v1710, %v1821
    %v1857 = vadd.f32 %v1711, %v1824
    %v1858 = vadd.f32 %v1712, %v1826
    %v1859 = vadd.f32 %v1713, %v1829
    %v1860 = vadd.f32 %v1714, %v1831
    %v1861 = vadd.f32 %v1715, %v1834
    %v1862 = vadd.f32 %v1716, %v1836
    %v1863 = vadd.f32 %v1717, %v1839
    %v1864 = vadd.f32 %v1718, %v1841
    %v1865 = vadd.f32 %v1719, %v1844
    %v1866 = vadd.f32 %v1720, %v1846
    %v1867 = vadd.f32 %v1721, %v1849
    %v1868 = vadd.f32 %v1722, %v1851
    %1869 = vmatpush.bf16.msra.mxu0 0
    %1870 = vmatpush.bf16.msra.mxu0 0
    %1871 = vmatpush.bf16.msra.mxu0 0
    %1872 = vmatpush.bf16.msra.mxu0 0
    %1873 = vmatpush.bf16.msra.mxu0 0
    %1874 = vmatpush.bf16.msra.mxu0 0
    %1875 = vmatpush.bf16.msra.mxu0 0
    %1876 = vmatpush.bf16.msra.mxu0 %v980
    %1877 = vmatmul.bf16.gmra.mxu0 %v1107
    %v1878 = vpop.f32.mrf.mxu0
    %v1879 = vadd.f32 0.0, %v1878
    %v1880 = vpop.f32.mrf.mxu0
    %v1881 = vadd.f32 0.0, %v1880
    %1882 = vmatmul.bf16.gmra.mxu0 %v1110
    %v1883 = vpop.f32.mrf.mxu0
    %v1884 = vadd.f32 0.0, %v1883
    %v1885 = vpop.f32.mrf.mxu0
    %v1886 = vadd.f32 0.0, %v1885
    %1887 = vmatmul.bf16.gmra.mxu0 %v1113
    %v1888 = vpop.f32.mrf.mxu0
    %v1889 = vadd.f32 0.0, %v1888
    %v1890 = vpop.f32.mrf.mxu0
    %v1891 = vadd.f32 0.0, %v1890
    %1892 = vmatmul.bf16.gmra.mxu0 %v1116
    %v1893 = vpop.f32.mrf.mxu0
    %v1894 = vadd.f32 0.0, %v1893
    %v1895 = vpop.f32.mrf.mxu0
    %v1896 = vadd.f32 0.0, %v1895
    %1897 = vmatmul.bf16.gmra.mxu0 %v1119
    %v1898 = vpop.f32.mrf.mxu0
    %v1899 = vadd.f32 0.0, %v1898
    %v1900 = vpop.f32.mrf.mxu0
    %v1901 = vadd.f32 0.0, %v1900
    %1902 = vmatmul.bf16.gmra.mxu0 %v1122
    %v1903 = vpop.f32.mrf.mxu0
    %v1904 = vadd.f32 0.0, %v1903
    %v1905 = vpop.f32.mrf.mxu0
    %v1906 = vadd.f32 0.0, %v1905
    %1907 = vmatmul.bf16.gmra.mxu0 %v1125
    %v1908 = vpop.f32.mrf.mxu0
    %v1909 = vadd.f32 0.0, %v1908
    %v1910 = vpop.f32.mrf.mxu0
    %v1911 = vadd.f32 0.0, %v1910
    %1912 = vmatmul.bf16.gmra.mxu0 %v1128
    %v1913 = vpop.f32.mrf.mxu0
    %v1914 = vadd.f32 0.0, %v1913
    %v1915 = vpop.f32.mrf.mxu0
    %v1916 = vadd.f32 0.0, %v1915
    %1917 = vdwg.mxu0
    %v1918 = vadd.f32 %v1853, %v1879
    %v1919 = vadd.f32 %v1854, %v1881
    %v1920 = vadd.f32 %v1855, %v1884
    %v1921 = vadd.f32 %v1856, %v1886
    %v1922 = vadd.f32 %v1857, %v1889
    %v1923 = vadd.f32 %v1858, %v1891
    %v1924 = vadd.f32 %v1859, %v1894
    %v1925 = vadd.f32 %v1860, %v1896
    %v1926 = vadd.f32 %v1861, %v1899
    %v1927 = vadd.f32 %v1862, %v1901
    %v1928 = vadd.f32 %v1863, %v1904
    %v1929 = vadd.f32 %v1864, %v1906
    %v1930 = vadd.f32 %v1865, %v1909
    %v1931 = vadd.f32 %v1866, %v1911
    %v1932 = vadd.f32 %v1867, %v1914
    %v1933 = vadd.f32 %v1868, %v1916
    %1934 = vmatpush.bf16.msra.mxu0 0
    %1935 = vmatpush.bf16.msra.mxu0 0
    %1936 = vmatpush.bf16.msra.mxu0 0
    %1937 = vmatpush.bf16.msra.mxu0 0
    %1938 = vmatpush.bf16.msra.mxu0 0
    %1939 = vmatpush.bf16.msra.mxu0 0
    %1940 = vmatpush.bf16.msra.mxu0 0
    %1941 = vmatpush.bf16.msra.mxu0 %v1131
    %1942 = vmatmul.bf16.gmra.mxu0 %v1258
    %v1943 = vpop.f32.mrf.mxu0
    %v1944 = vadd.f32 0.0, %v1943
    %v1945 = vpop.f32.mrf.mxu0
    %v1946 = vadd.f32 0.0, %v1945
    %1947 = vmatmul.bf16.gmra.mxu0 %v1261
    %v1948 = vpop.f32.mrf.mxu0
    %v1949 = vadd.f32 0.0, %v1948
    %v1950 = vpop.f32.mrf.mxu0
    %v1951 = vadd.f32 0.0, %v1950
    %1952 = vmatmul.bf16.gmra.mxu0 %v1264
    %v1953 = vpop.f32.mrf.mxu0
    %v1954 = vadd.f32 0.0, %v1953
    %v1955 = vpop.f32.mrf.mxu0
    %v1956 = vadd.f32 0.0, %v1955
    %1957 = vmatmul.bf16.gmra.mxu0 %v1267
    %v1958 = vpop.f32.mrf.mxu0
    %v1959 = vadd.f32 0.0, %v1958
    %v1960 = vpop.f32.mrf.mxu0
    %v1961 = vadd.f32 0.0, %v1960
    %1962 = vmatmul.bf16.gmra.mxu0 %v1270
    %v1963 = vpop.f32.mrf.mxu0
    %v1964 = vadd.f32 0.0, %v1963
    %v1965 = vpop.f32.mrf.mxu0
    %v1966 = vadd.f32 0.0, %v1965
    %1967 = vmatmul.bf16.gmra.mxu0 %v1273
    %v1968 = vpop.f32.mrf.mxu0
    %v1969 = vadd.f32 0.0, %v1968
    %v1970 = vpop.f32.mrf.mxu0
    %v1971 = vadd.f32 0.0, %v1970
    %1972 = vmatmul.bf16.gmra.mxu0 %v1276
    %v1973 = vpop.f32.mrf.mxu0
    %v1974 = vadd.f32 0.0, %v1973
    %v1975 = vpop.f32.mrf.mxu0
    %v1976 = vadd.f32 0.0, %v1975
    %1977 = vmatmul.bf16.gmra.mxu0 %v1279
    %v1978 = vpop.f32.mrf.mxu0
    %v1979 = vadd.f32 0.0, %v1978
    %v1980 = vpop.f32.mrf.mxu0
    %v1981 = vadd.f32 0.0, %v1980
    %1982 = vdwg.mxu0
    %v1983 = vadd.f32 %v1918, %v1944
    %v1984 = vadd.f32 %v1919, %v1946
    %v1985 = vadd.f32 %v1920, %v1949
    %v1986 = vadd.f32 %v1921, %v1951
    %v1987 = vadd.f32 %v1922, %v1954
    %v1988 = vadd.f32 %v1923, %v1956
    %v1989 = vadd.f32 %v1924, %v1959
    %v1990 = vadd.f32 %v1925, %v1961
    %v1991 = vadd.f32 %v1926, %v1964
    %v1992 = vadd.f32 %v1927, %v1966
    %v1993 = vadd.f32 %v1928, %v1969
    %v1994 = vadd.f32 %v1929, %v1971
    %v1995 = vadd.f32 %v1930, %v1974
    %v1996 = vadd.f32 %v1931, %v1976
    %v1997 = vadd.f32 %v1932, %v1979
    %v1998 = vadd.f32 %v1933, %v1981
    %s1999 = scalar_lea.vmem %s0, 704
    %v2000 = vld [vmem:[%s1999] sm:$0xf]
    %v2001 = vld [vmem:[%s1999 + $0x4] sm:$0xf]
    %v2002 = vld [vmem:[%s1999 + $0x8] sm:$0xf]
    %v2003 = vld [vmem:[%s1999 + $0xc] sm:$0xf]
    %v2004 = vld [vmem:[%s1999 + $0x10] sm:$0xf]
    %v2005 = vld [vmem:[%s1999 + $0x14] sm:$0xf]
    %v2006 = vld [vmem:[%s1999 + $0x18] sm:$0xf]
    %v2007 = vld [vmem:[%s1999 + $0x1c] sm:$0xf]
    %v2008 = vld [vmem:[%s1999 + $0x20] sm:$0xf]
    %v2009 = vld [vmem:[%s1999 + $0x24] sm:$0xf]
    %v2010 = vld [vmem:[%s1999 + $0x28] sm:$0xf]
    %v2011 = vld [vmem:[%s1999 + $0x2c] sm:$0xf]
    %v2012 = vld [vmem:[%s1999 + $0x30] sm:$0xf]
    %v2013 = vld [vmem:[%s1999 + $0x34] sm:$0xf]
    %v2014 = vld [vmem:[%s1999 + $0x38] sm:$0xf]
    %v2015 = vld [vmem:[%s1999 + $0x3c] sm:$0xf]
    %v2032 = vunpack.c.l.b16 %v2000
    %v2033 = vunpack.c.l.b16 %v2001
    %v2034 = vunpack.c.l.b16 %v2002
    %v2035 = vunpack.c.l.b16 %v2003
    %v2036 = vunpack.c.l.b16 %v2004
    %v2037 = vunpack.c.l.b16 %v2005
    %v2038 = vunpack.c.l.b16 %v2006
    %v2039 = vunpack.c.l.b16 %v2007
    %v2040 = vunpack.c.l.b16 %v2008
    %v2041 = vunpack.c.l.b16 %v2009
    %v2042 = vunpack.c.l.b16 %v2010
    %v2043 = vunpack.c.l.b16 %v2011
    %v2044 = vunpack.c.l.b16 %v2012
    %v2045 = vunpack.c.l.b16 %v2013
    %v2046 = vunpack.c.l.b16 %v2014
    %v2047 = vunpack.c.l.b16 %v2015
    %v2048 = vpack.c.b16 %v2033, %v2032
    %v2049 = vpack.c.b16 %v2035, %v2034
    %v2050 = vpack.c.b16 %v2037, %v2036
    %v2051 = vpack.c.b16 %v2039, %v2038
    %v2052 = vpack.c.b16 %v2041, %v2040
    %v2053 = vpack.c.b16 %v2043, %v2042
    %v2054 = vpack.c.b16 %v2045, %v2044
    %v2055 = vpack.c.b16 %v2047, %v2046
    %v2057 = vsel %vm98, %v2048, 0
    %v2060 = vsel %vm98, %v2049, 0
    %v2063 = vsel %vm98, %v2050, 0
    %v2066 = vsel %vm98, %v2051, 0
    %v2069 = vsel %vm98, %v2052, 0
    %v2072 = vsel %vm98, %v2053, 0
    %v2075 = vsel %vm98, %v2054, 0
    %v2078 = vsel %vm98, %v2055, 0
    %2080 = vmatpush.bf16.msra.mxu0 0
    %2081 = vmatpush.bf16.msra.mxu0 0
    %2082 = vmatpush.bf16.msra.mxu0 0
    %2083 = vmatpush.bf16.msra.mxu0 0
    %2084 = vmatpush.bf16.msra.mxu0 0
    %2085 = vmatpush.bf16.msra.mxu0 0
    %2086 = vmatpush.bf16.msra.mxu0 0
    %2087 = vmatpush.bf16.msra.mxu0 %v1282
    %2088 = vmatmul.bf16.gmra.mxu0 %v2057
    %v2089 = vpop.f32.mrf.mxu0
    %v2090 = vadd.f32 0.0, %v2089
    %v2091 = vpop.f32.mrf.mxu0
    %v2092 = vadd.f32 0.0, %v2091
    %2093 = vmatmul.bf16.gmra.mxu0 %v2060
    %v2094 = vpop.f32.mrf.mxu0
    %v2095 = vadd.f32 0.0, %v2094
    %v2096 = vpop.f32.mrf.mxu0
    %v2097 = vadd.f32 0.0, %v2096
    %2098 = vmatmul.bf16.gmra.mxu0 %v2063
    %v2099 = vpop.f32.mrf.mxu0
    %v2100 = vadd.f32 0.0, %v2099
    %v2101 = vpop.f32.mrf.mxu0
    %v2102 = vadd.f32 0.0, %v2101
    %2103 = vmatmul.bf16.gmra.mxu0 %v2066
    %v2104 = vpop.f32.mrf.mxu0
    %v2105 = vadd.f32 0.0, %v2104
    %v2106 = vpop.f32.mrf.mxu0
    %v2107 = vadd.f32 0.0, %v2106
    %2108 = vmatmul.bf16.gmra.mxu0 %v2069
    %v2109 = vpop.f32.mrf.mxu0
    %v2110 = vadd.f32 0.0, %v2109
    %v2111 = vpop.f32.mrf.mxu0
    %v2112 = vadd.f32 0.0, %v2111
    %2113 = vmatmul.bf16.gmra.mxu0 %v2072
    %v2114 = vpop.f32.mrf.mxu0
    %v2115 = vadd.f32 0.0, %v2114
    %v2116 = vpop.f32.mrf.mxu0
    %v2117 = vadd.f32 0.0, %v2116
    %2118 = vmatmul.bf16.gmra.mxu0 %v2075
    %v2119 = vpop.f32.mrf.mxu0
    %v2120 = vadd.f32 0.0, %v2119
    %v2121 = vpop.f32.mrf.mxu0
    %v2122 = vadd.f32 0.0, %v2121
    %2123 = vmatmul.bf16.gmra.mxu0 %v2078
    %v2124 = vpop.f32.mrf.mxu0
    %v2125 = vadd.f32 0.0, %v2124
    %v2126 = vpop.f32.mrf.mxu0
    %v2127 = vadd.f32 0.0, %v2126
    %2128 = vdwg.mxu0
    %v2129 = vadd.f32 %v1983, %v2090
    %v2130 = vadd.f32 %v1984, %v2092
    %v2131 = vadd.f32 %v1985, %v2095
    %v2132 = vadd.f32 %v1986, %v2097
    %v2133 = vadd.f32 %v1987, %v2100
    %v2134 = vadd.f32 %v1988, %v2102
    %v2135 = vadd.f32 %v1989, %v2105
    %v2136 = vadd.f32 %v1990, %v2107
    %v2137 = vadd.f32 %v1991, %v2110
    %v2138 = vadd.f32 %v1992, %v2112
    %v2139 = vadd.f32 %v1993, %v2115
    %v2140 = vadd.f32 %v1994, %v2117
    %v2141 = vadd.f32 %v1995, %v2120
    %v2142 = vadd.f32 %v1996, %v2122
    %v2143 = vadd.f32 %v1997, %v2125
    %v2144 = vadd.f32 %v1998, %v2127
    %v2145 = vmax.f32 %v1333, %v2129
    %v2146 = vmax.f32 %v1334, %v2130
    %v2147 = vmax.f32 %v1335, %v2131
    %v2148 = vmax.f32 %v1336, %v2132
    %v2149 = vmax.f32 %v1337, %v2133
    %v2150 = vmax.f32 %v1338, %v2134
    %v2151 = vmax.f32 %v1339, %v2135
    %v2152 = vmax.f32 %v1340, %v2136
    %v2153 = vmax.f32 %v1341, %v2137
    %v2154 = vmax.f32 %v1342, %v2138
    %v2155 = vmax.f32 %v1343, %v2139
    %v2156 = vmax.f32 %v1344, %v2140
    %v2157 = vmax.f32 %v1345, %v2141
    %v2158 = vmax.f32 %v1346, %v2142
    %v2159 = vmax.f32 %v1347, %v2143
    %v2160 = vmax.f32 %v1348, %v2144
    %2161 = vmatpush.bf16.msra.mxu0 0
    %2162 = vmatpush.bf16.msra.mxu0 0
    %2163 = vmatpush.bf16.msra.mxu0 0
    %2164 = vmatpush.bf16.msra.mxu0 0
    %2165 = vmatpush.bf16.msra.mxu0 0
    %2166 = vmatpush.bf16.msra.mxu0 0
    %2167 = vmatpush.bf16.msra.mxu0 0
    %2168 = vmatpush.bf16.msra.mxu0 %v125
    %2169 = vmatmul.bf16.gmra.mxu0 %v654
    %v2170 = vpop.f32.mrf.mxu0
    %v2171 = vadd.f32 0.0, %v2170
    %v2172 = vpop.f32.mrf.mxu0
    %v2173 = vadd.f32 0.0, %v2172
    %2174 = vmatmul.bf16.gmra.mxu0 %v657
    %v2175 = vpop.f32.mrf.mxu0
    %v2176 = vadd.f32 0.0, %v2175
    %v2177 = vpop.f32.mrf.mxu0
    %v2178 = vadd.f32 0.0, %v2177
    %2179 = vmatmul.bf16.gmra.mxu0 %v660
    %v2180 = vpop.f32.mrf.mxu0
    %v2181 = vadd.f32 0.0, %v2180
    %v2182 = vpop.f32.mrf.mxu0
    %v2183 = vadd.f32 0.0, %v2182
    %2184 = vmatmul.bf16.gmra.mxu0 %v663
    %v2185 = vpop.f32.mrf.mxu0
    %v2186 = vadd.f32 0.0, %v2185
    %v2187 = vpop.f32.mrf.mxu0
    %v2188 = vadd.f32 0.0, %v2187
    %2189 = vmatmul.bf16.gmra.mxu0 %v666
    %v2190 = vpop.f32.mrf.mxu0
    %v2191 = vadd.f32 0.0, %v2190
    %v2192 = vpop.f32.mrf.mxu0
    %v2193 = vadd.f32 0.0, %v2192
    %2194 = vmatmul.bf16.gmra.mxu0 %v669
    %v2195 = vpop.f32.mrf.mxu0
    %v2196 = vadd.f32 0.0, %v2195
    %v2197 = vpop.f32.mrf.mxu0
    %v2198 = vadd.f32 0.0, %v2197
    %2199 = vmatmul.bf16.gmra.mxu0 %v672
    %v2200 = vpop.f32.mrf.mxu0
    %v2201 = vadd.f32 0.0, %v2200
    %v2202 = vpop.f32.mrf.mxu0
    %v2203 = vadd.f32 0.0, %v2202
    %2204 = vmatmul.bf16.gmra.mxu0 %v675
    %v2205 = vpop.f32.mrf.mxu0
    %v2206 = vadd.f32 0.0, %v2205
    %v2207 = vpop.f32.mrf.mxu0
    %v2208 = vadd.f32 0.0, %v2207
    %2209 = vdwg.mxu0
    %2210 = vmatpush.bf16.msra.mxu0 0
    %2211 = vmatpush.bf16.msra.mxu0 0
    %2212 = vmatpush.bf16.msra.mxu0 0
    %2213 = vmatpush.bf16.msra.mxu0 0
    %2214 = vmatpush.bf16.msra.mxu0 0
    %2215 = vmatpush.bf16.msra.mxu0 0
    %2216 = vmatpush.bf16.msra.mxu0 0
    %2217 = vmatpush.bf16.msra.mxu0 %v241
    %2218 = vmatmul.bf16.gmra.mxu0 %v503
    %v2219 = vpop.f32.mrf.mxu0
    %v2220 = vadd.f32 %v2171, %v2219
    %v2221 = vpop.f32.mrf.mxu0
    %v2222 = vadd.f32 %v2173, %v2221
    %2223 = vmatmul.bf16.gmra.mxu0 %v506
    %v2224 = vpop.f32.mrf.mxu0
    %v2225 = vadd.f32 %v2176, %v2224
    %v2226 = vpop.f32.mrf.mxu0
    %v2227 = vadd.f32 %v2178, %v2226
    %2228 = vmatmul.bf16.gmra.mxu0 %v509
    %v2229 = vpop.f32.mrf.mxu0
    %v2230 = vadd.f32 %v2181, %v2229
    %v2231 = vpop.f32.mrf.mxu0
    %v2232 = vadd.f32 %v2183, %v2231
    %2233 = vmatmul.bf16.gmra.mxu0 %v512
    %v2234 = vpop.f32.mrf.mxu0
    %v2235 = vadd.f32 %v2186, %v2234
    %v2236 = vpop.f32.mrf.mxu0
    %v2237 = vadd.f32 %v2188, %v2236
    %2238 = vmatmul.bf16.gmra.mxu0 %v515
    %v2239 = vpop.f32.mrf.mxu0
    %v2240 = vadd.f32 %v2191, %v2239
    %v2241 = vpop.f32.mrf.mxu0
    %v2242 = vadd.f32 %v2193, %v2241
    %2243 = vmatmul.bf16.gmra.mxu0 %v518
    %v2244 = vpop.f32.mrf.mxu0
    %v2245 = vadd.f32 %v2196, %v2244
    %v2246 = vpop.f32.mrf.mxu0
    %v2247 = vadd.f32 %v2198, %v2246
    %2248 = vmatmul.bf16.gmra.mxu0 %v521
    %v2249 = vpop.f32.mrf.mxu0
    %v2250 = vadd.f32 %v2201, %v2249
    %v2251 = vpop.f32.mrf.mxu0
    %v2252 = vadd.f32 %v2203, %v2251
    %2253 = vmatmul.bf16.gmra.mxu0 %v524
    %v2254 = vpop.f32.mrf.mxu0
    %v2255 = vadd.f32 %v2206, %v2254
    %v2256 = vpop.f32.mrf.mxu0
    %v2257 = vadd.f32 %v2208, %v2256
    %2258 = vdwg.mxu0
    %2259 = vmatpush.bf16.msra.mxu0 0
    %2260 = vmatpush.bf16.msra.mxu0 0
    %2261 = vmatpush.bf16.msra.mxu0 0
    %2262 = vmatpush.bf16.msra.mxu0 0
    %2263 = vmatpush.bf16.msra.mxu0 0
    %2264 = vmatpush.bf16.msra.mxu0 0
    %2265 = vmatpush.bf16.msra.mxu0 0
    %2266 = vmatpush.bf16.msra.mxu0 %v376
    %2267 = vmatmul.bf16.gmra.mxu0 %v805
    %v2268 = vpop.f32.mrf.mxu0
    %v2269 = vadd.f32 0.0, %v2268
    %v2270 = vpop.f32.mrf.mxu0
    %v2271 = vadd.f32 0.0, %v2270
    %2272 = vmatmul.bf16.gmra.mxu0 %v808
    %v2273 = vpop.f32.mrf.mxu0
    %v2274 = vadd.f32 0.0, %v2273
    %v2275 = vpop.f32.mrf.mxu0
    %v2276 = vadd.f32 0.0, %v2275
    %2277 = vmatmul.bf16.gmra.mxu0 %v811
    %v2278 = vpop.f32.mrf.mxu0
    %v2279 = vadd.f32 0.0, %v2278
    %v2280 = vpop.f32.mrf.mxu0
    %v2281 = vadd.f32 0.0, %v2280
    %2282 = vmatmul.bf16.gmra.mxu0 %v814
    %v2283 = vpop.f32.mrf.mxu0
    %v2284 = vadd.f32 0.0, %v2283
    %v2285 = vpop.f32.mrf.mxu0
    %v2286 = vadd.f32 0.0, %v2285
    %2287 = vmatmul.bf16.gmra.mxu0 %v817
    %v2288 = vpop.f32.mrf.mxu0
    %v2289 = vadd.f32 0.0, %v2288
    %v2290 = vpop.f32.mrf.mxu0
    %v2291 = vadd.f32 0.0, %v2290
    %2292 = vmatmul.bf16.gmra.mxu0 %v820
    %v2293 = vpop.f32.mrf.mxu0
    %v2294 = vadd.f32 0.0, %v2293
    %v2295 = vpop.f32.mrf.mxu0
    %v2296 = vadd.f32 0.0, %v2295
    %2297 = vmatmul.bf16.gmra.mxu0 %v823
    %v2298 = vpop.f32.mrf.mxu0
    %v2299 = vadd.f32 0.0, %v2298
    %v2300 = vpop.f32.mrf.mxu0
    %v2301 = vadd.f32 0.0, %v2300
    %2302 = vmatmul.bf16.gmra.mxu0 %v826
    %v2303 = vpop.f32.mrf.mxu0
    %v2304 = vadd.f32 0.0, %v2303
    %v2305 = vpop.f32.mrf.mxu0
    %v2306 = vadd.f32 0.0, %v2305
    %2307 = vdwg.mxu0
    %v2308 = vadd.f32 %v2220, %v2269
    %v2309 = vadd.f32 %v2222, %v2271
    %v2310 = vadd.f32 %v2225, %v2274
    %v2311 = vadd.f32 %v2227, %v2276
    %v2312 = vadd.f32 %v2230, %v2279
    %v2313 = vadd.f32 %v2232, %v2281
    %v2314 = vadd.f32 %v2235, %v2284
    %v2315 = vadd.f32 %v2237, %v2286
    %v2316 = vadd.f32 %v2240, %v2289
    %v2317 = vadd.f32 %v2242, %v2291
    %v2318 = vadd.f32 %v2245, %v2294
    %v2319 = vadd.f32 %v2247, %v2296
    %v2320 = vadd.f32 %v2250, %v2299
    %v2321 = vadd.f32 %v2252, %v2301
    %v2322 = vadd.f32 %v2255, %v2304
    %v2323 = vadd.f32 %v2257, %v2306
    %2324 = vmatpush.bf16.msra.mxu0 0
    %2325 = vmatpush.bf16.msra.mxu0 0
    %2326 = vmatpush.bf16.msra.mxu0 0
    %2327 = vmatpush.bf16.msra.mxu0 0
    %2328 = vmatpush.bf16.msra.mxu0 0
    %2329 = vmatpush.bf16.msra.mxu0 0
    %2330 = vmatpush.bf16.msra.mxu0 0
    %2331 = vmatpush.bf16.msra.mxu0 %v527
    %2332 = vmatmul.bf16.gmra.mxu0 %v956
    %v2333 = vpop.f32.mrf.mxu0
    %v2334 = vadd.f32 0.0, %v2333
    %v2335 = vpop.f32.mrf.mxu0
    %v2336 = vadd.f32 0.0, %v2335
    %2337 = vmatmul.bf16.gmra.mxu0 %v959
    %v2338 = vpop.f32.mrf.mxu0
    %v2339 = vadd.f32 0.0, %v2338
    %v2340 = vpop.f32.mrf.mxu0
    %v2341 = vadd.f32 0.0, %v2340
    %2342 = vmatmul.bf16.gmra.mxu0 %v962
    %v2343 = vpop.f32.mrf.mxu0
    %v2344 = vadd.f32 0.0, %v2343
    %v2345 = vpop.f32.mrf.mxu0
    %v2346 = vadd.f32 0.0, %v2345
    %2347 = vmatmul.bf16.gmra.mxu0 %v965
    %v2348 = vpop.f32.mrf.mxu0
    %v2349 = vadd.f32 0.0, %v2348
    %v2350 = vpop.f32.mrf.mxu0
    %v2351 = vadd.f32 0.0, %v2350
    %2352 = vmatmul.bf16.gmra.mxu0 %v968
    %v2353 = vpop.f32.mrf.mxu0
    %v2354 = vadd.f32 0.0, %v2353
    %v2355 = vpop.f32.mrf.mxu0
    %v2356 = vadd.f32 0.0, %v2355
    %2357 = vmatmul.bf16.gmra.mxu0 %v971
    %v2358 = vpop.f32.mrf.mxu0
    %v2359 = vadd.f32 0.0, %v2358
    %v2360 = vpop.f32.mrf.mxu0
    %v2361 = vadd.f32 0.0, %v2360
    %2362 = vmatmul.bf16.gmra.mxu0 %v974
    %v2363 = vpop.f32.mrf.mxu0
    %v2364 = vadd.f32 0.0, %v2363
    %v2365 = vpop.f32.mrf.mxu0
    %v2366 = vadd.f32 0.0, %v2365
    %2367 = vmatmul.bf16.gmra.mxu0 %v977
    %v2368 = vpop.f32.mrf.mxu0
    %v2369 = vadd.f32 0.0, %v2368
    %v2370 = vpop.f32.mrf.mxu0
    %v2371 = vadd.f32 0.0, %v2370
    %2372 = vdwg.mxu0
    %v2373 = vadd.f32 %v2308, %v2334
    %v2374 = vadd.f32 %v2309, %v2336
    %v2375 = vadd.f32 %v2310, %v2339
    %v2376 = vadd.f32 %v2311, %v2341
    %v2377 = vadd.f32 %v2312, %v2344
    %v2378 = vadd.f32 %v2313, %v2346
    %v2379 = vadd.f32 %v2314, %v2349
    %v2380 = vadd.f32 %v2315, %v2351
    %v2381 = vadd.f32 %v2316, %v2354
    %v2382 = vadd.f32 %v2317, %v2356
    %v2383 = vadd.f32 %v2318, %v2359
    %v2384 = vadd.f32 %v2319, %v2361
    %v2385 = vadd.f32 %v2320, %v2364
    %v2386 = vadd.f32 %v2321, %v2366
    %v2387 = vadd.f32 %v2322, %v2369
    %v2388 = vadd.f32 %v2323, %v2371
    %2389 = vmatpush.bf16.msra.mxu0 0
    %2390 = vmatpush.bf16.msra.mxu0 0
    %2391 = vmatpush.bf16.msra.mxu0 0
    %2392 = vmatpush.bf16.msra.mxu0 0
    %2393 = vmatpush.bf16.msra.mxu0 0
    %2394 = vmatpush.bf16.msra.mxu0 0
    %2395 = vmatpush.bf16.msra.mxu0 0
    %2396 = vmatpush.bf16.msra.mxu0 %v678
    %2397 = vmatmul.bf16.gmra.mxu0 %v1107
    %v2398 = vpop.f32.mrf.mxu0
    %v2399 = vadd.f32 0.0, %v2398
    %v2400 = vpop.f32.mrf.mxu0
    %v2401 = vadd.f32 0.0, %v2400
    %2402 = vmatmul.bf16.gmra.mxu0 %v1110
    %v2403 = vpop.f32.mrf.mxu0
    %v2404 = vadd.f32 0.0, %v2403
    %v2405 = vpop.f32.mrf.mxu0
    %v2406 = vadd.f32 0.0, %v2405
    %2407 = vmatmul.bf16.gmra.mxu0 %v1113
    %v2408 = vpop.f32.mrf.mxu0
    %v2409 = vadd.f32 0.0, %v2408
    %v2410 = vpop.f32.mrf.mxu0
    %v2411 = vadd.f32 0.0, %v2410
    %2412 = vmatmul.bf16.gmra.mxu0 %v1116
    %v2413 = vpop.f32.mrf.mxu0
    %v2414 = vadd.f32 0.0, %v2413
    %v2415 = vpop.f32.mrf.mxu0
    %v2416 = vadd.f32 0.0, %v2415
    %2417 = vmatmul.bf16.gmra.mxu0 %v1119
    %v2418 = vpop.f32.mrf.mxu0
    %v2419 = vadd.f32 0.0, %v2418
    %v2420 = vpop.f32.mrf.mxu0
    %v2421 = vadd.f32 0.0, %v2420
    %2422 = vmatmul.bf16.gmra.mxu0 %v1122
    %v2423 = vpop.f32.mrf.mxu0
    %v2424 = vadd.f32 0.0, %v2423
    %v2425 = vpop.f32.mrf.mxu0
    %v2426 = vadd.f32 0.0, %v2425
    %2427 = vmatmul.bf16.gmra.mxu0 %v1125
    %v2428 = vpop.f32.mrf.mxu0
    %v2429 = vadd.f32 0.0, %v2428
    %v2430 = vpop.f32.mrf.mxu0
    %v2431 = vadd.f32 0.0, %v2430
    %2432 = vmatmul.bf16.gmra.mxu0 %v1128
    %v2433 = vpop.f32.mrf.mxu0
    %v2434 = vadd.f32 0.0, %v2433
    %v2435 = vpop.f32.mrf.mxu0
    %v2436 = vadd.f32 0.0, %v2435
    %2437 = vdwg.mxu0
    %v2438 = vadd.f32 %v2373, %v2399
    %v2439 = vadd.f32 %v2374, %v2401
    %v2440 = vadd.f32 %v2375, %v2404
    %v2441 = vadd.f32 %v2376, %v2406
    %v2442 = vadd.f32 %v2377, %v2409
    %v2443 = vadd.f32 %v2378, %v2411
    %v2444 = vadd.f32 %v2379, %v2414
    %v2445 = vadd.f32 %v2380, %v2416
    %v2446 = vadd.f32 %v2381, %v2419
    %v2447 = vadd.f32 %v2382, %v2421
    %v2448 = vadd.f32 %v2383, %v2424
    %v2449 = vadd.f32 %v2384, %v2426
    %v2450 = vadd.f32 %v2385, %v2429
    %v2451 = vadd.f32 %v2386, %v2431
    %v2452 = vadd.f32 %v2387, %v2434
    %v2453 = vadd.f32 %v2388, %v2436
    %2454 = vmatpush.bf16.msra.mxu0 0
    %2455 = vmatpush.bf16.msra.mxu0 0
    %2456 = vmatpush.bf16.msra.mxu0 0
    %2457 = vmatpush.bf16.msra.mxu0 0
    %2458 = vmatpush.bf16.msra.mxu0 0
    %2459 = vmatpush.bf16.msra.mxu0 0
    %2460 = vmatpush.bf16.msra.mxu0 0
    %2461 = vmatpush.bf16.msra.mxu0 %v829
    %2462 = vmatmul.bf16.gmra.mxu0 %v1258
    %v2463 = vpop.f32.mrf.mxu0
    %v2464 = vadd.f32 0.0, %v2463
    %v2465 = vpop.f32.mrf.mxu0
    %v2466 = vadd.f32 0.0, %v2465
    %2467 = vmatmul.bf16.gmra.mxu0 %v1261
    %v2468 = vpop.f32.mrf.mxu0
    %v2469 = vadd.f32 0.0, %v2468
    %v2470 = vpop.f32.mrf.mxu0
    %v2471 = vadd.f32 0.0, %v2470
    %2472 = vmatmul.bf16.gmra.mxu0 %v1264
    %v2473 = vpop.f32.mrf.mxu0
    %v2474 = vadd.f32 0.0, %v2473
    %v2475 = vpop.f32.mrf.mxu0
    %v2476 = vadd.f32 0.0, %v2475
    %2477 = vmatmul.bf16.gmra.mxu0 %v1267
    %v2478 = vpop.f32.mrf.mxu0
    %v2479 = vadd.f32 0.0, %v2478
    %v2480 = vpop.f32.mrf.mxu0
    %v2481 = vadd.f32 0.0, %v2480
    %2482 = vmatmul.bf16.gmra.mxu0 %v1270
    %v2483 = vpop.f32.mrf.mxu0
    %v2484 = vadd.f32 0.0, %v2483
    %v2485 = vpop.f32.mrf.mxu0
    %v2486 = vadd.f32 0.0, %v2485
    %2487 = vmatmul.bf16.gmra.mxu0 %v1273
    %v2488 = vpop.f32.mrf.mxu0
    %v2489 = vadd.f32 0.0, %v2488
    %v2490 = vpop.f32.mrf.mxu0
    %v2491 = vadd.f32 0.0, %v2490
    %2492 = vmatmul.bf16.gmra.mxu0 %v1276
    %v2493 = vpop.f32.mrf.mxu0
    %v2494 = vadd.f32 0.0, %v2493
    %v2495 = vpop.f32.mrf.mxu0
    %v2496 = vadd.f32 0.0, %v2495
    %2497 = vmatmul.bf16.gmra.mxu0 %v1279
    %v2498 = vpop.f32.mrf.mxu0
    %v2499 = vadd.f32 0.0, %v2498
    %v2500 = vpop.f32.mrf.mxu0
    %v2501 = vadd.f32 0.0, %v2500
    %2502 = vdwg.mxu0
    %v2503 = vadd.f32 %v2438, %v2464
    %v2504 = vadd.f32 %v2439, %v2466
    %v2505 = vadd.f32 %v2440, %v2469
    %v2506 = vadd.f32 %v2441, %v2471
    %v2507 = vadd.f32 %v2442, %v2474
    %v2508 = vadd.f32 %v2443, %v2476
    %v2509 = vadd.f32 %v2444, %v2479
    %v2510 = vadd.f32 %v2445, %v2481
    %v2511 = vadd.f32 %v2446, %v2484
    %v2512 = vadd.f32 %v2447, %v2486
    %v2513 = vadd.f32 %v2448, %v2489
    %v2514 = vadd.f32 %v2449, %v2491
    %v2515 = vadd.f32 %v2450, %v2494
    %v2516 = vadd.f32 %v2451, %v2496
    %v2517 = vadd.f32 %v2452, %v2499
    %v2518 = vadd.f32 %v2453, %v2501
    %s2519 = scalar_lea.vmem %s0, 768
    %v2520 = vld [vmem:[%s2519] sm:$0xf]
    %v2521 = vld [vmem:[%s2519 + $0x4] sm:$0xf]
    %v2522 = vld [vmem:[%s2519 + $0x8] sm:$0xf]
    %v2523 = vld [vmem:[%s2519 + $0xc] sm:$0xf]
    %v2524 = vld [vmem:[%s2519 + $0x10] sm:$0xf]
    %v2525 = vld [vmem:[%s2519 + $0x14] sm:$0xf]
    %v2526 = vld [vmem:[%s2519 + $0x18] sm:$0xf]
    %v2527 = vld [vmem:[%s2519 + $0x1c] sm:$0xf]
    %v2528 = vld [vmem:[%s2519 + $0x20] sm:$0xf]
    %v2529 = vld [vmem:[%s2519 + $0x24] sm:$0xf]
    %v2530 = vld [vmem:[%s2519 + $0x28] sm:$0xf]
    %v2531 = vld [vmem:[%s2519 + $0x2c] sm:$0xf]
    %v2532 = vld [vmem:[%s2519 + $0x30] sm:$0xf]
    %v2533 = vld [vmem:[%s2519 + $0x34] sm:$0xf]
    %v2534 = vld [vmem:[%s2519 + $0x38] sm:$0xf]
    %v2535 = vld [vmem:[%s2519 + $0x3c] sm:$0xf]
    %v2552 = vunpack.c.l.b16 %v2520
    %v2553 = vunpack.c.l.b16 %v2521
    %v2554 = vunpack.c.l.b16 %v2522
    %v2555 = vunpack.c.l.b16 %v2523
    %v2556 = vunpack.c.l.b16 %v2524
    %v2557 = vunpack.c.l.b16 %v2525
    %v2558 = vunpack.c.l.b16 %v2526
    %v2559 = vunpack.c.l.b16 %v2527
    %v2560 = vunpack.c.l.b16 %v2528
    %v2561 = vunpack.c.l.b16 %v2529
    %v2562 = vunpack.c.l.b16 %v2530
    %v2563 = vunpack.c.l.b16 %v2531
    %v2564 = vunpack.c.l.b16 %v2532
    %v2565 = vunpack.c.l.b16 %v2533
    %v2566 = vunpack.c.l.b16 %v2534
    %v2567 = vunpack.c.l.b16 %v2535
    %v2568 = vpack.c.b16 %v2553, %v2552
    %v2569 = vpack.c.b16 %v2555, %v2554
    %v2570 = vpack.c.b16 %v2557, %v2556
    %v2571 = vpack.c.b16 %v2559, %v2558
    %v2572 = vpack.c.b16 %v2561, %v2560
    %v2573 = vpack.c.b16 %v2563, %v2562
    %v2574 = vpack.c.b16 %v2565, %v2564
    %v2575 = vpack.c.b16 %v2567, %v2566
    %v2577 = vsel %vm98, %v2568, 0
    %v2580 = vsel %vm98, %v2569, 0
    %v2583 = vsel %vm98, %v2570, 0
    %v2586 = vsel %vm98, %v2571, 0
    %v2589 = vsel %vm98, %v2572, 0
    %v2592 = vsel %vm98, %v2573, 0
    %v2595 = vsel %vm98, %v2574, 0
    %v2598 = vsel %vm98, %v2575, 0
    %2600 = vmatpush.bf16.msra.mxu0 0
    %2601 = vmatpush.bf16.msra.mxu0 0
    %2602 = vmatpush.bf16.msra.mxu0 0
    %2603 = vmatpush.bf16.msra.mxu0 0
    %2604 = vmatpush.bf16.msra.mxu0 0
    %2605 = vmatpush.bf16.msra.mxu0 0
    %2606 = vmatpush.bf16.msra.mxu0 0
    %2607 = vmatpush.bf16.msra.mxu0 %v980
    %2608 = vmatmul.bf16.gmra.mxu0 %v2577
    %v2609 = vpop.f32.mrf.mxu0
    %v2610 = vadd.f32 0.0, %v2609
    %v2611 = vpop.f32.mrf.mxu0
    %v2612 = vadd.f32 0.0, %v2611
    %2613 = vmatmul.bf16.gmra.mxu0 %v2580
    %v2614 = vpop.f32.mrf.mxu0
    %v2615 = vadd.f32 0.0, %v2614
    %v2616 = vpop.f32.mrf.mxu0
    %v2617 = vadd.f32 0.0, %v2616
    %2618 = vmatmul.bf16.gmra.mxu0 %v2583
    %v2619 = vpop.f32.mrf.mxu0
    %v2620 = vadd.f32 0.0, %v2619
    %v2621 = vpop.f32.mrf.mxu0
    %v2622 = vadd.f32 0.0, %v2621
    %2623 = vmatmul.bf16.gmra.mxu0 %v2586
    %v2624 = vpop.f32.mrf.mxu0
    %v2625 = vadd.f32 0.0, %v2624
    %v2626 = vpop.f32.mrf.mxu0
    %v2627 = vadd.f32 0.0, %v2626
    %2628 = vmatmul.bf16.gmra.mxu0 %v2589
    %v2629 = vpop.f32.mrf.mxu0
    %v2630 = vadd.f32 0.0, %v2629
    %v2631 = vpop.f32.mrf.mxu0
    %v2632 = vadd.f32 0.0, %v2631
    %2633 = vmatmul.bf16.gmra.mxu0 %v2592
    %v2634 = vpop.f32.mrf.mxu0
    %v2635 = vadd.f32 0.0, %v2634
    %v2636 = vpop.f32.mrf.mxu0
    %v2637 = vadd.f32 0.0, %v2636
    %2638 = vmatmul.bf16.gmra.mxu0 %v2595
    %v2639 = vpop.f32.mrf.mxu0
    %v2640 = vadd.f32 0.0, %v2639
    %v2641 = vpop.f32.mrf.mxu0
    %v2642 = vadd.f32 0.0, %v2641
    %2643 = vmatmul.bf16.gmra.mxu0 %v2598
    %v2644 = vpop.f32.mrf.mxu0
    %v2645 = vadd.f32 0.0, %v2644
    %v2646 = vpop.f32.mrf.mxu0
    %v2647 = vadd.f32 0.0, %v2646
    %2648 = vdwg.mxu0
    %v2649 = vadd.f32 %v2503, %v2610
    %v2650 = vadd.f32 %v2504, %v2612
    %v2651 = vadd.f32 %v2505, %v2615
    %v2652 = vadd.f32 %v2506, %v2617
    %v2653 = vadd.f32 %v2507, %v2620
    %v2654 = vadd.f32 %v2508, %v2622
    %v2655 = vadd.f32 %v2509, %v2625
    %v2656 = vadd.f32 %v2510, %v2627
    %v2657 = vadd.f32 %v2511, %v2630
    %v2658 = vadd.f32 %v2512, %v2632
    %v2659 = vadd.f32 %v2513, %v2635
    %v2660 = vadd.f32 %v2514, %v2637
    %v2661 = vadd.f32 %v2515, %v2640
    %v2662 = vadd.f32 %v2516, %v2642
    %v2663 = vadd.f32 %v2517, %v2645
    %v2664 = vadd.f32 %v2518, %v2647
    %s2665 = scalar_lea.vmem %s0, 832
    %v2666 = vld [vmem:[%s2665] sm:$0xf]
    %v2667 = vld [vmem:[%s2665 + $0x4] sm:$0xf]
    %v2668 = vld [vmem:[%s2665 + $0x8] sm:$0xf]
    %v2669 = vld [vmem:[%s2665 + $0xc] sm:$0xf]
    %v2670 = vld [vmem:[%s2665 + $0x10] sm:$0xf]
    %v2671 = vld [vmem:[%s2665 + $0x14] sm:$0xf]
    %v2672 = vld [vmem:[%s2665 + $0x18] sm:$0xf]
    %v2673 = vld [vmem:[%s2665 + $0x1c] sm:$0xf]
    %v2674 = vld [vmem:[%s2665 + $0x20] sm:$0xf]
    %v2675 = vld [vmem:[%s2665 + $0x24] sm:$0xf]
    %v2676 = vld [vmem:[%s2665 + $0x28] sm:$0xf]
    %v2677 = vld [vmem:[%s2665 + $0x2c] sm:$0xf]
    %v2678 = vld [vmem:[%s2665 + $0x30] sm:$0xf]
    %v2679 = vld [vmem:[%s2665 + $0x34] sm:$0xf]
    %v2680 = vld [vmem:[%s2665 + $0x38] sm:$0xf]
    %v2681 = vld [vmem:[%s2665 + $0x3c] sm:$0xf]
    %v2698 = vunpack.c.l.b16 %v2666
    %v2699 = vunpack.c.l.b16 %v2667
    %v2700 = vunpack.c.l.b16 %v2668
    %v2701 = vunpack.c.l.b16 %v2669
    %v2702 = vunpack.c.l.b16 %v2670
    %v2703 = vunpack.c.l.b16 %v2671
    %v2704 = vunpack.c.l.b16 %v2672
    %v2705 = vunpack.c.l.b16 %v2673
    %v2706 = vunpack.c.l.b16 %v2674
    %v2707 = vunpack.c.l.b16 %v2675
    %v2708 = vunpack.c.l.b16 %v2676
    %v2709 = vunpack.c.l.b16 %v2677
    %v2710 = vunpack.c.l.b16 %v2678
    %v2711 = vunpack.c.l.b16 %v2679
    %v2712 = vunpack.c.l.b16 %v2680
    %v2713 = vunpack.c.l.b16 %v2681
    %v2714 = vpack.c.b16 %v2699, %v2698
    %v2715 = vpack.c.b16 %v2701, %v2700
    %v2716 = vpack.c.b16 %v2703, %v2702
    %v2717 = vpack.c.b16 %v2705, %v2704
    %v2718 = vpack.c.b16 %v2707, %v2706
    %v2719 = vpack.c.b16 %v2709, %v2708
    %v2720 = vpack.c.b16 %v2711, %v2710
    %v2721 = vpack.c.b16 %v2713, %v2712
    %v2723 = vsel %vm98, %v2714, 0
    %v2726 = vsel %vm98, %v2715, 0
    %v2729 = vsel %vm98, %v2716, 0
    %v2732 = vsel %vm98, %v2717, 0
    %v2735 = vsel %vm98, %v2718, 0
    %v2738 = vsel %vm98, %v2719, 0
    %v2741 = vsel %vm98, %v2720, 0
    %v2744 = vsel %vm98, %v2721, 0
    %2746 = vmatpush.bf16.msra.mxu0 0
    %2747 = vmatpush.bf16.msra.mxu0 0
    %2748 = vmatpush.bf16.msra.mxu0 0
    %2749 = vmatpush.bf16.msra.mxu0 0
    %2750 = vmatpush.bf16.msra.mxu0 0
    %2751 = vmatpush.bf16.msra.mxu0 0
    %2752 = vmatpush.bf16.msra.mxu0 0
    %2753 = vmatpush.bf16.msra.mxu0 %v1131
    %2754 = vmatmul.bf16.gmra.mxu0 %v2723
    %v2755 = vpop.f32.mrf.mxu0
    %v2756 = vadd.f32 0.0, %v2755
    %v2757 = vpop.f32.mrf.mxu0
    %v2758 = vadd.f32 0.0, %v2757
    %2759 = vmatmul.bf16.gmra.mxu0 %v2726
    %v2760 = vpop.f32.mrf.mxu0
    %v2761 = vadd.f32 0.0, %v2760
    %v2762 = vpop.f32.mrf.mxu0
    %v2763 = vadd.f32 0.0, %v2762
    %2764 = vmatmul.bf16.gmra.mxu0 %v2729
    %v2765 = vpop.f32.mrf.mxu0
    %v2766 = vadd.f32 0.0, %v2765
    %v2767 = vpop.f32.mrf.mxu0
    %v2768 = vadd.f32 0.0, %v2767
    %2769 = vmatmul.bf16.gmra.mxu0 %v2732
    %v2770 = vpop.f32.mrf.mxu0
    %v2771 = vadd.f32 0.0, %v2770
    %v2772 = vpop.f32.mrf.mxu0
    %v2773 = vadd.f32 0.0, %v2772
    %2774 = vmatmul.bf16.gmra.mxu0 %v2735
    %v2775 = vpop.f32.mrf.mxu0
    %v2776 = vadd.f32 0.0, %v2775
    %v2777 = vpop.f32.mrf.mxu0
    %v2778 = vadd.f32 0.0, %v2777
    %2779 = vmatmul.bf16.gmra.mxu0 %v2738
    %v2780 = vpop.f32.mrf.mxu0
    %v2781 = vadd.f32 0.0, %v2780
    %v2782 = vpop.f32.mrf.mxu0
    %v2783 = vadd.f32 0.0, %v2782
    %2784 = vmatmul.bf16.gmra.mxu0 %v2741
    %v2785 = vpop.f32.mrf.mxu0
    %v2786 = vadd.f32 0.0, %v2785
    %v2787 = vpop.f32.mrf.mxu0
    %v2788 = vadd.f32 0.0, %v2787
    %2789 = vmatmul.bf16.gmra.mxu0 %v2744
    %v2790 = vpop.f32.mrf.mxu0
    %v2791 = vadd.f32 0.0, %v2790
    %v2792 = vpop.f32.mrf.mxu0
    %v2793 = vadd.f32 0.0, %v2792
    %2794 = vdwg.mxu0
    %v2795 = vadd.f32 %v2649, %v2756
    %v2796 = vadd.f32 %v2650, %v2758
    %v2797 = vadd.f32 %v2651, %v2761
    %v2798 = vadd.f32 %v2652, %v2763
    %v2799 = vadd.f32 %v2653, %v2766
    %v2800 = vadd.f32 %v2654, %v2768
    %v2801 = vadd.f32 %v2655, %v2771
    %v2802 = vadd.f32 %v2656, %v2773
    %v2803 = vadd.f32 %v2657, %v2776
    %v2804 = vadd.f32 %v2658, %v2778
    %v2805 = vadd.f32 %v2659, %v2781
    %v2806 = vadd.f32 %v2660, %v2783
    %v2807 = vadd.f32 %v2661, %v2786
    %v2808 = vadd.f32 %v2662, %v2788
    %v2809 = vadd.f32 %v2663, %v2791
    %v2810 = vadd.f32 %v2664, %v2793
    %s2811 = scalar_lea.vmem %s0, 896
    %v2812 = vld [vmem:[%s2811] sm:$0xf]
    %v2813 = vld [vmem:[%s2811 + $0x4] sm:$0xf]
    %v2814 = vld [vmem:[%s2811 + $0x8] sm:$0xf]
    %v2815 = vld [vmem:[%s2811 + $0xc] sm:$0xf]
    %v2816 = vld [vmem:[%s2811 + $0x10] sm:$0xf]
    %v2817 = vld [vmem:[%s2811 + $0x14] sm:$0xf]
    %v2818 = vld [vmem:[%s2811 + $0x18] sm:$0xf]
    %v2819 = vld [vmem:[%s2811 + $0x1c] sm:$0xf]
    %v2820 = vld [vmem:[%s2811 + $0x20] sm:$0xf]
    %v2821 = vld [vmem:[%s2811 + $0x24] sm:$0xf]
    %v2822 = vld [vmem:[%s2811 + $0x28] sm:$0xf]
    %v2823 = vld [vmem:[%s2811 + $0x2c] sm:$0xf]
    %v2824 = vld [vmem:[%s2811 + $0x30] sm:$0xf]
    %v2825 = vld [vmem:[%s2811 + $0x34] sm:$0xf]
    %v2826 = vld [vmem:[%s2811 + $0x38] sm:$0xf]
    %v2827 = vld [vmem:[%s2811 + $0x3c] sm:$0xf]
    %v2844 = vunpack.c.l.b16 %v2812
    %v2845 = vunpack.c.l.b16 %v2813
    %v2846 = vunpack.c.l.b16 %v2814
    %v2847 = vunpack.c.l.b16 %v2815
    %v2848 = vunpack.c.l.b16 %v2816
    %v2849 = vunpack.c.l.b16 %v2817
    %v2850 = vunpack.c.l.b16 %v2818
    %v2851 = vunpack.c.l.b16 %v2819
    %v2852 = vunpack.c.l.b16 %v2820
    %v2853 = vunpack.c.l.b16 %v2821
    %v2854 = vunpack.c.l.b16 %v2822
    %v2855 = vunpack.c.l.b16 %v2823
    %v2856 = vunpack.c.l.b16 %v2824
    %v2857 = vunpack.c.l.b16 %v2825
    %v2858 = vunpack.c.l.b16 %v2826
    %v2859 = vunpack.c.l.b16 %v2827
    %v2860 = vpack.c.b16 %v2845, %v2844
    %v2861 = vpack.c.b16 %v2847, %v2846
    %v2862 = vpack.c.b16 %v2849, %v2848
    %v2863 = vpack.c.b16 %v2851, %v2850
    %v2864 = vpack.c.b16 %v2853, %v2852
    %v2865 = vpack.c.b16 %v2855, %v2854
    %v2866 = vpack.c.b16 %v2857, %v2856
    %v2867 = vpack.c.b16 %v2859, %v2858
    %v2869 = vsel %vm98, %v2860, 0
    %v2872 = vsel %vm98, %v2861, 0
    %v2875 = vsel %vm98, %v2862, 0
    %v2878 = vsel %vm98, %v2863, 0
    %v2881 = vsel %vm98, %v2864, 0
    %v2884 = vsel %vm98, %v2865, 0
    %v2887 = vsel %vm98, %v2866, 0
    %v2890 = vsel %vm98, %v2867, 0
    %2892 = vmatpush.bf16.msra.mxu0 0
    %2893 = vmatpush.bf16.msra.mxu0 0
    %2894 = vmatpush.bf16.msra.mxu0 0
    %2895 = vmatpush.bf16.msra.mxu0 0
    %2896 = vmatpush.bf16.msra.mxu0 0
    %2897 = vmatpush.bf16.msra.mxu0 0
    %2898 = vmatpush.bf16.msra.mxu0 0
    %2899 = vmatpush.bf16.msra.mxu0 %v1282
    %2900 = vmatmul.bf16.gmra.mxu0 %v2869
    %v2901 = vpop.f32.mrf.mxu0
    %v2902 = vadd.f32 0.0, %v2901
    %v2903 = vpop.f32.mrf.mxu0
    %v2904 = vadd.f32 0.0, %v2903
    %2905 = vmatmul.bf16.gmra.mxu0 %v2872
    %v2906 = vpop.f32.mrf.mxu0
    %v2907 = vadd.f32 0.0, %v2906
    %v2908 = vpop.f32.mrf.mxu0
    %v2909 = vadd.f32 0.0, %v2908
    %2910 = vmatmul.bf16.gmra.mxu0 %v2875
    %v2911 = vpop.f32.mrf.mxu0
    %v2912 = vadd.f32 0.0, %v2911
    %v2913 = vpop.f32.mrf.mxu0
    %v2914 = vadd.f32 0.0, %v2913
    %2915 = vmatmul.bf16.gmra.mxu0 %v2878
    %v2916 = vpop.f32.mrf.mxu0
    %v2917 = vadd.f32 0.0, %v2916
    %v2918 = vpop.f32.mrf.mxu0
    %v2919 = vadd.f32 0.0, %v2918
    %2920 = vmatmul.bf16.gmra.mxu0 %v2881
    %v2921 = vpop.f32.mrf.mxu0
    %v2922 = vadd.f32 0.0, %v2921
    %v2923 = vpop.f32.mrf.mxu0
    %v2924 = vadd.f32 0.0, %v2923
    %2925 = vmatmul.bf16.gmra.mxu0 %v2884
    %v2926 = vpop.f32.mrf.mxu0
    %v2927 = vadd.f32 0.0, %v2926
    %v2928 = vpop.f32.mrf.mxu0
    %v2929 = vadd.f32 0.0, %v2928
    %2930 = vmatmul.bf16.gmra.mxu0 %v2887
    %v2931 = vpop.f32.mrf.mxu0
    %v2932 = vadd.f32 0.0, %v2931
    %v2933 = vpop.f32.mrf.mxu0
    %v2934 = vadd.f32 0.0, %v2933
    %2935 = vmatmul.bf16.gmra.mxu0 %v2890
    %v2936 = vpop.f32.mrf.mxu0
    %v2937 = vadd.f32 0.0, %v2936
    %v2938 = vpop.f32.mrf.mxu0
    %v2939 = vadd.f32 0.0, %v2938
    %2940 = vdwg.mxu0
    %v2941 = vadd.f32 %v2795, %v2902
    %v2942 = vadd.f32 %v2796, %v2904
    %v2943 = vadd.f32 %v2797, %v2907
    %v2944 = vadd.f32 %v2798, %v2909
    %v2945 = vadd.f32 %v2799, %v2912
    %v2946 = vadd.f32 %v2800, %v2914
    %v2947 = vadd.f32 %v2801, %v2917
    %v2948 = vadd.f32 %v2802, %v2919
    %v2949 = vadd.f32 %v2803, %v2922
    %v2950 = vadd.f32 %v2804, %v2924
    %v2951 = vadd.f32 %v2805, %v2927
    %v2952 = vadd.f32 %v2806, %v2929
    %v2953 = vadd.f32 %v2807, %v2932
    %v2954 = vadd.f32 %v2808, %v2934
    %v2955 = vadd.f32 %v2809, %v2937
    %v2956 = vadd.f32 %v2810, %v2939
    %v2957 = vmax.f32 %v2145, %v2941
    %v2958 = vmax.f32 %v2146, %v2942
    %v2959 = vmax.f32 %v2147, %v2943
    %v2960 = vmax.f32 %v2148, %v2944
    %v2961 = vmax.f32 %v2149, %v2945
    %v2962 = vmax.f32 %v2150, %v2946
    %v2963 = vmax.f32 %v2151, %v2947
    %v2964 = vmax.f32 %v2152, %v2948
    %v2965 = vmax.f32 %v2153, %v2949
    %v2966 = vmax.f32 %v2154, %v2950
    %v2967 = vmax.f32 %v2155, %v2951
    %v2968 = vmax.f32 %v2156, %v2952
    %v2969 = vmax.f32 %v2157, %v2953
    %v2970 = vmax.f32 %v2158, %v2954
    %v2971 = vmax.f32 %v2159, %v2955
    %v2972 = vmax.f32 %v2160, %v2956
    %2973 = vmatpush.bf16.msra.mxu0 0
    %2974 = vmatpush.bf16.msra.mxu0 0
    %2975 = vmatpush.bf16.msra.mxu0 0
    %2976 = vmatpush.bf16.msra.mxu0 0
    %2977 = vmatpush.bf16.msra.mxu0 0
    %2978 = vmatpush.bf16.msra.mxu0 0
    %2979 = vmatpush.bf16.msra.mxu0 0
    %2980 = vmatpush.bf16.msra.mxu0 %v125
    %2981 = vmatmul.bf16.gmra.mxu0 %v805
    %v2982 = vpop.f32.mrf.mxu0
    %v2983 = vadd.f32 0.0, %v2982
    %v2984 = vpop.f32.mrf.mxu0
    %v2985 = vadd.f32 0.0, %v2984
    %2986 = vmatmul.bf16.gmra.mxu0 %v808
    %v2987 = vpop.f32.mrf.mxu0
    %v2988 = vadd.f32 0.0, %v2987
    %v2989 = vpop.f32.mrf.mxu0
    %v2990 = vadd.f32 0.0, %v2989
    %2991 = vmatmul.bf16.gmra.mxu0 %v811
    %v2992 = vpop.f32.mrf.mxu0
    %v2993 = vadd.f32 0.0, %v2992
    %v2994 = vpop.f32.mrf.mxu0
    %v2995 = vadd.f32 0.0, %v2994
    %2996 = vmatmul.bf16.gmra.mxu0 %v814
    %v2997 = vpop.f32.mrf.mxu0
    %v2998 = vadd.f32 0.0, %v2997
    %v2999 = vpop.f32.mrf.mxu0
    %v3000 = vadd.f32 0.0, %v2999
    %3001 = vmatmul.bf16.gmra.mxu0 %v817
    %v3002 = vpop.f32.mrf.mxu0
    %v3003 = vadd.f32 0.0, %v3002
    %v3004 = vpop.f32.mrf.mxu0
    %v3005 = vadd.f32 0.0, %v3004
    %3006 = vmatmul.bf16.gmra.mxu0 %v820
    %v3007 = vpop.f32.mrf.mxu0
    %v3008 = vadd.f32 0.0, %v3007
    %v3009 = vpop.f32.mrf.mxu0
    %v3010 = vadd.f32 0.0, %v3009
    %3011 = vmatmul.bf16.gmra.mxu0 %v823
    %v3012 = vpop.f32.mrf.mxu0
    %v3013 = vadd.f32 0.0, %v3012
    %v3014 = vpop.f32.mrf.mxu0
    %v3015 = vadd.f32 0.0, %v3014
    %3016 = vmatmul.bf16.gmra.mxu0 %v826
    %v3017 = vpop.f32.mrf.mxu0
    %v3018 = vadd.f32 0.0, %v3017
    %v3019 = vpop.f32.mrf.mxu0
    %v3020 = vadd.f32 0.0, %v3019
    %3021 = vdwg.mxu0
    %3022 = vmatpush.bf16.msra.mxu0 0
    %3023 = vmatpush.bf16.msra.mxu0 0
    %3024 = vmatpush.bf16.msra.mxu0 0
    %3025 = vmatpush.bf16.msra.mxu0 0
    %3026 = vmatpush.bf16.msra.mxu0 0
    %3027 = vmatpush.bf16.msra.mxu0 0
    %3028 = vmatpush.bf16.msra.mxu0 0
    %3029 = vmatpush.bf16.msra.mxu0 %v241
    %3030 = vmatmul.bf16.gmra.mxu0 %v654
    %v3031 = vpop.f32.mrf.mxu0
    %v3032 = vadd.f32 %v2983, %v3031
    %v3033 = vpop.f32.mrf.mxu0
    %v3034 = vadd.f32 %v2985, %v3033
    %3035 = vmatmul.bf16.gmra.mxu0 %v657
    %v3036 = vpop.f32.mrf.mxu0
    %v3037 = vadd.f32 %v2988, %v3036
    %v3038 = vpop.f32.mrf.mxu0
    %v3039 = vadd.f32 %v2990, %v3038
    %3040 = vmatmul.bf16.gmra.mxu0 %v660
    %v3041 = vpop.f32.mrf.mxu0
    %v3042 = vadd.f32 %v2993, %v3041
    %v3043 = vpop.f32.mrf.mxu0
    %v3044 = vadd.f32 %v2995, %v3043
    %3045 = vmatmul.bf16.gmra.mxu0 %v663
    %v3046 = vpop.f32.mrf.mxu0
    %v3047 = vadd.f32 %v2998, %v3046
    %v3048 = vpop.f32.mrf.mxu0
    %v3049 = vadd.f32 %v3000, %v3048
    %3050 = vmatmul.bf16.gmra.mxu0 %v666
    %v3051 = vpop.f32.mrf.mxu0
    %v3052 = vadd.f32 %v3003, %v3051
    %v3053 = vpop.f32.mrf.mxu0
    %v3054 = vadd.f32 %v3005, %v3053
    %3055 = vmatmul.bf16.gmra.mxu0 %v669
    %v3056 = vpop.f32.mrf.mxu0
    %v3057 = vadd.f32 %v3008, %v3056
    %v3058 = vpop.f32.mrf.mxu0
    %v3059 = vadd.f32 %v3010, %v3058
    %3060 = vmatmul.bf16.gmra.mxu0 %v672
    %v3061 = vpop.f32.mrf.mxu0
    %v3062 = vadd.f32 %v3013, %v3061
    %v3063 = vpop.f32.mrf.mxu0
    %v3064 = vadd.f32 %v3015, %v3063
    %3065 = vmatmul.bf16.gmra.mxu0 %v675
    %v3066 = vpop.f32.mrf.mxu0
    %v3067 = vadd.f32 %v3018, %v3066
    %v3068 = vpop.f32.mrf.mxu0
    %v3069 = vadd.f32 %v3020, %v3068
    %3070 = vdwg.mxu0
    %3071 = vmatpush.bf16.msra.mxu0 0
    %3072 = vmatpush.bf16.msra.mxu0 0
    %3073 = vmatpush.bf16.msra.mxu0 0
    %3074 = vmatpush.bf16.msra.mxu0 0
    %3075 = vmatpush.bf16.msra.mxu0 0
    %3076 = vmatpush.bf16.msra.mxu0 0
    %3077 = vmatpush.bf16.msra.mxu0 0
    %3078 = vmatpush.bf16.msra.mxu0 %v376
    %3079 = vmatmul.bf16.gmra.mxu0 %v1781
    %v3080 = vpop.f32.mrf.mxu0
    %v3081 = vadd.f32 0.0, %v3080
    %v3082 = vpop.f32.mrf.mxu0
    %v3083 = vadd.f32 0.0, %v3082
    %3084 = vmatmul.bf16.gmra.mxu0 %v1784
    %v3085 = vpop.f32.mrf.mxu0
    %v3086 = vadd.f32 0.0, %v3085
    %v3087 = vpop.f32.mrf.mxu0
    %v3088 = vadd.f32 0.0, %v3087
    %3089 = vmatmul.bf16.gmra.mxu0 %v1787
    %v3090 = vpop.f32.mrf.mxu0
    %v3091 = vadd.f32 0.0, %v3090
    %v3092 = vpop.f32.mrf.mxu0
    %v3093 = vadd.f32 0.0, %v3092
    %3094 = vmatmul.bf16.gmra.mxu0 %v1790
    %v3095 = vpop.f32.mrf.mxu0
    %v3096 = vadd.f32 0.0, %v3095
    %v3097 = vpop.f32.mrf.mxu0
    %v3098 = vadd.f32 0.0, %v3097
    %3099 = vmatmul.bf16.gmra.mxu0 %v1793
    %v3100 = vpop.f32.mrf.mxu0
    %v3101 = vadd.f32 0.0, %v3100
    %v3102 = vpop.f32.mrf.mxu0
    %v3103 = vadd.f32 0.0, %v3102
    %3104 = vmatmul.bf16.gmra.mxu0 %v1796
    %v3105 = vpop.f32.mrf.mxu0
    %v3106 = vadd.f32 0.0, %v3105
    %v3107 = vpop.f32.mrf.mxu0
    %v3108 = vadd.f32 0.0, %v3107
    %3109 = vmatmul.bf16.gmra.mxu0 %v1799
    %v3110 = vpop.f32.mrf.mxu0
    %v3111 = vadd.f32 0.0, %v3110
    %v3112 = vpop.f32.mrf.mxu0
    %v3113 = vadd.f32 0.0, %v3112
    %3114 = vmatmul.bf16.gmra.mxu0 %v1802
    %v3115 = vpop.f32.mrf.mxu0
    %v3116 = vadd.f32 0.0, %v3115
    %v3117 = vpop.f32.mrf.mxu0
    %v3118 = vadd.f32 0.0, %v3117
    %3119 = vdwg.mxu0
    %v3120 = vadd.f32 %v3032, %v3081
    %v3121 = vadd.f32 %v3034, %v3083
    %v3122 = vadd.f32 %v3037, %v3086
    %v3123 = vadd.f32 %v3039, %v3088
    %v3124 = vadd.f32 %v3042, %v3091
    %v3125 = vadd.f32 %v3044, %v3093
    %v3126 = vadd.f32 %v3047, %v3096
    %v3127 = vadd.f32 %v3049, %v3098
    %v3128 = vadd.f32 %v3052, %v3101
    %v3129 = vadd.f32 %v3054, %v3103
    %v3130 = vadd.f32 %v3057, %v3106
    %v3131 = vadd.f32 %v3059, %v3108
    %v3132 = vadd.f32 %v3062, %v3111
    %v3133 = vadd.f32 %v3064, %v3113
    %v3134 = vadd.f32 %v3067, %v3116
    %v3135 = vadd.f32 %v3069, %v3118
    %3136 = vmatpush.bf16.msra.mxu0 0
    %3137 = vmatpush.bf16.msra.mxu0 0
    %3138 = vmatpush.bf16.msra.mxu0 0
    %3139 = vmatpush.bf16.msra.mxu0 0
    %3140 = vmatpush.bf16.msra.mxu0 0
    %3141 = vmatpush.bf16.msra.mxu0 0
    %3142 = vmatpush.bf16.msra.mxu0 0
    %3143 = vmatpush.bf16.msra.mxu0 %v527
    %3144 = vmatmul.bf16.gmra.mxu0 %v1107
    %v3145 = vpop.f32.mrf.mxu0
    %v3146 = vadd.f32 0.0, %v3145
    %v3147 = vpop.f32.mrf.mxu0
    %v3148 = vadd.f32 0.0, %v3147
    %3149 = vmatmul.bf16.gmra.mxu0 %v1110
    %v3150 = vpop.f32.mrf.mxu0
    %v3151 = vadd.f32 0.0, %v3150
    %v3152 = vpop.f32.mrf.mxu0
    %v3153 = vadd.f32 0.0, %v3152
    %3154 = vmatmul.bf16.gmra.mxu0 %v1113
    %v3155 = vpop.f32.mrf.mxu0
    %v3156 = vadd.f32 0.0, %v3155
    %v3157 = vpop.f32.mrf.mxu0
    %v3158 = vadd.f32 0.0, %v3157
    %3159 = vmatmul.bf16.gmra.mxu0 %v1116
    %v3160 = vpop.f32.mrf.mxu0
    %v3161 = vadd.f32 0.0, %v3160
    %v3162 = vpop.f32.mrf.mxu0
    %v3163 = vadd.f32 0.0, %v3162
    %3164 = vmatmul.bf16.gmra.mxu0 %v1119
    %v3165 = vpop.f32.mrf.mxu0
    %v3166 = vadd.f32 0.0, %v3165
    %v3167 = vpop.f32.mrf.mxu0
    %v3168 = vadd.f32 0.0, %v3167
    %3169 = vmatmul.bf16.gmra.mxu0 %v1122
    %v3170 = vpop.f32.mrf.mxu0
    %v3171 = vadd.f32 0.0, %v3170
    %v3172 = vpop.f32.mrf.mxu0
    %v3173 = vadd.f32 0.0, %v3172
    %3174 = vmatmul.bf16.gmra.mxu0 %v1125
    %v3175 = vpop.f32.mrf.mxu0
    %v3176 = vadd.f32 0.0, %v3175
    %v3177 = vpop.f32.mrf.mxu0
    %v3178 = vadd.f32 0.0, %v3177
    %3179 = vmatmul.bf16.gmra.mxu0 %v1128
    %v3180 = vpop.f32.mrf.mxu0
    %v3181 = vadd.f32 0.0, %v3180
    %v3182 = vpop.f32.mrf.mxu0
    %v3183 = vadd.f32 0.0, %v3182
    %3184 = vdwg.mxu0
    %v3185 = vadd.f32 %v3120, %v3146
    %v3186 = vadd.f32 %v3121, %v3148
    %v3187 = vadd.f32 %v3122, %v3151
    %v3188 = vadd.f32 %v3123, %v3153
    %v3189 = vadd.f32 %v3124, %v3156
    %v3190 = vadd.f32 %v3125, %v3158
    %v3191 = vadd.f32 %v3126, %v3161
    %v3192 = vadd.f32 %v3127, %v3163
    %v3193 = vadd.f32 %v3128, %v3166
    %v3194 = vadd.f32 %v3129, %v3168
    %v3195 = vadd.f32 %v3130, %v3171
    %v3196 = vadd.f32 %v3131, %v3173
    %v3197 = vadd.f32 %v3132, %v3176
    %v3198 = vadd.f32 %v3133, %v3178
    %v3199 = vadd.f32 %v3134, %v3181
    %v3200 = vadd.f32 %v3135, %v3183
    %3201 = vmatpush.bf16.msra.mxu0 0
    %3202 = vmatpush.bf16.msra.mxu0 0
    %3203 = vmatpush.bf16.msra.mxu0 0
    %3204 = vmatpush.bf16.msra.mxu0 0
    %3205 = vmatpush.bf16.msra.mxu0 0
    %3206 = vmatpush.bf16.msra.mxu0 0
    %3207 = vmatpush.bf16.msra.mxu0 0
    %3208 = vmatpush.bf16.msra.mxu0 %v678
    %3209 = vmatmul.bf16.gmra.mxu0 %v1258
    %v3210 = vpop.f32.mrf.mxu0
    %v3211 = vadd.f32 0.0, %v3210
    %v3212 = vpop.f32.mrf.mxu0
    %v3213 = vadd.f32 0.0, %v3212
    %3214 = vmatmul.bf16.gmra.mxu0 %v1261
    %v3215 = vpop.f32.mrf.mxu0
    %v3216 = vadd.f32 0.0, %v3215
    %v3217 = vpop.f32.mrf.mxu0
    %v3218 = vadd.f32 0.0, %v3217
    %3219 = vmatmul.bf16.gmra.mxu0 %v1264
    %v3220 = vpop.f32.mrf.mxu0
    %v3221 = vadd.f32 0.0, %v3220
    %v3222 = vpop.f32.mrf.mxu0
    %v3223 = vadd.f32 0.0, %v3222
    %3224 = vmatmul.bf16.gmra.mxu0 %v1267
    %v3225 = vpop.f32.mrf.mxu0
    %v3226 = vadd.f32 0.0, %v3225
    %v3227 = vpop.f32.mrf.mxu0
    %v3228 = vadd.f32 0.0, %v3227
    %3229 = vmatmul.bf16.gmra.mxu0 %v1270
    %v3230 = vpop.f32.mrf.mxu0
    %v3231 = vadd.f32 0.0, %v3230
    %v3232 = vpop.f32.mrf.mxu0
    %v3233 = vadd.f32 0.0, %v3232
    %3234 = vmatmul.bf16.gmra.mxu0 %v1273
    %v3235 = vpop.f32.mrf.mxu0
    %v3236 = vadd.f32 0.0, %v3235
    %v3237 = vpop.f32.mrf.mxu0
    %v3238 = vadd.f32 0.0, %v3237
    %3239 = vmatmul.bf16.gmra.mxu0 %v1276
    %v3240 = vpop.f32.mrf.mxu0
    %v3241 = vadd.f32 0.0, %v3240
    %v3242 = vpop.f32.mrf.mxu0
    %v3243 = vadd.f32 0.0, %v3242
    %3244 = vmatmul.bf16.gmra.mxu0 %v1279
    %v3245 = vpop.f32.mrf.mxu0
    %v3246 = vadd.f32 0.0, %v3245
    %v3247 = vpop.f32.mrf.mxu0
    %v3248 = vadd.f32 0.0, %v3247
    %3249 = vdwg.mxu0
    %v3250 = vadd.f32 %v3185, %v3211
    %v3251 = vadd.f32 %v3186, %v3213
    %v3252 = vadd.f32 %v3187, %v3216
    %v3253 = vadd.f32 %v3188, %v3218
    %v3254 = vadd.f32 %v3189, %v3221
    %v3255 = vadd.f32 %v3190, %v3223
    %v3256 = vadd.f32 %v3191, %v3226
    %v3257 = vadd.f32 %v3192, %v3228
    %v3258 = vadd.f32 %v3193, %v3231
    %v3259 = vadd.f32 %v3194, %v3233
    %v3260 = vadd.f32 %v3195, %v3236
    %v3261 = vadd.f32 %v3196, %v3238
    %v3262 = vadd.f32 %v3197, %v3241
    %v3263 = vadd.f32 %v3198, %v3243
    %v3264 = vadd.f32 %v3199, %v3246
    %v3265 = vadd.f32 %v3200, %v3248
    %3266 = vmatpush.bf16.msra.mxu0 0
    %3267 = vmatpush.bf16.msra.mxu0 0
    %3268 = vmatpush.bf16.msra.mxu0 0
    %3269 = vmatpush.bf16.msra.mxu0 0
    %3270 = vmatpush.bf16.msra.mxu0 0
    %3271 = vmatpush.bf16.msra.mxu0 0
    %3272 = vmatpush.bf16.msra.mxu0 0
    %3273 = vmatpush.bf16.msra.mxu0 %v829
    %3274 = vmatmul.bf16.gmra.mxu0 %v2057
    %v3275 = vpop.f32.mrf.mxu0
    %v3276 = vadd.f32 0.0, %v3275
    %v3277 = vpop.f32.mrf.mxu0
    %v3278 = vadd.f32 0.0, %v3277
    %3279 = vmatmul.bf16.gmra.mxu0 %v2060
    %v3280 = vpop.f32.mrf.mxu0
    %v3281 = vadd.f32 0.0, %v3280
    %v3282 = vpop.f32.mrf.mxu0
    %v3283 = vadd.f32 0.0, %v3282
    %3284 = vmatmul.bf16.gmra.mxu0 %v2063
    %v3285 = vpop.f32.mrf.mxu0
    %v3286 = vadd.f32 0.0, %v3285
    %v3287 = vpop.f32.mrf.mxu0
    %v3288 = vadd.f32 0.0, %v3287
    %3289 = vmatmul.bf16.gmra.mxu0 %v2066
    %v3290 = vpop.f32.mrf.mxu0
    %v3291 = vadd.f32 0.0, %v3290
    %v3292 = vpop.f32.mrf.mxu0
    %v3293 = vadd.f32 0.0, %v3292
    %3294 = vmatmul.bf16.gmra.mxu0 %v2069
    %v3295 = vpop.f32.mrf.mxu0
    %v3296 = vadd.f32 0.0, %v3295
    %v3297 = vpop.f32.mrf.mxu0
    %v3298 = vadd.f32 0.0, %v3297
    %3299 = vmatmul.bf16.gmra.mxu0 %v2072
    %v3300 = vpop.f32.mrf.mxu0
    %v3301 = vadd.f32 0.0, %v3300
    %v3302 = vpop.f32.mrf.mxu0
    %v3303 = vadd.f32 0.0, %v3302
    %3304 = vmatmul.bf16.gmra.mxu0 %v2075
    %v3305 = vpop.f32.mrf.mxu0
    %v3306 = vadd.f32 0.0, %v3305
    %v3307 = vpop.f32.mrf.mxu0
    %v3308 = vadd.f32 0.0, %v3307
    %3309 = vmatmul.bf16.gmra.mxu0 %v2078
    %v3310 = vpop.f32.mrf.mxu0
    %v3311 = vadd.f32 0.0, %v3310
    %v3312 = vpop.f32.mrf.mxu0
    %v3313 = vadd.f32 0.0, %v3312
    %3314 = vdwg.mxu0
    %v3315 = vadd.f32 %v3250, %v3276
    %v3316 = vadd.f32 %v3251, %v3278
    %v3317 = vadd.f32 %v3252, %v3281
    %v3318 = vadd.f32 %v3253, %v3283
    %v3319 = vadd.f32 %v3254, %v3286
    %v3320 = vadd.f32 %v3255, %v3288
    %v3321 = vadd.f32 %v3256, %v3291
    %v3322 = vadd.f32 %v3257, %v3293
    %v3323 = vadd.f32 %v3258, %v3296
    %v3324 = vadd.f32 %v3259, %v3298
    %v3325 = vadd.f32 %v3260, %v3301
    %v3326 = vadd.f32 %v3261, %v3303
    %v3327 = vadd.f32 %v3262, %v3306
    %v3328 = vadd.f32 %v3263, %v3308
    %v3329 = vadd.f32 %v3264, %v3311
    %v3330 = vadd.f32 %v3265, %v3313
    %3331 = vmatpush.bf16.msra.mxu0 0
    %3332 = vmatpush.bf16.msra.mxu0 0
    %3333 = vmatpush.bf16.msra.mxu0 0
    %3334 = vmatpush.bf16.msra.mxu0 0
    %3335 = vmatpush.bf16.msra.mxu0 0
    %3336 = vmatpush.bf16.msra.mxu0 0
    %3337 = vmatpush.bf16.msra.mxu0 0
    %3338 = vmatpush.bf16.msra.mxu0 %v980
    %3339 = vmatmul.bf16.gmra.mxu0 %v2723
    %v3340 = vpop.f32.mrf.mxu0
    %v3341 = vadd.f32 0.0, %v3340
    %v3342 = vpop.f32.mrf.mxu0
    %v3343 = vadd.f32 0.0, %v3342
    %3344 = vmatmul.bf16.gmra.mxu0 %v2726
    %v3345 = vpop.f32.mrf.mxu0
    %v3346 = vadd.f32 0.0, %v3345
    %v3347 = vpop.f32.mrf.mxu0
    %v3348 = vadd.f32 0.0, %v3347
    %3349 = vmatmul.bf16.gmra.mxu0 %v2729
    %v3350 = vpop.f32.mrf.mxu0
    %v3351 = vadd.f32 0.0, %v3350
    %v3352 = vpop.f32.mrf.mxu0
    %v3353 = vadd.f32 0.0, %v3352
    %3354 = vmatmul.bf16.gmra.mxu0 %v2732
    %v3355 = vpop.f32.mrf.mxu0
    %v3356 = vadd.f32 0.0, %v3355
    %v3357 = vpop.f32.mrf.mxu0
    %v3358 = vadd.f32 0.0, %v3357
    %3359 = vmatmul.bf16.gmra.mxu0 %v2735
    %v3360 = vpop.f32.mrf.mxu0
    %v3361 = vadd.f32 0.0, %v3360
    %v3362 = vpop.f32.mrf.mxu0
    %v3363 = vadd.f32 0.0, %v3362
    %3364 = vmatmul.bf16.gmra.mxu0 %v2738
    %v3365 = vpop.f32.mrf.mxu0
    %v3366 = vadd.f32 0.0, %v3365
    %v3367 = vpop.f32.mrf.mxu0
    %v3368 = vadd.f32 0.0, %v3367
    %3369 = vmatmul.bf16.gmra.mxu0 %v2741
    %v3370 = vpop.f32.mrf.mxu0
    %v3371 = vadd.f32 0.0, %v3370
    %v3372 = vpop.f32.mrf.mxu0
    %v3373 = vadd.f32 0.0, %v3372
    %3374 = vmatmul.bf16.gmra.mxu0 %v2744
    %v3375 = vpop.f32.mrf.mxu0
    %v3376 = vadd.f32 0.0, %v3375
    %v3377 = vpop.f32.mrf.mxu0
    %v3378 = vadd.f32 0.0, %v3377
    %3379 = vdwg.mxu0
    %v3380 = vadd.f32 %v3315, %v3341
    %v3381 = vadd.f32 %v3316, %v3343
    %v3382 = vadd.f32 %v3317, %v3346
    %v3383 = vadd.f32 %v3318, %v3348
    %v3384 = vadd.f32 %v3319, %v3351
    %v3385 = vadd.f32 %v3320, %v3353
    %v3386 = vadd.f32 %v3321, %v3356
    %v3387 = vadd.f32 %v3322, %v3358
    %v3388 = vadd.f32 %v3323, %v3361
    %v3389 = vadd.f32 %v3324, %v3363
    %v3390 = vadd.f32 %v3325, %v3366
    %v3391 = vadd.f32 %v3326, %v3368
    %v3392 = vadd.f32 %v3327, %v3371
    %v3393 = vadd.f32 %v3328, %v3373
    %v3394 = vadd.f32 %v3329, %v3376
    %v3395 = vadd.f32 %v3330, %v3378
    %3396 = vmatpush.bf16.msra.mxu0 0
    %3397 = vmatpush.bf16.msra.mxu0 0
    %3398 = vmatpush.bf16.msra.mxu0 0
    %3399 = vmatpush.bf16.msra.mxu0 0
    %3400 = vmatpush.bf16.msra.mxu0 0
    %3401 = vmatpush.bf16.msra.mxu0 0
    %3402 = vmatpush.bf16.msra.mxu0 0
    %3403 = vmatpush.bf16.msra.mxu0 %v1131
    %3404 = vmatmul.bf16.gmra.mxu0 %v2869
    %v3405 = vpop.f32.mrf.mxu0
    %v3406 = vadd.f32 0.0, %v3405
    %v3407 = vpop.f32.mrf.mxu0
    %v3408 = vadd.f32 0.0, %v3407
    %3409 = vmatmul.bf16.gmra.mxu0 %v2872
    %v3410 = vpop.f32.mrf.mxu0
    %v3411 = vadd.f32 0.0, %v3410
    %v3412 = vpop.f32.mrf.mxu0
    %v3413 = vadd.f32 0.0, %v3412
    %3414 = vmatmul.bf16.gmra.mxu0 %v2875
    %v3415 = vpop.f32.mrf.mxu0
    %v3416 = vadd.f32 0.0, %v3415
    %v3417 = vpop.f32.mrf.mxu0
    %v3418 = vadd.f32 0.0, %v3417
    %3419 = vmatmul.bf16.gmra.mxu0 %v2878
    %v3420 = vpop.f32.mrf.mxu0
    %v3421 = vadd.f32 0.0, %v3420
    %v3422 = vpop.f32.mrf.mxu0
    %v3423 = vadd.f32 0.0, %v3422
    %3424 = vmatmul.bf16.gmra.mxu0 %v2881
    %v3425 = vpop.f32.mrf.mxu0
    %v3426 = vadd.f32 0.0, %v3425
    %v3427 = vpop.f32.mrf.mxu0
    %v3428 = vadd.f32 0.0, %v3427
    %3429 = vmatmul.bf16.gmra.mxu0 %v2884
    %v3430 = vpop.f32.mrf.mxu0
    %v3431 = vadd.f32 0.0, %v3430
    %v3432 = vpop.f32.mrf.mxu0
    %v3433 = vadd.f32 0.0, %v3432
    %3434 = vmatmul.bf16.gmra.mxu0 %v2887
    %v3435 = vpop.f32.mrf.mxu0
    %v3436 = vadd.f32 0.0, %v3435
    %v3437 = vpop.f32.mrf.mxu0
    %v3438 = vadd.f32 0.0, %v3437
    %3439 = vmatmul.bf16.gmra.mxu0 %v2890
    %v3440 = vpop.f32.mrf.mxu0
    %v3441 = vadd.f32 0.0, %v3440
    %v3442 = vpop.f32.mrf.mxu0
    %v3443 = vadd.f32 0.0, %v3442
    %3444 = vdwg.mxu0
    %v3445 = vadd.f32 %v3380, %v3406
    %v3446 = vadd.f32 %v3381, %v3408
    %v3447 = vadd.f32 %v3382, %v3411
    %v3448 = vadd.f32 %v3383, %v3413
    %v3449 = vadd.f32 %v3384, %v3416
    %v3450 = vadd.f32 %v3385, %v3418
    %v3451 = vadd.f32 %v3386, %v3421
    %v3452 = vadd.f32 %v3387, %v3423
    %v3453 = vadd.f32 %v3388, %v3426
    %v3454 = vadd.f32 %v3389, %v3428
    %v3455 = vadd.f32 %v3390, %v3431
    %v3456 = vadd.f32 %v3391, %v3433
    %v3457 = vadd.f32 %v3392, %v3436
    %v3458 = vadd.f32 %v3393, %v3438
    %v3459 = vadd.f32 %v3394, %v3441
    %v3460 = vadd.f32 %v3395, %v3443
    %s3461 = scalar_lea.vmem %s0, 960
    %v3462 = vld [vmem:[%s3461] sm:$0xf]
    %v3463 = vld [vmem:[%s3461 + $0x4] sm:$0xf]
    %v3464 = vld [vmem:[%s3461 + $0x8] sm:$0xf]
    %v3465 = vld [vmem:[%s3461 + $0xc] sm:$0xf]
    %v3466 = vld [vmem:[%s3461 + $0x10] sm:$0xf]
    %v3467 = vld [vmem:[%s3461 + $0x14] sm:$0xf]
    %v3468 = vld [vmem:[%s3461 + $0x18] sm:$0xf]
    %v3469 = vld [vmem:[%s3461 + $0x1c] sm:$0xf]
    %v3470 = vld [vmem:[%s3461 + $0x20] sm:$0xf]
    %v3471 = vld [vmem:[%s3461 + $0x24] sm:$0xf]
    %v3472 = vld [vmem:[%s3461 + $0x28] sm:$0xf]
    %v3473 = vld [vmem:[%s3461 + $0x2c] sm:$0xf]
    %v3474 = vld [vmem:[%s3461 + $0x30] sm:$0xf]
    %v3475 = vld [vmem:[%s3461 + $0x34] sm:$0xf]
    %v3476 = vld [vmem:[%s3461 + $0x38] sm:$0xf]
    %v3477 = vld [vmem:[%s3461 + $0x3c] sm:$0xf]
    %v3494 = vunpack.c.l.b16 %v3462
    %v3495 = vunpack.c.l.b16 %v3463
    %v3496 = vunpack.c.l.b16 %v3464
    %v3497 = vunpack.c.l.b16 %v3465
    %v3498 = vunpack.c.l.b16 %v3466
    %v3499 = vunpack.c.l.b16 %v3467
    %v3500 = vunpack.c.l.b16 %v3468
    %v3501 = vunpack.c.l.b16 %v3469
    %v3502 = vunpack.c.l.b16 %v3470
    %v3503 = vunpack.c.l.b16 %v3471
    %v3504 = vunpack.c.l.b16 %v3472
    %v3505 = vunpack.c.l.b16 %v3473
    %v3506 = vunpack.c.l.b16 %v3474
    %v3507 = vunpack.c.l.b16 %v3475
    %v3508 = vunpack.c.l.b16 %v3476
    %v3509 = vunpack.c.l.b16 %v3477
    %v3510 = vpack.c.b16 %v3495, %v3494
    %v3511 = vpack.c.b16 %v3497, %v3496
    %v3512 = vpack.c.b16 %v3499, %v3498
    %v3513 = vpack.c.b16 %v3501, %v3500
    %v3514 = vpack.c.b16 %v3503, %v3502
    %v3515 = vpack.c.b16 %v3505, %v3504
    %v3516 = vpack.c.b16 %v3507, %v3506
    %v3517 = vpack.c.b16 %v3509, %v3508
    %v3519 = vsel %vm98, %v3510, 0
    %v3522 = vsel %vm98, %v3511, 0
    %v3525 = vsel %vm98, %v3512, 0
    %v3528 = vsel %vm98, %v3513, 0
    %v3531 = vsel %vm98, %v3514, 0
    %v3534 = vsel %vm98, %v3515, 0
    %v3537 = vsel %vm98, %v3516, 0
    %v3540 = vsel %vm98, %v3517, 0
    %3542 = vmatpush.bf16.msra.mxu0 0
    %3543 = vmatpush.bf16.msra.mxu0 0
    %3544 = vmatpush.bf16.msra.mxu0 0
    %3545 = vmatpush.bf16.msra.mxu0 0
    %3546 = vmatpush.bf16.msra.mxu0 0
    %3547 = vmatpush.bf16.msra.mxu0 0
    %3548 = vmatpush.bf16.msra.mxu0 0
    %3549 = vmatpush.bf16.msra.mxu0 %v1282
    %3550 = vmatmul.bf16.gmra.mxu0 %v3519
    %v3551 = vpop.f32.mrf.mxu0
    %v3552 = vadd.f32 0.0, %v3551
    %v3553 = vpop.f32.mrf.mxu0
    %v3554 = vadd.f32 0.0, %v3553
    %3555 = vmatmul.bf16.gmra.mxu0 %v3522
    %v3556 = vpop.f32.mrf.mxu0
    %v3557 = vadd.f32 0.0, %v3556
    %v3558 = vpop.f32.mrf.mxu0
    %v3559 = vadd.f32 0.0, %v3558
    %3560 = vmatmul.bf16.gmra.mxu0 %v3525
    %v3561 = vpop.f32.mrf.mxu0
    %v3562 = vadd.f32 0.0, %v3561
    %v3563 = vpop.f32.mrf.mxu0
    %v3564 = vadd.f32 0.0, %v3563
    %3565 = vmatmul.bf16.gmra.mxu0 %v3528
    %v3566 = vpop.f32.mrf.mxu0
    %v3567 = vadd.f32 0.0, %v3566
    %v3568 = vpop.f32.mrf.mxu0
    %v3569 = vadd.f32 0.0, %v3568
    %3570 = vmatmul.bf16.gmra.mxu0 %v3531
    %v3571 = vpop.f32.mrf.mxu0
    %v3572 = vadd.f32 0.0, %v3571
    %v3573 = vpop.f32.mrf.mxu0
    %v3574 = vadd.f32 0.0, %v3573
    %3575 = vmatmul.bf16.gmra.mxu0 %v3534
    %v3576 = vpop.f32.mrf.mxu0
    %v3577 = vadd.f32 0.0, %v3576
    %v3578 = vpop.f32.mrf.mxu0
    %v3579 = vadd.f32 0.0, %v3578
    %3580 = vmatmul.bf16.gmra.mxu0 %v3537
    %v3581 = vpop.f32.mrf.mxu0
    %v3582 = vadd.f32 0.0, %v3581
    %v3583 = vpop.f32.mrf.mxu0
    %v3584 = vadd.f32 0.0, %v3583
    %3585 = vmatmul.bf16.gmra.mxu0 %v3540
    %v3586 = vpop.f32.mrf.mxu0
    %v3587 = vadd.f32 0.0, %v3586
    %v3588 = vpop.f32.mrf.mxu0
    %v3589 = vadd.f32 0.0, %v3588
    %3590 = vdwg.mxu0
    %v3591 = vadd.f32 %v3445, %v3552
    %v3592 = vadd.f32 %v3446, %v3554
    %v3593 = vadd.f32 %v3447, %v3557
    %v3594 = vadd.f32 %v3448, %v3559
    %v3595 = vadd.f32 %v3449, %v3562
    %v3596 = vadd.f32 %v3450, %v3564
    %v3597 = vadd.f32 %v3451, %v3567
    %v3598 = vadd.f32 %v3452, %v3569
    %v3599 = vadd.f32 %v3453, %v3572
    %v3600 = vadd.f32 %v3454, %v3574
    %v3601 = vadd.f32 %v3455, %v3577
    %v3602 = vadd.f32 %v3456, %v3579
    %v3603 = vadd.f32 %v3457, %v3582
    %v3604 = vadd.f32 %v3458, %v3584
    %v3605 = vadd.f32 %v3459, %v3587
    %v3606 = vadd.f32 %v3460, %v3589
    %v3607 = vmax.f32 %v2957, %v3591
    %v3608 = vmax.f32 %v2958, %v3592
    %v3609 = vmax.f32 %v2959, %v3593
    %v3610 = vmax.f32 %v2960, %v3594
    %v3611 = vmax.f32 %v2961, %v3595
    %v3612 = vmax.f32 %v2962, %v3596
    %v3613 = vmax.f32 %v2963, %v3597
    %v3614 = vmax.f32 %v2964, %v3598
    %v3615 = vmax.f32 %v2965, %v3599
    %v3616 = vmax.f32 %v2966, %v3600
    %v3617 = vmax.f32 %v2967, %v3601
    %v3618 = vmax.f32 %v2968, %v3602
    %v3619 = vmax.f32 %v2969, %v3603
    %v3620 = vmax.f32 %v2970, %v3604
    %v3621 = vmax.f32 %v2971, %v3605
    %v3622 = vmax.f32 %v2972, %v3606
    %v3623 = vld [vmem:[%s2] sm:$0x1]
    %v3625 = vperm.slane %v3623, 0
    %v3627 = vadd.f32 %v3607, %v3625
    %v3628 = vadd.f32 %v3608, %v3625
    %v3629 = vadd.f32 %v3609, %v3625
    %v3630 = vadd.f32 %v3610, %v3625
    %v3631 = vadd.f32 %v3611, %v3625
    %v3632 = vadd.f32 %v3612, %v3625
    %v3633 = vadd.f32 %v3613, %v3625
    %v3634 = vadd.f32 %v3614, %v3625
    %v3635 = vadd.f32 %v3615, %v3625
    %v3636 = vadd.f32 %v3616, %v3625
    %v3637 = vadd.f32 %v3617, %v3625
    %v3638 = vadd.f32 %v3618, %v3625
    %v3639 = vadd.f32 %v3619, %v3625
    %v3640 = vadd.f32 %v3620, %v3625
    %v3641 = vadd.f32 %v3621, %v3625
    %v3642 = vadd.f32 %v3622, %v3625
    %v3643 = vadd.f32 %v3627, %v3628
    %v3644 = vadd.f32 %v3643, %v3629
    %v3645 = vadd.f32 %v3644, %v3630
    %v3646 = vadd.f32 %v3645, %v3631
    %v3647 = vadd.f32 %v3646, %v3632
    %v3648 = vadd.f32 %v3647, %v3633
    %v3649 = vadd.f32 %v3648, %v3634
    %v3650 = vadd.f32 %v3649, %v3635
    %v3651 = vadd.f32 %v3650, %v3636
    %v3652 = vadd.f32 %v3651, %v3637
    %v3653 = vadd.f32 %v3652, %v3638
    %v3654 = vadd.f32 %v3653, %v3639
    %v3655 = vadd.f32 %v3654, %v3640
    %v3656 = vadd.f32 %v3655, %v3641
    %v3657 = vadd.f32 %v3656, %v3642
    %v3658 = vrot.slane %v3657, 4
    %v3659 = vadd.f32 %v3657, %v3658
    %v3660 = vrot.slane %v3659, 2
    %v3661 = vadd.f32 %v3659, %v3660
    %v3662 = vrot.slane %v3661, 1
    %v3663 = vadd.f32 %v3661, %v3662
    %v3664 = vmul.f32 %v3663, 0.0078125
    %v3665 = vsub.f32 %v3627, %v3664
    %v3666 = vsub.f32 %v3628, %v3664
    %v3667 = vsub.f32 %v3629, %v3664
    %v3668 = vsub.f32 %v3630, %v3664
    %v3669 = vsub.f32 %v3631, %v3664
    %v3670 = vsub.f32 %v3632, %v3664
    %v3671 = vsub.f32 %v3633, %v3664
    %v3672 = vsub.f32 %v3634, %v3664
    %v3673 = vsub.f32 %v3635, %v3664
    %v3674 = vsub.f32 %v3636, %v3664
    %v3675 = vsub.f32 %v3637, %v3664
    %v3676 = vsub.f32 %v3638, %v3664
    %v3677 = vsub.f32 %v3639, %v3664
    %v3678 = vsub.f32 %v3640, %v3664
    %v3679 = vsub.f32 %v3641, %v3664
    %v3680 = vsub.f32 %v3642, %v3664
    %v3681 = vmul.f32 %v3665, %v3665
    %v3682 = vmul.f32 %v3666, %v3666
    %v3683 = vmul.f32 %v3667, %v3667
    %v3684 = vmul.f32 %v3668, %v3668
    %v3685 = vmul.f32 %v3669, %v3669
    %v3686 = vmul.f32 %v3670, %v3670
    %v3687 = vmul.f32 %v3671, %v3671
    %v3688 = vmul.f32 %v3672, %v3672
    %v3689 = vmul.f32 %v3673, %v3673
    %v3690 = vmul.f32 %v3674, %v3674
    %v3691 = vmul.f32 %v3675, %v3675
    %v3692 = vmul.f32 %v3676, %v3676
    %v3693 = vmul.f32 %v3677, %v3677
    %v3694 = vmul.f32 %v3678, %v3678
    %v3695 = vmul.f32 %v3679, %v3679
    %v3696 = vmul.f32 %v3680, %v3680
    %v3697 = vadd.f32 %v3681, %v3682
    %v3698 = vadd.f32 %v3697, %v3683
    %v3699 = vadd.f32 %v3698, %v3684
    %v3700 = vadd.f32 %v3699, %v3685
    %v3701 = vadd.f32 %v3700, %v3686
    %v3702 = vadd.f32 %v3701, %v3687
    %v3703 = vadd.f32 %v3702, %v3688
    %v3704 = vadd.f32 %v3703, %v3689
    %v3705 = vadd.f32 %v3704, %v3690
    %v3706 = vadd.f32 %v3705, %v3691
    %v3707 = vadd.f32 %v3706, %v3692
    %v3708 = vadd.f32 %v3707, %v3693
    %v3709 = vadd.f32 %v3708, %v3694
    %v3710 = vadd.f32 %v3709, %v3695
    %v3711 = vadd.f32 %v3710, %v3696
    %v3712 = vrot.slane %v3711, 4
    %v3713 = vadd.f32 %v3711, %v3712
    %v3714 = vrot.slane %v3713, 2
    %v3715 = vadd.f32 %v3713, %v3714
    %v3716 = vrot.slane %v3715, 1
    %v3717 = vadd.f32 %v3715, %v3716
    %v3718 = vmul.f32 %v3717, 0.0078125
    %v3719 = vld [vmem:[%s3] sm:$0x1]
    %v3720 = vadd.f32 %v3718, 1e-05
    %v3721 = vrsqrt.pop %v3720
    %v3722 = vmul.f32 %v3721, %v3720
    %v3723 = vmul.f32 %v3722, %v3721
    %v3724 = vmul.f32 0.5, %v3723
    %v3725 = vsub.f32 1.5, %v3724
    %v3726 = vmul.f32 %v3721, %v3725
    %vm3727 = vweird.f32 %v3720
    %vm3728 = vweird.f32 %v3721
    %vm3729 = vmor %vm3727, %vm3728
    %v3730 = vsel %vm3729, %v3721, %v3726
    %v3731 = vmul.f32 %v3719, %v3730
    %v3733 = vperm.slane %v3731, 0
    %v3735 = vmul.f32 %v3665, %v3733
    %v3736 = vmul.f32 %v3666, %v3733
    %v3737 = vmul.f32 %v3667, %v3733
    %v3738 = vmul.f32 %v3668, %v3733
    %v3739 = vmul.f32 %v3669, %v3733
    %v3740 = vmul.f32 %v3670, %v3733
    %v3741 = vmul.f32 %v3671, %v3733
    %v3742 = vmul.f32 %v3672, %v3733
    %v3743 = vmul.f32 %v3673, %v3733
    %v3744 = vmul.f32 %v3674, %v3733
    %v3745 = vmul.f32 %v3675, %v3733
    %v3746 = vmul.f32 %v3676, %v3733
    %v3747 = vmul.f32 %v3677, %v3733
    %v3748 = vmul.f32 %v3678, %v3733
    %v3749 = vmul.f32 %v3679, %v3733
    %v3750 = vmul.f32 %v3680, %v3733
    %v3751 = vld [vmem:[%s4] sm:$0x1]
    %v3753 = vperm.slane %v3751, 0
    %v3755 = vadd.f32 %v3735, %v3753
    %v3756 = vadd.f32 %v3736, %v3753
    %v3757 = vadd.f32 %v3737, %v3753
    %v3758 = vadd.f32 %v3738, %v3753
    %v3759 = vadd.f32 %v3739, %v3753
    %v3760 = vadd.f32 %v3740, %v3753
    %v3761 = vadd.f32 %v3741, %v3753
    %v3762 = vadd.f32 %v3742, %v3753
    %v3763 = vadd.f32 %v3743, %v3753
    %v3764 = vadd.f32 %v3744, %v3753
    %v3765 = vadd.f32 %v3745, %v3753
    %v3766 = vadd.f32 %v3746, %v3753
    %v3767 = vadd.f32 %v3747, %v3753
    %v3768 = vadd.f32 %v3748, %v3753
    %v3769 = vadd.f32 %v3749, %v3753
    %v3770 = vadd.f32 %v3750, %v3753
    %v3771 = vmax.f32 %v3755, 0.0
    %v3772 = vmax.f32 %v3756, 0.0
    %v3773 = vmax.f32 %v3757, 0.0
    %v3774 = vmax.f32 %v3758, 0.0
    %v3775 = vmax.f32 %v3759, 0.0
    %v3776 = vmax.f32 %v3760, 0.0
    %v3777 = vmax.f32 %v3761, 0.0
    %v3778 = vmax.f32 %v3762, 0.0
    %v3779 = vmax.f32 %v3763, 0.0
    %v3780 = vmax.f32 %v3764, 0.0
    %v3781 = vmax.f32 %v3765, 0.0
    %v3782 = vmax.f32 %v3766, 0.0
    %v3783 = vmax.f32 %v3767, 0.0
    %v3784 = vmax.f32 %v3768, 0.0
    %v3785 = vmax.f32 %v3769, 0.0
    %v3786 = vmax.f32 %v3770, 0.0
    %3787 = vst [vmem:[#allocation2] sm:$0xff] %v3771
    %3788 = vst [vmem:[#allocation2 + $0x8] sm:$0xff] %v3772
    %3789 = vst [vmem:[#allocation2 + $0x10] sm:$0xff] %v3773
    %3790 = vst [vmem:[#allocation2 + $0x18] sm:$0xff] %v3774
    %3791 = vst [vmem:[#allocation2 + $0x20] sm:$0xff] %v3775
    %3792 = vst [vmem:[#allocation2 + $0x28] sm:$0xff] %v3776
    %3793 = vst [vmem:[#allocation2 + $0x30] sm:$0xff] %v3777
    %3794 = vst [vmem:[#allocation2 + $0x38] sm:$0xff] %v3778
    %3795 = vst [vmem:[#allocation2 + $0x40] sm:$0xff] %v3779
    %3796 = vst [vmem:[#allocation2 + $0x48] sm:$0xff] %v3780
    %3797 = vst [vmem:[#allocation2 + $0x50] sm:$0xff] %v3781
    %3798 = vst [vmem:[#allocation2 + $0x58] sm:$0xff] %v3782
    %3799 = vst [vmem:[#allocation2 + $0x60] sm:$0xff] %v3783
    %3800 = vst [vmem:[#allocation2 + $0x68] sm:$0xff] %v3784
    %3801 = vst [vmem:[#allocation2 + $0x70] sm:$0xff] %v3785
    %3802 = vst [vmem:[#allocation2 + $0x78] sm:$0xff] %v3786
    // Predicated region
    $region22: #{conv2d_block_forward.1} parent=1 // pred_check
      _
    $region23: #{conv2d_block_forward.1} parent=1 // pred_check_branch
      %3804 = sbr.rel (0) target = $region25
    $region24: #{conv2d_block_forward.1} parent=1 // pred_region
      %3806 = vsyncadd [#allocation3], 0
      %s3807 = sshll.u32 [#allocation2], 4
      %s3808 = int_to_ptr.vmem [resolvable:$true] %s3807
      %s3809 = sshll.u32 %s5, 4
      %s3810 = int_to_ptr.hbm [resolvable:$true] %s3809
      %3815 = dma.vmem_to_hbm [thread:$0]  %s3808, 2048, %s3810, [#allocation3], 128, 128, 8
    $region25: #{conv2d_block_forward.1} parent=1 // pred_fallthru
      _
    // Predicated region
    $region26: #{conv2d_block_forward.1} parent=1 // pred_check
      _
    $region27: #{conv2d_block_forward.1} parent=1 // pred_check_branch
      %3817 = sbr.rel (0) target = $region29
    $region28: #{conv2d_block_forward.1} parent=1 // pred_region
      %3819 = dma.done [#allocation3], 2048
    $region29: #{conv2d_block_forward.1} parent=1 // pred_fallthru
      _
    %3820 = vsyncpa [#allocation3], 1

</llo_original>
